<compile_context>
chip_gen: v7x
topology: tpu7x:2x2x1
jax: 0.10.0
libtpu: 0.0.40
codegen_flags: <defaults>
</compile_context>

<pallas_src>
import jax
import jax.numpy as jnp
from jax.experimental import pallas as pl
from jax.experimental.pallas import tpu as pltpu

# ----------------------- small synthetic hyper-params -----------------------
VOCAB_SIZE = 50
EMBED_DIM = 32      # stands in for 300 (GloVe)
HIDDEN_DIM = 32     # stands in for 512
IMG_DIM = 64        # stands in for 2048 (ResNet features); fc1 hidden = IMG_DIM
NUM_CLASSES = 16    # stands in for 1000
BATCH = 2
SEQ = 8

# ------------------- padded (lane/sublane-dense) kernel dims -----------------
HP = 128            # hidden padded: each LSTM gate occupies one full 128-lane vreg row
IMG_P = 128         # image-feature dim padded to 128 lanes
NC_P = 128          # num-classes padded to 128 lanes (unmasked output vst)
B_P = 8             # batch padded to 8 sublanes (full f32 vreg / MXU-row occupancy)

_VMEM = pl.BlockSpec(memory_space=pltpu.MemorySpace.VMEM)


# ------------------------------ fused Pallas kernel --------------------------
def vqa_fused_kernel(
    x_ref,                                   # (T*Bp, E)   time-major flattened embeddings
    wih1_ref, whh1_ref, b1_ref,              # (E, 4HP), (HP, 4HP), (1, 4HP)
    wih2_ref, whh2_ref, b2_ref,              # (HP, 4HP), (HP, 4HP), (1, 4HP)
    img_ref,                                 # (Bp, IMG_P)
    f1w1_ref, f1b1_ref, f1w2_ref, f1b2_ref,  # fc1: (IMG_P,IMG_P),(1,IMG_P),(IMG_P,HP),(1,HP)
    f2w1_ref, f2b1_ref, f2w2_ref, f2b2_ref,  # fc2: (HP,HP),(1,HP),(HP,NC_P),(1,NC_P)
    out_ref,                                 # (Bp, NC_P)  logits (padded)
    xproj_sc,                                # (T*Bp, 4HP) scratch: gate projections (reused)
    out1_sc,                                 # (T*Bp, HP)  scratch: layer-1 hidden sequence
):
    TB, _ = x_ref.shape
    Bp = img_ref.shape[0]
    T = TB // Bp
    Hp = whh1_ref.shape[0]

    # ---- fc1: image MLP (independent of the LSTM; feeds the MXU early) ------
    h_img = (jnp.dot(img_ref[...], f1w1_ref[...], preferred_element_type=jnp.float32)
             + f1b1_ref[...])
    h_img = jnp.maximum(h_img, 0.0)
    img_emb = (jnp.dot(h_img, f1w2_ref[...], preferred_element_type=jnp.float32)
               + f1b2_ref[...])                                  # (Bp, HP)

    def lstm_layer(whh, write_out):
        """Unrolled recurrence; xproj_sc already holds x@W_ih + b for every step."""
        h = jnp.zeros((Bp, Hp), jnp.float32)
        c = jnp.zeros((Bp, Hp), jnp.float32)
        for t in range(T):                   # static unroll (T=8): LLO sees across steps
            gates = (xproj_sc[t * Bp:(t + 1) * Bp, :]
                     + jnp.dot(h, whh, preferred_element_type=jnp.float32))
            # gate slices are full 128-lane vregs (HP=128) -> no cross-lane extraction
            i = jax.nn.sigmoid(gates[:, 0:Hp])
            f = jax.nn.sigmoid(gates[:, Hp:2 * Hp])
            g = jnp.tanh(gates[:, 2 * Hp:3 * Hp])
            o = jax.nn.sigmoid(gates[:, 3 * Hp:4 * Hp])
            c = f * c + i * g
            h = o * jnp.tanh(c)
            if write_out:
                out1_sc[t * Bp:(t + 1) * Bp, :] = h
        return h

    # ---- LSTM layer 1: batched input projection, then recurrence ------------
    xproj_sc[...] = (jnp.dot(x_ref[...], wih1_ref[...], preferred_element_type=jnp.float32)
                     + b1_ref[...])
    whh1 = whh1_ref[...]                     # hoisted: loaded once, reused by all steps
    lstm_layer(whh1, write_out=True)         # layer-1 h_last is never needed

    # ---- LSTM layer 2: projection of the whole layer-1 sequence in one matmul
    xproj_sc[...] = (jnp.dot(out1_sc[...], wih2_ref[...], preferred_element_type=jnp.float32)
                     + b2_ref[...])
    whh2 = whh2_ref[...]
    h2 = lstm_layer(whh2, write_out=False)   # only the final hidden state is kept

    # ---- emb = img_emb + ht[-1]; fc2 = Lin -> ReLU -> Lin --------------------
    z = img_emb + h2
    hz = jnp.maximum(jnp.dot(z, f2w1_ref[...], preferred_element_type=jnp.float32)
                     + f2b1_ref[...], 0.0)
    out_ref[...] = (jnp.dot(hz, f2w2_ref[...], preferred_element_type=jnp.float32)
                    + f2b2_ref[...])


def vqa_fused_pallas(x_flat, img_p, pp):
    TB = x_flat.shape[0]
    Bp = img_p.shape[0]
    return pl.pallas_call(
        vqa_fused_kernel,
        out_shape=jax.ShapeDtypeStruct((Bp, NC_P), jnp.float32),
        in_specs=[_VMEM] * 16,
        out_specs=_VMEM,
        scratch_shapes=[pltpu.VMEM((TB, 4 * HP), jnp.float32),   # gate projections (both layers)
                        pltpu.VMEM((TB, HP), jnp.float32)],      # layer-1 hidden sequence
    )(x_flat,
      pp["l1_wih"], pp["l1_whh"], pp["l1_b"],
      pp["l2_wih"], pp["l2_whh"], pp["l2_b"],
      img_p,
      pp["fc1_w1"], pp["fc1_b1"], pp["fc1_w2"], pp["fc1_b2"],
      pp["fc2_w1"], pp["fc2_b1"], pp["fc2_w2"], pp["fc2_b2"])


# ------------------------------ parameter setup ------------------------------
def init_params(key):
    ks = jax.random.split(key, 16)
    s = 0.1

    def rnd(k, shape):
        return (s * jax.random.normal(k, shape)).astype(jnp.float32)

    glove = rnd(ks[0], (VOCAB_SIZE, EMBED_DIM))
    glove = glove.at[0].set(0.0)  # padding_idx=0 convention

    H = HIDDEN_DIM
    return {
        "glove": glove,
        # lstm1: EMBED_DIM -> H   (stored transposed: (in, 4H); gate order i,f,g,o)
        "l1_wih": rnd(ks[1], (EMBED_DIM, 4 * H)),
        "l1_whh": rnd(ks[2], (H, 4 * H)),
        "l1_b":   rnd(ks[3], (1, 4 * H)),          # b_ih + b_hh combined
        # lstm2: H -> H
        "l2_wih": rnd(ks[4], (H, 4 * H)),
        "l2_whh": rnd(ks[5], (H, 4 * H)),
        "l2_b":   rnd(ks[6], (1, 4 * H)),
        # fc1: Linear(IMG_DIM, IMG_DIM) -> ReLU -> Linear(IMG_DIM, H)
        "fc1_w1": rnd(ks[7], (IMG_DIM, IMG_DIM)),
        "fc1_b1": rnd(ks[8], (1, IMG_DIM)),
        "fc1_w2": rnd(ks[9], (IMG_DIM, H)),
        "fc1_b2": rnd(ks[10], (1, H)),
        # fc2: Linear(H, H) -> ReLU -> Linear(H, NUM_CLASSES)
        "fc2_w1": rnd(ks[11], (H, H)),
        "fc2_b1": rnd(ks[12], (1, H)),
        "fc2_w2": rnd(ks[13], (H, NUM_CLASSES)),
        "fc2_b2": rnd(ks[14], (1, NUM_CLASSES)),
    }


def pad_params(p):
    """One-time zero-padding of weights to lane/sublane-dense kernel layout."""
    H = HIDDEN_DIM

    def gate_cols(w):      # (..., 4H) -> (..., 4*HP): each gate padded to HP lanes
        parts = [w[:, k * H:(k + 1) * H] for k in range(4)]
        return jnp.concatenate([jnp.pad(q, ((0, 0), (0, HP - H))) for q in parts], axis=1)

    def pad_rows(w, rows):
        return jnp.pad(w, ((0, rows - w.shape[0]), (0, 0)))

    def pad_cols(w, cols):
        return jnp.pad(w, ((0, 0), (0, cols - w.shape[1])))

    return {
        "glove":  p["glove"],
        "l1_wih": gate_cols(p["l1_wih"]),                          # (E, 4HP)
        "l1_whh": gate_cols(pad_rows(p["l1_whh"], HP)),            # (HP, 4HP)
        "l1_b":   gate_cols(p["l1_b"]),                            # (1, 4HP)
        "l2_wih": gate_cols(pad_rows(p["l2_wih"], HP)),
        "l2_whh": gate_cols(pad_rows(p["l2_whh"], HP)),
        "l2_b":   gate_cols(p["l2_b"]),
        "fc1_w1": pad_cols(pad_rows(p["fc1_w1"], IMG_P), IMG_P),   # (IMG_P, IMG_P)
        "fc1_b1": pad_cols(p["fc1_b1"], IMG_P),
        "fc1_w2": pad_cols(pad_rows(p["fc1_w2"], IMG_P), HP),      # (IMG_P, HP)
        "fc1_b2": pad_cols(p["fc1_b2"], HP),
        "fc2_w1": pad_cols(pad_rows(p["fc2_w1"], HP), HP),         # (HP, HP)
        "fc2_b1": pad_cols(p["fc2_b1"], HP),
        "fc2_w2": pad_cols(pad_rows(p["fc2_w2"], HP), NC_P),       # (HP, NC_P)
        "fc2_b2": pad_cols(p["fc2_b2"], NC_P),
    }


# ------------------------------ model forward --------------------------------
@jax.jit
def vqa_forward(padded_params, img, text):
    B, T = text.shape
    Bp = ((B + B_P - 1) // B_P) * B_P

    # pad batch to full sublanes; token 0 is the padding index, image rows zero
    text_p = jnp.pad(text, ((0, Bp - B), (0, 0)))
    img_p = jnp.pad(img, ((0, Bp - B), (0, IMG_P - img.shape[1])))

    # frozen GloVe lookup, directly in flattened time-major order (no float transpose)
    idx = jnp.transpose(text_p, (1, 0)).reshape(-1)                 # (T*Bp,)
    x_flat = jnp.take(padded_params["glove"], idx, axis=0)          # (T*Bp, E)
    # TODO(synk): nn.Dropout(0.2) is identity at inference; training-mode mask not implemented.

    logits_p = vqa_fused_pallas(x_flat, img_p, padded_params)       # (Bp, NC_P)
    return logits_p[:B, :NUM_CLASSES]


# ------------------------------ pure-JAX reference ---------------------------
def lstm_ref(x_btd, wih_t, whh_t, b):
    H = whh_t.shape[0]
    B = x_btd.shape[0]

    def step(carry, x_t):
        h, c = carry
        gates = x_t @ wih_t + h @ whh_t + b
        i = jax.nn.sigmoid(gates[:, 0:H])
        f = jax.nn.sigmoid(gates[:, H:2 * H])
        g = jnp.tanh(gates[:, 2 * H:3 * H])
        o = jax.nn.sigmoid(gates[:, 3 * H:4 * H])
        c = f * c + i * g
        h = o * jnp.tanh(c)
        return (h, c), h

    init = (jnp.zeros((B, H), jnp.float32), jnp.zeros((B, H), jnp.float32))
    (h_last, _), outs = jax.lax.scan(step, init, jnp.transpose(x_btd, (1, 0, 2)))
    return jnp.transpose(outs, (1, 0, 2)), h_last


def vqa_forward_ref(params, img, text):
    text_emb = jnp.take(params["glove"], text, axis=0)
    out1, _ = lstm_ref(text_emb, params["l1_wih"], params["l1_whh"], params["l1_b"])
    _, h2 = lstm_ref(out1, params["l2_wih"], params["l2_whh"], params["l2_b"])
    img_emb = jnp.maximum(img @ params["fc1_w1"] + params["fc1_b1"], 0.0) \
        @ params["fc1_w2"] + params["fc1_b2"]
    z = img_emb + h2
    h = jnp.maximum(z @ params["fc2_w1"] + params["fc2_b1"], 0.0)
    return h @ params["fc2_w2"] + params["fc2_b2"]


# ----------------------------------- main ------------------------------------
if __name__ == "__main__":
    key = jax.random.PRNGKey(0)
    k_param, k_img, k_text = jax.random.split(key, 3)

    params = init_params(k_param)
    padded = pad_params(params)

    img = (0.5 * jax.random.normal(k_img, (BATCH, IMG_DIM))).astype(jnp.float32)
    text = jax.random.randint(k_text, (BATCH, SEQ), 0, VOCAB_SIZE, dtype=jnp.int32)

    logits = vqa_forward(padded, img, text)
    logits = jax.block_until_ready(logits)

    ref = vqa_forward_ref(params, img, text)
    assert logits.shape == (BATCH, NUM_CLASSES)
    assert jnp.allclose(logits, ref, atol=2e-3, rtol=2e-3)

    print("KERNEL_OK")
</pallas_src>

<mosaic_0001>
module attributes {stable_mosaic.version = 11 : i64} {
  func.func @vqa_fused_kernel(%arg0: memref<64x32xf32, #tpu.memory_space<vmem>>, %arg1: memref<32x512xf32, #tpu.memory_space<vmem>>, %arg2: memref<128x512xf32, #tpu.memory_space<vmem>>, %arg3: memref<1x512xf32, #tpu.memory_space<vmem>>, %arg4: memref<128x512xf32, #tpu.memory_space<vmem>>, %arg5: memref<128x512xf32, #tpu.memory_space<vmem>>, %arg6: memref<1x512xf32, #tpu.memory_space<vmem>>, %arg7: memref<8x128xf32, #tpu.memory_space<vmem>>, %arg8: memref<128x128xf32, #tpu.memory_space<vmem>>, %arg9: memref<1x128xf32, #tpu.memory_space<vmem>>, %arg10: memref<128x128xf32, #tpu.memory_space<vmem>>, %arg11: memref<1x128xf32, #tpu.memory_space<vmem>>, %arg12: memref<128x128xf32, #tpu.memory_space<vmem>>, %arg13: memref<1x128xf32, #tpu.memory_space<vmem>>, %arg14: memref<128x128xf32, #tpu.memory_space<vmem>>, %arg15: memref<1x128xf32, #tpu.memory_space<vmem>>, %arg16: memref<8x128xf32, #tpu.memory_space<vmem>>, %arg17: memref<64x512xf32, #tpu.memory_space<vmem>>, %arg18: memref<64x128xf32, #tpu.memory_space<vmem>>) attributes {dimension_semantics = [], scalar_prefetch = 0 : i64, scratch_operands = 2 : i64, tpu.core_type = #tpu.core_type<tc>} {
    %c0 = arith.constant 0 : index
    %c0_0 = arith.constant 0 : index
    %0 = vector.load %arg7[%c0, %c0_0] : memref<8x128xf32, #tpu.memory_space<vmem>>, vector<8x128xf32>
    %c0_1 = arith.constant 0 : index
    %c0_2 = arith.constant 0 : index
    %1 = vector.load %arg8[%c0_1, %c0_2] : memref<128x128xf32, #tpu.memory_space<vmem>>, vector<128x128xf32>
    %cst = arith.constant dense<0.000000e+00> : vector<8x128xf32>
    %2 = tpu.matmul %0, %1, %cst {dimension_numbers = #tpu.dot_dimension_numbers<[1], [0], [0], [1], [0, 0, 1, 1], [], []>} : vector<8x128xf32>, vector<128x128xf32>, vector<8x128xf32> -> vector<8x128xf32>
    %c0_3 = arith.constant 0 : index
    %c0_4 = arith.constant 0 : index
    %3 = vector.load %arg9[%c0_3, %c0_4] : memref<1x128xf32, #tpu.memory_space<vmem>>, vector<1x128xf32>
    %4 = vector.broadcast %3 : vector<1x128xf32> to vector<8x128xf32>
    %5 = arith.addf %2, %4 : vector<8x128xf32>
    %cst_5 = arith.constant 0.000000e+00 : f32
    %6 = vector.broadcast %cst_5 : f32 to vector<8x128xf32>
    %7 = arith.maximumf %5, %6 : vector<8x128xf32>
    %c0_6 = arith.constant 0 : index
    %c0_7 = arith.constant 0 : index
    %8 = vector.load %arg10[%c0_6, %c0_7] : memref<128x128xf32, #tpu.memory_space<vmem>>, vector<128x128xf32>
    %cst_8 = arith.constant dense<0.000000e+00> : vector<8x128xf32>
    %9 = tpu.matmul %7, %8, %cst_8 {dimension_numbers = #tpu.dot_dimension_numbers<[1], [0], [0], [1], [0, 0, 1, 1], [], []>} : vector<8x128xf32>, vector<128x128xf32>, vector<8x128xf32> -> vector<8x128xf32>
    %c0_9 = arith.constant 0 : index
    %c0_10 = arith.constant 0 : index
    %10 = vector.load %arg11[%c0_9, %c0_10] : memref<1x128xf32, #tpu.memory_space<vmem>>, vector<1x128xf32>
    %11 = vector.broadcast %10 : vector<1x128xf32> to vector<8x128xf32>
    %12 = arith.addf %9, %11 : vector<8x128xf32>
    %c0_11 = arith.constant 0 : index
    %c0_12 = arith.constant 0 : index
    %13 = vector.load %arg0[%c0_11, %c0_12] : memref<64x32xf32, #tpu.memory_space<vmem>>, vector<64x32xf32>
    %c0_13 = arith.constant 0 : index
    %c0_14 = arith.constant 0 : index
    %14 = vector.load %arg1[%c0_13, %c0_14] : memref<32x512xf32, #tpu.memory_space<vmem>>, vector<32x512xf32>
    %cst_15 = arith.constant dense<0.000000e+00> : vector<64x512xf32>
    %15 = tpu.matmul %13, %14, %cst_15 {dimension_numbers = #tpu.dot_dimension_numbers<[1], [0], [0], [1], [0, 0, 1, 1], [], []>} : vector<64x32xf32>, vector<32x512xf32>, vector<64x512xf32> -> vector<64x512xf32>
    %c0_16 = arith.constant 0 : index
    %c0_17 = arith.constant 0 : index
    %16 = vector.load %arg3[%c0_16, %c0_17] : memref<1x512xf32, #tpu.memory_space<vmem>>, vector<1x512xf32>
    %17 = vector.broadcast %16 : vector<1x512xf32> to vector<64x512xf32>
    %18 = arith.addf %15, %17 : vector<64x512xf32>
    %c0_18 = arith.constant 0 : index
    %c0_19 = arith.constant 0 : index
    %19 = vector.load %arg17[%c0_18, %c0_19] : memref<64x512xf32, #tpu.memory_space<vmem>>, vector<64x512xf32>
    tpu.vector_store %arg17[%c0_18, %c0_19], %18 {strides = array<i32>} : memref<64x512xf32, #tpu.memory_space<vmem>>, vector<64x512xf32>,
    %c0_20 = arith.constant 0 : index
    %c0_21 = arith.constant 0 : index
    %20 = vector.load %arg2[%c0_20, %c0_21] : memref<128x512xf32, #tpu.memory_space<vmem>>, vector<128x512xf32>
    %cst_22 = arith.constant 0.000000e+00 : f32
    %21 = vector.broadcast %cst_22 : f32 to vector<8x128xf32>
    %cst_23 = arith.constant 0.000000e+00 : f32
    %22 = vector.broadcast %cst_23 : f32 to vector<8x128xf32>
    %c0_24 = arith.constant 0 : index
    %c0_25 = arith.constant 0 : index
    %23 = vector.load %arg17[%c0_24, %c0_25] : memref<64x512xf32, #tpu.memory_space<vmem>>, vector<8x512xf32>
    %cst_26 = arith.constant dense<0.000000e+00> : vector<8x512xf32>
    %24 = tpu.matmul %21, %20, %cst_26 {dimension_numbers = #tpu.dot_dimension_numbers<[1], [0], [0], [1], [0, 0, 1, 1], [], []>} : vector<8x128xf32>, vector<128x512xf32>, vector<8x512xf32> -> vector<8x512xf32>
    %25 = arith.addf %23, %24 : vector<8x512xf32>
    %26 = vector.extract_strided_slice %25 {offsets = [0, 0], sizes = [8, 128], strides = [1, 1]} : vector<8x512xf32> to vector<8x128xf32>
    %27 = arith.negf %26 : vector<8x128xf32>
    %28 = math.exp %27 : vector<8x128xf32>
    %cst_27 = arith.constant 1.000000e+00 : f32
    %29 = vector.broadcast %cst_27 : f32 to vector<8x128xf32>
    %30 = arith.addf %29, %28 : vector<8x128xf32>
    %31 = arith.divf %29, %30 : vector<8x128xf32>
    %32 = vector.extract_strided_slice %25 {offsets = [0, 128], sizes = [8, 128], strides = [1, 1]} : vector<8x512xf32> to vector<8x128xf32>
    %33 = arith.negf %32 : vector<8x128xf32>
    %34 = math.exp %33 : vector<8x128xf32>
    %cst_28 = arith.constant 1.000000e+00 : f32
    %35 = vector.broadcast %cst_28 : f32 to vector<8x128xf32>
    %36 = arith.addf %35, %34 : vector<8x128xf32>
    %37 = arith.divf %35, %36 : vector<8x128xf32>
    %38 = vector.extract_strided_slice %25 {offsets = [0, 256], sizes = [8, 128], strides = [1, 1]} : vector<8x512xf32> to vector<8x128xf32>
    %39 = math.tanh %38 : vector<8x128xf32>
    %40 = vector.extract_strided_slice %25 {offsets = [0, 384], sizes = [8, 128], strides = [1, 1]} : vector<8x512xf32> to vector<8x128xf32>
    %41 = arith.negf %40 : vector<8x128xf32>
    %42 = math.exp %41 : vector<8x128xf32>
    %cst_29 = arith.constant 1.000000e+00 : f32
    %43 = vector.broadcast %cst_29 : f32 to vector<8x128xf32>
    %44 = arith.addf %43, %42 : vector<8x128xf32>
    %45 = arith.divf %43, %44 : vector<8x128xf32>
    %46 = arith.mulf %37, %22 : vector<8x128xf32>
    %47 = arith.mulf %31, %39 : vector<8x128xf32>
    %48 = arith.addf %46, %47 : vector<8x128xf32>
    %49 = math.tanh %48 : vector<8x128xf32>
    %50 = arith.mulf %45, %49 : vector<8x128xf32>
    %c0_30 = arith.constant 0 : index
    %c0_31 = arith.constant 0 : index
    %51 = vector.load %arg18[%c0_30, %c0_31] : memref<64x128xf32, #tpu.memory_space<vmem>>, vector<8x128xf32>
    tpu.vector_store %arg18[%c0_30, %c0_31], %50 {strides = array<i32>} : memref<64x128xf32, #tpu.memory_space<vmem>>, vector<8x128xf32>,
    %c8 = arith.constant 8 : index
    %c0_32 = arith.constant 0 : index
    %52 = vector.load %arg17[%c8, %c0_32] : memref<64x512xf32, #tpu.memory_space<vmem>>, vector<8x512xf32>
    %cst_33 = arith.constant dense<0.000000e+00> : vector<8x512xf32>
    %53 = tpu.matmul %50, %20, %cst_33 {dimension_numbers = #tpu.dot_dimension_numbers<[1], [0], [0], [1], [0, 0, 1, 1], [], []>} : vector<8x128xf32>, vector<128x512xf32>, vector<8x512xf32> -> vector<8x512xf32>
    %54 = arith.addf %52, %53 : vector<8x512xf32>
    %55 = vector.extract_strided_slice %54 {offsets = [0, 0], sizes = [8, 128], strides = [1, 1]} : vector<8x512xf32> to vector<8x128xf32>
    %56 = arith.negf %55 : vector<8x128xf32>
    %57 = math.exp %56 : vector<8x128xf32>
    %cst_34 = arith.constant 1.000000e+00 : f32
    %58 = vector.broadcast %cst_34 : f32 to vector<8x128xf32>
    %59 = arith.addf %58, %57 : vector<8x128xf32>
    %60 = arith.divf %58, %59 : vector<8x128xf32>
    %61 = vector.extract_strided_slice %54 {offsets = [0, 128], sizes = [8, 128], strides = [1, 1]} : vector<8x512xf32> to vector<8x128xf32>
    %62 = arith.negf %61 : vector<8x128xf32>
    %63 = math.exp %62 : vector<8x128xf32>
    %cst_35 = arith.constant 1.000000e+00 : f32
    %64 = vector.broadcast %cst_35 : f32 to vector<8x128xf32>
    %65 = arith.addf %64, %63 : vector<8x128xf32>
    %66 = arith.divf %64, %65 : vector<8x128xf32>
    %67 = vector.extract_strided_slice %54 {offsets = [0, 256], sizes = [8, 128], strides = [1, 1]} : vector<8x512xf32> to vector<8x128xf32>
    %68 = math.tanh %67 : vector<8x128xf32>
    %69 = vector.extract_strided_slice %54 {offsets = [0, 384], sizes = [8, 128], strides = [1, 1]} : vector<8x512xf32> to vector<8x128xf32>
    %70 = arith.negf %69 : vector<8x128xf32>
    %71 = math.exp %70 : vector<8x128xf32>
    %cst_36 = arith.constant 1.000000e+00 : f32
    %72 = vector.broadcast %cst_36 : f32 to vector<8x128xf32>
    %73 = arith.addf %72, %71 : vector<8x128xf32>
    %74 = arith.divf %72, %73 : vector<8x128xf32>
    %75 = arith.mulf %66, %48 : vector<8x128xf32>
    %76 = arith.mulf %60, %68 : vector<8x128xf32>
    %77 = arith.addf %75, %76 : vector<8x128xf32>
    %78 = math.tanh %77 : vector<8x128xf32>
    %79 = arith.mulf %74, %78 : vector<8x128xf32>
    %c8_37 = arith.constant 8 : index
    %c0_38 = arith.constant 0 : index
    %80 = vector.load %arg18[%c8_37, %c0_38] : memref<64x128xf32, #tpu.memory_space<vmem>>, vector<8x128xf32>
    tpu.vector_store %arg18[%c8_37, %c0_38], %79 {strides = array<i32>} : memref<64x128xf32, #tpu.memory_space<vmem>>, vector<8x128xf32>,
    %c16 = arith.constant 16 : index
    %c0_39 = arith.constant 0 : index
    %81 = vector.load %arg17[%c16, %c0_39] : memref<64x512xf32, #tpu.memory_space<vmem>>, vector<8x512xf32>
    %cst_40 = arith.constant dense<0.000000e+00> : vector<8x512xf32>
    %82 = tpu.matmul %79, %20, %cst_40 {dimension_numbers = #tpu.dot_dimension_numbers<[1], [0], [0], [1], [0, 0, 1, 1], [], []>} : vector<8x128xf32>, vector<128x512xf32>, vector<8x512xf32> -> vector<8x512xf32>
    %83 = arith.addf %81, %82 : vector<8x512xf32>
    %84 = vector.extract_strided_slice %83 {offsets = [0, 0], sizes = [8, 128], strides = [1, 1]} : vector<8x512xf32> to vector<8x128xf32>
    %85 = arith.negf %84 : vector<8x128xf32>
    %86 = math.exp %85 : vector<8x128xf32>
    %cst_41 = arith.constant 1.000000e+00 : f32
    %87 = vector.broadcast %cst_41 : f32 to vector<8x128xf32>
    %88 = arith.addf %87, %86 : vector<8x128xf32>
    %89 = arith.divf %87, %88 : vector<8x128xf32>
    %90 = vector.extract_strided_slice %83 {offsets = [0, 128], sizes = [8, 128], strides = [1, 1]} : vector<8x512xf32> to vector<8x128xf32>
    %91 = arith.negf %90 : vector<8x128xf32>
    %92 = math.exp %91 : vector<8x128xf32>
    %cst_42 = arith.constant 1.000000e+00 : f32
    %93 = vector.broadcast %cst_42 : f32 to vector<8x128xf32>
    %94 = arith.addf %93, %92 : vector<8x128xf32>
    %95 = arith.divf %93, %94 : vector<8x128xf32>
    %96 = vector.extract_strided_slice %83 {offsets = [0, 256], sizes = [8, 128], strides = [1, 1]} : vector<8x512xf32> to vector<8x128xf32>
    %97 = math.tanh %96 : vector<8x128xf32>
    %98 = vector.extract_strided_slice %83 {offsets = [0, 384], sizes = [8, 128], strides = [1, 1]} : vector<8x512xf32> to vector<8x128xf32>
    %99 = arith.negf %98 : vector<8x128xf32>
    %100 = math.exp %99 : vector<8x128xf32>
    %cst_43 = arith.constant 1.000000e+00 : f32
    %101 = vector.broadcast %cst_43 : f32 to vector<8x128xf32>
    %102 = arith.addf %101, %100 : vector<8x128xf32>
    %103 = arith.divf %101, %102 : vector<8x128xf32>
    %104 = arith.mulf %95, %77 : vector<8x128xf32>
    %105 = arith.mulf %89, %97 : vector<8x128xf32>
    %106 = arith.addf %104, %105 : vector<8x128xf32>
    %107 = math.tanh %106 : vector<8x128xf32>
    %108 = arith.mulf %103, %107 : vector<8x128xf32>
    %c16_44 = arith.constant 16 : index
    %c0_45 = arith.constant 0 : index
    %109 = vector.load %arg18[%c16_44, %c0_45] : memref<64x128xf32, #tpu.memory_space<vmem>>, vector<8x128xf32>
    tpu.vector_store %arg18[%c16_44, %c0_45], %108 {strides = array<i32>} : memref<64x128xf32, #tpu.memory_space<vmem>>, vector<8x128xf32>,
    %c24 = arith.constant 24 : index
    %c0_46 = arith.constant 0 : index
    %110 = vector.load %arg17[%c24, %c0_46] : memref<64x512xf32, #tpu.memory_space<vmem>>, vector<8x512xf32>
    %cst_47 = arith.constant dense<0.000000e+00> : vector<8x512xf32>
    %111 = tpu.matmul %108, %20, %cst_47 {dimension_numbers = #tpu.dot_dimension_numbers<[1], [0], [0], [1], [0, 0, 1, 1], [], []>} : vector<8x128xf32>, vector<128x512xf32>, vector<8x512xf32> -> vector<8x512xf32>
    %112 = arith.addf %110, %111 : vector<8x512xf32>
    %113 = vector.extract_strided_slice %112 {offsets = [0, 0], sizes = [8, 128], strides = [1, 1]} : vector<8x512xf32> to vector<8x128xf32>
    %114 = arith.negf %113 : vector<8x128xf32>
    %115 = math.exp %114 : vector<8x128xf32>
    %cst_48 = arith.constant 1.000000e+00 : f32
    %116 = vector.broadcast %cst_48 : f32 to vector<8x128xf32>
    %117 = arith.addf %116, %115 : vector<8x128xf32>
    %118 = arith.divf %116, %117 : vector<8x128xf32>
    %119 = vector.extract_strided_slice %112 {offsets = [0, 128], sizes = [8, 128], strides = [1, 1]} : vector<8x512xf32> to vector<8x128xf32>
    %120 = arith.negf %119 : vector<8x128xf32>
    %121 = math.exp %120 : vector<8x128xf32>
    %cst_49 = arith.constant 1.000000e+00 : f32
    %122 = vector.broadcast %cst_49 : f32 to vector<8x128xf32>
    %123 = arith.addf %122, %121 : vector<8x128xf32>
    %124 = arith.divf %122, %123 : vector<8x128xf32>
    %125 = vector.extract_strided_slice %112 {offsets = [0, 256], sizes = [8, 128], strides = [1, 1]} : vector<8x512xf32> to vector<8x128xf32>
    %126 = math.tanh %125 : vector<8x128xf32>
    %127 = vector.extract_strided_slice %112 {offsets = [0, 384], sizes = [8, 128], strides = [1, 1]} : vector<8x512xf32> to vector<8x128xf32>
    %128 = arith.negf %127 : vector<8x128xf32>
    %129 = math.exp %128 : vector<8x128xf32>
    %cst_50 = arith.constant 1.000000e+00 : f32
    %130 = vector.broadcast %cst_50 : f32 to vector<8x128xf32>
    %131 = arith.addf %130, %129 : vector<8x128xf32>
    %132 = arith.divf %130, %131 : vector<8x128xf32>
    %133 = arith.mulf %124, %106 : vector<8x128xf32>
    %134 = arith.mulf %118, %126 : vector<8x128xf32>
    %135 = arith.addf %133, %134 : vector<8x128xf32>
    %136 = math.tanh %135 : vector<8x128xf32>
    %137 = arith.mulf %132, %136 : vector<8x128xf32>
    %c24_51 = arith.constant 24 : index
    %c0_52 = arith.constant 0 : index
    %138 = vector.load %arg18[%c24_51, %c0_52] : memref<64x128xf32, #tpu.memory_space<vmem>>, vector<8x128xf32>
    tpu.vector_store %arg18[%c24_51, %c0_52], %137 {strides = array<i32>} : memref<64x128xf32, #tpu.memory_space<vmem>>, vector<8x128xf32>,
    %c32 = arith.constant 32 : index
    %c0_53 = arith.constant 0 : index
    %139 = vector.load %arg17[%c32, %c0_53] : memref<64x512xf32, #tpu.memory_space<vmem>>, vector<8x512xf32>
    %cst_54 = arith.constant dense<0.000000e+00> : vector<8x512xf32>
    %140 = tpu.matmul %137, %20, %cst_54 {dimension_numbers = #tpu.dot_dimension_numbers<[1], [0], [0], [1], [0, 0, 1, 1], [], []>} : vector<8x128xf32>, vector<128x512xf32>, vector<8x512xf32> -> vector<8x512xf32>
    %141 = arith.addf %139, %140 : vector<8x512xf32>
    %142 = vector.extract_strided_slice %141 {offsets = [0, 0], sizes = [8, 128], strides = [1, 1]} : vector<8x512xf32> to vector<8x128xf32>
    %143 = arith.negf %142 : vector<8x128xf32>
    %144 = math.exp %143 : vector<8x128xf32>
    %cst_55 = arith.constant 1.000000e+00 : f32
    %145 = vector.broadcast %cst_55 : f32 to vector<8x128xf32>
    %146 = arith.addf %145, %144 : vector<8x128xf32>
    %147 = arith.divf %145, %146 : vector<8x128xf32>
    %148 = vector.extract_strided_slice %141 {offsets = [0, 128], sizes = [8, 128], strides = [1, 1]} : vector<8x512xf32> to vector<8x128xf32>
    %149 = arith.negf %148 : vector<8x128xf32>
    %150 = math.exp %149 : vector<8x128xf32>
    %cst_56 = arith.constant 1.000000e+00 : f32
    %151 = vector.broadcast %cst_56 : f32 to vector<8x128xf32>
    %152 = arith.addf %151, %150 : vector<8x128xf32>
    %153 = arith.divf %151, %152 : vector<8x128xf32>
    %154 = vector.extract_strided_slice %141 {offsets = [0, 256], sizes = [8, 128], strides = [1, 1]} : vector<8x512xf32> to vector<8x128xf32>
    %155 = math.tanh %154 : vector<8x128xf32>
    %156 = vector.extract_strided_slice %141 {offsets = [0, 384], sizes = [8, 128], strides = [1, 1]} : vector<8x512xf32> to vector<8x128xf32>
    %157 = arith.negf %156 : vector<8x128xf32>
    %158 = math.exp %157 : vector<8x128xf32>
    %cst_57 = arith.constant 1.000000e+00 : f32
    %159 = vector.broadcast %cst_57 : f32 to vector<8x128xf32>
    %160 = arith.addf %159, %158 : vector<8x128xf32>
    %161 = arith.divf %159, %160 : vector<8x128xf32>
    %162 = arith.mulf %153, %135 : vector<8x128xf32>
    %163 = arith.mulf %147, %155 : vector<8x128xf32>
    %164 = arith.addf %162, %163 : vector<8x128xf32>
    %165 = math.tanh %164 : vector<8x128xf32>
    %166 = arith.mulf %161, %165 : vector<8x128xf32>
    %c32_58 = arith.constant 32 : index
    %c0_59 = arith.constant 0 : index
    %167 = vector.load %arg18[%c32_58, %c0_59] : memref<64x128xf32, #tpu.memory_space<vmem>>, vector<8x128xf32>
    tpu.vector_store %arg18[%c32_58, %c0_59], %166 {strides = array<i32>} : memref<64x128xf32, #tpu.memory_space<vmem>>, vector<8x128xf32>,
    %c40 = arith.constant 40 : index
    %c0_60 = arith.constant 0 : index
    %168 = vector.load %arg17[%c40, %c0_60] : memref<64x512xf32, #tpu.memory_space<vmem>>, vector<8x512xf32>
    %cst_61 = arith.constant dense<0.000000e+00> : vector<8x512xf32>
    %169 = tpu.matmul %166, %20, %cst_61 {dimension_numbers = #tpu.dot_dimension_numbers<[1], [0], [0], [1], [0, 0, 1, 1], [], []>} : vector<8x128xf32>, vector<128x512xf32>, vector<8x512xf32> -> vector<8x512xf32>
    %170 = arith.addf %168, %169 : vector<8x512xf32>
    %171 = vector.extract_strided_slice %170 {offsets = [0, 0], sizes = [8, 128], strides = [1, 1]} : vector<8x512xf32> to vector<8x128xf32>
    %172 = arith.negf %171 : vector<8x128xf32>
    %173 = math.exp %172 : vector<8x128xf32>
    %cst_62 = arith.constant 1.000000e+00 : f32
    %174 = vector.broadcast %cst_62 : f32 to vector<8x128xf32>
    %175 = arith.addf %174, %173 : vector<8x128xf32>
    %176 = arith.divf %174, %175 : vector<8x128xf32>
    %177 = vector.extract_strided_slice %170 {offsets = [0, 128], sizes = [8, 128], strides = [1, 1]} : vector<8x512xf32> to vector<8x128xf32>
    %178 = arith.negf %177 : vector<8x128xf32>
    %179 = math.exp %178 : vector<8x128xf32>
    %cst_63 = arith.constant 1.000000e+00 : f32
    %180 = vector.broadcast %cst_63 : f32 to vector<8x128xf32>
    %181 = arith.addf %180, %179 : vector<8x128xf32>
    %182 = arith.divf %180, %181 : vector<8x128xf32>
    %183 = vector.extract_strided_slice %170 {offsets = [0, 256], sizes = [8, 128], strides = [1, 1]} : vector<8x512xf32> to vector<8x128xf32>
    %184 = math.tanh %183 : vector<8x128xf32>
    %185 = vector.extract_strided_slice %170 {offsets = [0, 384], sizes = [8, 128], strides = [1, 1]} : vector<8x512xf32> to vector<8x128xf32>
    %186 = arith.negf %185 : vector<8x128xf32>
    %187 = math.exp %186 : vector<8x128xf32>
    %cst_64 = arith.constant 1.000000e+00 : f32
    %188 = vector.broadcast %cst_64 : f32 to vector<8x128xf32>
    %189 = arith.addf %188, %187 : vector<8x128xf32>
    %190 = arith.divf %188, %189 : vector<8x128xf32>
    %191 = arith.mulf %182, %164 : vector<8x128xf32>
    %192 = arith.mulf %176, %184 : vector<8x128xf32>
    %193 = arith.addf %191, %192 : vector<8x128xf32>
    %194 = math.tanh %193 : vector<8x128xf32>
    %195 = arith.mulf %190, %194 : vector<8x128xf32>
    %c40_65 = arith.constant 40 : index
    %c0_66 = arith.constant 0 : index
    %196 = vector.load %arg18[%c40_65, %c0_66] : memref<64x128xf32, #tpu.memory_space<vmem>>, vector<8x128xf32>
    tpu.vector_store %arg18[%c40_65, %c0_66], %195 {strides = array<i32>} : memref<64x128xf32, #tpu.memory_space<vmem>>, vector<8x128xf32>,
    %c48 = arith.constant 48 : index
    %c0_67 = arith.constant 0 : index
    %197 = vector.load %arg17[%c48, %c0_67] : memref<64x512xf32, #tpu.memory_space<vmem>>, vector<8x512xf32>
    %cst_68 = arith.constant dense<0.000000e+00> : vector<8x512xf32>
    %198 = tpu.matmul %195, %20, %cst_68 {dimension_numbers = #tpu.dot_dimension_numbers<[1], [0], [0], [1], [0, 0, 1, 1], [], []>} : vector<8x128xf32>, vector<128x512xf32>, vector<8x512xf32> -> vector<8x512xf32>
    %199 = arith.addf %197, %198 : vector<8x512xf32>
    %200 = vector.extract_strided_slice %199 {offsets = [0, 0], sizes = [8, 128], strides = [1, 1]} : vector<8x512xf32> to vector<8x128xf32>
    %201 = arith.negf %200 : vector<8x128xf32>
    %202 = math.exp %201 : vector<8x128xf32>
    %cst_69 = arith.constant 1.000000e+00 : f32
    %203 = vector.broadcast %cst_69 : f32 to vector<8x128xf32>
    %204 = arith.addf %203, %202 : vector<8x128xf32>
    %205 = arith.divf %203, %204 : vector<8x128xf32>
    %206 = vector.extract_strided_slice %199 {offsets = [0, 128], sizes = [8, 128], strides = [1, 1]} : vector<8x512xf32> to vector<8x128xf32>
    %207 = arith.negf %206 : vector<8x128xf32>
    %208 = math.exp %207 : vector<8x128xf32>
    %cst_70 = arith.constant 1.000000e+00 : f32
    %209 = vector.broadcast %cst_70 : f32 to vector<8x128xf32>
    %210 = arith.addf %209, %208 : vector<8x128xf32>
    %211 = arith.divf %209, %210 : vector<8x128xf32>
    %212 = vector.extract_strided_slice %199 {offsets = [0, 256], sizes = [8, 128], strides = [1, 1]} : vector<8x512xf32> to vector<8x128xf32>
    %213 = math.tanh %212 : vector<8x128xf32>
    %214 = vector.extract_strided_slice %199 {offsets = [0, 384], sizes = [8, 128], strides = [1, 1]} : vector<8x512xf32> to vector<8x128xf32>
    %215 = arith.negf %214 : vector<8x128xf32>
    %216 = math.exp %215 : vector<8x128xf32>
    %cst_71 = arith.constant 1.000000e+00 : f32
    %217 = vector.broadcast %cst_71 : f32 to vector<8x128xf32>
    %218 = arith.addf %217, %216 : vector<8x128xf32>
    %219 = arith.divf %217, %218 : vector<8x128xf32>
    %220 = arith.mulf %211, %193 : vector<8x128xf32>
    %221 = arith.mulf %205, %213 : vector<8x128xf32>
    %222 = arith.addf %220, %221 : vector<8x128xf32>
    %223 = math.tanh %222 : vector<8x128xf32>
    %224 = arith.mulf %219, %223 : vector<8x128xf32>
    %c48_72 = arith.constant 48 : index
    %c0_73 = arith.constant 0 : index
    %225 = vector.load %arg18[%c48_72, %c0_73] : memref<64x128xf32, #tpu.memory_space<vmem>>, vector<8x128xf32>
    tpu.vector_store %arg18[%c48_72, %c0_73], %224 {strides = array<i32>} : memref<64x128xf32, #tpu.memory_space<vmem>>, vector<8x128xf32>,
    %c56 = arith.constant 56 : index
    %c0_74 = arith.constant 0 : index
    %226 = vector.load %arg17[%c56, %c0_74] : memref<64x512xf32, #tpu.memory_space<vmem>>, vector<8x512xf32>
    %cst_75 = arith.constant dense<0.000000e+00> : vector<8x512xf32>
    %227 = tpu.matmul %224, %20, %cst_75 {dimension_numbers = #tpu.dot_dimension_numbers<[1], [0], [0], [1], [0, 0, 1, 1], [], []>} : vector<8x128xf32>, vector<128x512xf32>, vector<8x512xf32> -> vector<8x512xf32>
    %228 = arith.addf %226, %227 : vector<8x512xf32>
    %229 = vector.extract_strided_slice %228 {offsets = [0, 0], sizes = [8, 128], strides = [1, 1]} : vector<8x512xf32> to vector<8x128xf32>
    %230 = arith.negf %229 : vector<8x128xf32>
    %231 = math.exp %230 : vector<8x128xf32>
    %cst_76 = arith.constant 1.000000e+00 : f32
    %232 = vector.broadcast %cst_76 : f32 to vector<8x128xf32>
    %233 = arith.addf %232, %231 : vector<8x128xf32>
    %234 = arith.divf %232, %233 : vector<8x128xf32>
    %235 = vector.extract_strided_slice %228 {offsets = [0, 128], sizes = [8, 128], strides = [1, 1]} : vector<8x512xf32> to vector<8x128xf32>
    %236 = arith.negf %235 : vector<8x128xf32>
    %237 = math.exp %236 : vector<8x128xf32>
    %cst_77 = arith.constant 1.000000e+00 : f32
    %238 = vector.broadcast %cst_77 : f32 to vector<8x128xf32>
    %239 = arith.addf %238, %237 : vector<8x128xf32>
    %240 = arith.divf %238, %239 : vector<8x128xf32>
    %241 = vector.extract_strided_slice %228 {offsets = [0, 256], sizes = [8, 128], strides = [1, 1]} : vector<8x512xf32> to vector<8x128xf32>
    %242 = math.tanh %241 : vector<8x128xf32>
    %243 = vector.extract_strided_slice %228 {offsets = [0, 384], sizes = [8, 128], strides = [1, 1]} : vector<8x512xf32> to vector<8x128xf32>
    %244 = arith.negf %243 : vector<8x128xf32>
    %245 = math.exp %244 : vector<8x128xf32>
    %cst_78 = arith.constant 1.000000e+00 : f32
    %246 = vector.broadcast %cst_78 : f32 to vector<8x128xf32>
    %247 = arith.addf %246, %245 : vector<8x128xf32>
    %248 = arith.divf %246, %247 : vector<8x128xf32>
    %249 = arith.mulf %240, %222 : vector<8x128xf32>
    %250 = arith.mulf %234, %242 : vector<8x128xf32>
    %251 = arith.addf %249, %250 : vector<8x128xf32>
    %252 = math.tanh %251 : vector<8x128xf32>
    %253 = arith.mulf %248, %252 : vector<8x128xf32>
    %c56_79 = arith.constant 56 : index
    %c0_80 = arith.constant 0 : index
    %254 = vector.load %arg18[%c56_79, %c0_80] : memref<64x128xf32, #tpu.memory_space<vmem>>, vector<8x128xf32>
    tpu.vector_store %arg18[%c56_79, %c0_80], %253 {strides = array<i32>} : memref<64x128xf32, #tpu.memory_space<vmem>>, vector<8x128xf32>,
    %c0_81 = arith.constant 0 : index
    %c0_82 = arith.constant 0 : index
    %255 = vector.load %arg18[%c0_81, %c0_82] : memref<64x128xf32, #tpu.memory_space<vmem>>, vector<64x128xf32>
    %c0_83 = arith.constant 0 : index
    %c0_84 = arith.constant 0 : index
    %256 = vector.load %arg4[%c0_83, %c0_84] : memref<128x512xf32, #tpu.memory_space<vmem>>, vector<128x512xf32>
    %cst_85 = arith.constant dense<0.000000e+00> : vector<64x512xf32>
    %257 = tpu.matmul %255, %256, %cst_85 {dimension_numbers = #tpu.dot_dimension_numbers<[1], [0], [0], [1], [0, 0, 1, 1], [], []>} : vector<64x128xf32>, vector<128x512xf32>, vector<64x512xf32> -> vector<64x512xf32>
    %c0_86 = arith.constant 0 : index
    %c0_87 = arith.constant 0 : index
    %258 = vector.load %arg6[%c0_86, %c0_87] : memref<1x512xf32, #tpu.memory_space<vmem>>, vector<1x512xf32>
    %259 = vector.broadcast %258 : vector<1x512xf32> to vector<64x512xf32>
    %260 = arith.addf %257, %259 : vector<64x512xf32>
    %c0_88 = arith.constant 0 : index
    %c0_89 = arith.constant 0 : index
    %261 = vector.load %arg17[%c0_88, %c0_89] : memref<64x512xf32, #tpu.memory_space<vmem>>, vector<64x512xf32>
    tpu.vector_store %arg17[%c0_88, %c0_89], %260 {strides = array<i32>} : memref<64x512xf32, #tpu.memory_space<vmem>>, vector<64x512xf32>,
    %c0_90 = arith.constant 0 : index
    %c0_91 = arith.constant 0 : index
    %262 = vector.load %arg5[%c0_90, %c0_91] : memref<128x512xf32, #tpu.memory_space<vmem>>, vector<128x512xf32>
    %cst_92 = arith.constant 0.000000e+00 : f32
    %263 = vector.broadcast %cst_92 : f32 to vector<8x128xf32>
    %cst_93 = arith.constant 0.000000e+00 : f32
    %264 = vector.broadcast %cst_93 : f32 to vector<8x128xf32>
    %c0_94 = arith.constant 0 : index
    %c0_95 = arith.constant 0 : index
    %265 = vector.load %arg17[%c0_94, %c0_95] : memref<64x512xf32, #tpu.memory_space<vmem>>, vector<8x512xf32>
    %cst_96 = arith.constant dense<0.000000e+00> : vector<8x512xf32>
    %266 = tpu.matmul %263, %262, %cst_96 {dimension_numbers = #tpu.dot_dimension_numbers<[1], [0], [0], [1], [0, 0, 1, 1], [], []>} : vector<8x128xf32>, vector<128x512xf32>, vector<8x512xf32> -> vector<8x512xf32>
    %267 = arith.addf %265, %266 : vector<8x512xf32>
    %268 = vector.extract_strided_slice %267 {offsets = [0, 0], sizes = [8, 128], strides = [1, 1]} : vector<8x512xf32> to vector<8x128xf32>
    %269 = arith.negf %268 : vector<8x128xf32>
    %270 = math.exp %269 : vector<8x128xf32>
    %cst_97 = arith.constant 1.000000e+00 : f32
    %271 = vector.broadcast %cst_97 : f32 to vector<8x128xf32>
    %272 = arith.addf %271, %270 : vector<8x128xf32>
    %273 = arith.divf %271, %272 : vector<8x128xf32>
    %274 = vector.extract_strided_slice %267 {offsets = [0, 128], sizes = [8, 128], strides = [1, 1]} : vector<8x512xf32> to vector<8x128xf32>
    %275 = arith.negf %274 : vector<8x128xf32>
    %276 = math.exp %275 : vector<8x128xf32>
    %cst_98 = arith.constant 1.000000e+00 : f32
    %277 = vector.broadcast %cst_98 : f32 to vector<8x128xf32>
    %278 = arith.addf %277, %276 : vector<8x128xf32>
    %279 = arith.divf %277, %278 : vector<8x128xf32>
    %280 = vector.extract_strided_slice %267 {offsets = [0, 256], sizes = [8, 128], strides = [1, 1]} : vector<8x512xf32> to vector<8x128xf32>
    %281 = math.tanh %280 : vector<8x128xf32>
    %282 = vector.extract_strided_slice %267 {offsets = [0, 384], sizes = [8, 128], strides = [1, 1]} : vector<8x512xf32> to vector<8x128xf32>
    %283 = arith.negf %282 : vector<8x128xf32>
    %284 = math.exp %283 : vector<8x128xf32>
    %cst_99 = arith.constant 1.000000e+00 : f32
    %285 = vector.broadcast %cst_99 : f32 to vector<8x128xf32>
    %286 = arith.addf %285, %284 : vector<8x128xf32>
    %287 = arith.divf %285, %286 : vector<8x128xf32>
    %288 = arith.mulf %279, %264 : vector<8x128xf32>
    %289 = arith.mulf %273, %281 : vector<8x128xf32>
    %290 = arith.addf %288, %289 : vector<8x128xf32>
    %291 = math.tanh %290 : vector<8x128xf32>
    %292 = arith.mulf %287, %291 : vector<8x128xf32>
    %c8_100 = arith.constant 8 : index
    %c0_101 = arith.constant 0 : index
    %293 = vector.load %arg17[%c8_100, %c0_101] : memref<64x512xf32, #tpu.memory_space<vmem>>, vector<8x512xf32>
    %cst_102 = arith.constant dense<0.000000e+00> : vector<8x512xf32>
    %294 = tpu.matmul %292, %262, %cst_102 {dimension_numbers = #tpu.dot_dimension_numbers<[1], [0], [0], [1], [0, 0, 1, 1], [], []>} : vector<8x128xf32>, vector<128x512xf32>, vector<8x512xf32> -> vector<8x512xf32>
    %295 = arith.addf %293, %294 : vector<8x512xf32>
    %296 = vector.extract_strided_slice %295 {offsets = [0, 0], sizes = [8, 128], strides = [1, 1]} : vector<8x512xf32> to vector<8x128xf32>
    %297 = arith.negf %296 : vector<8x128xf32>
    %298 = math.exp %297 : vector<8x128xf32>
    %cst_103 = arith.constant 1.000000e+00 : f32
    %299 = vector.broadcast %cst_103 : f32 to vector<8x128xf32>
    %300 = arith.addf %299, %298 : vector<8x128xf32>
    %301 = arith.divf %299, %300 : vector<8x128xf32>
    %302 = vector.extract_strided_slice %295 {offsets = [0, 128], sizes = [8, 128], strides = [1, 1]} : vector<8x512xf32> to vector<8x128xf32>
    %303 = arith.negf %302 : vector<8x128xf32>
    %304 = math.exp %303 : vector<8x128xf32>
    %cst_104 = arith.constant 1.000000e+00 : f32
    %305 = vector.broadcast %cst_104 : f32 to vector<8x128xf32>
    %306 = arith.addf %305, %304 : vector<8x128xf32>
    %307 = arith.divf %305, %306 : vector<8x128xf32>
    %308 = vector.extract_strided_slice %295 {offsets = [0, 256], sizes = [8, 128], strides = [1, 1]} : vector<8x512xf32> to vector<8x128xf32>
    %309 = math.tanh %308 : vector<8x128xf32>
    %310 = vector.extract_strided_slice %295 {offsets = [0, 384], sizes = [8, 128], strides = [1, 1]} : vector<8x512xf32> to vector<8x128xf32>
    %311 = arith.negf %310 : vector<8x128xf32>
    %312 = math.exp %311 : vector<8x128xf32>
    %cst_105 = arith.constant 1.000000e+00 : f32
    %313 = vector.broadcast %cst_105 : f32 to vector<8x128xf32>
    %314 = arith.addf %313, %312 : vector<8x128xf32>
    %315 = arith.divf %313, %314 : vector<8x128xf32>
    %316 = arith.mulf %307, %290 : vector<8x128xf32>
    %317 = arith.mulf %301, %309 : vector<8x128xf32>
    %318 = arith.addf %316, %317 : vector<8x128xf32>
    %319 = math.tanh %318 : vector<8x128xf32>
    %320 = arith.mulf %315, %319 : vector<8x128xf32>
    %c16_106 = arith.constant 16 : index
    %c0_107 = arith.constant 0 : index
    %321 = vector.load %arg17[%c16_106, %c0_107] : memref<64x512xf32, #tpu.memory_space<vmem>>, vector<8x512xf32>
    %cst_108 = arith.constant dense<0.000000e+00> : vector<8x512xf32>
    %322 = tpu.matmul %320, %262, %cst_108 {dimension_numbers = #tpu.dot_dimension_numbers<[1], [0], [0], [1], [0, 0, 1, 1], [], []>} : vector<8x128xf32>, vector<128x512xf32>, vector<8x512xf32> -> vector<8x512xf32>
    %323 = arith.addf %321, %322 : vector<8x512xf32>
    %324 = vector.extract_strided_slice %323 {offsets = [0, 0], sizes = [8, 128], strides = [1, 1]} : vector<8x512xf32> to vector<8x128xf32>
    %325 = arith.negf %324 : vector<8x128xf32>
    %326 = math.exp %325 : vector<8x128xf32>
    %cst_109 = arith.constant 1.000000e+00 : f32
    %327 = vector.broadcast %cst_109 : f32 to vector<8x128xf32>
    %328 = arith.addf %327, %326 : vector<8x128xf32>
    %329 = arith.divf %327, %328 : vector<8x128xf32>
    %330 = vector.extract_strided_slice %323 {offsets = [0, 128], sizes = [8, 128], strides = [1, 1]} : vector<8x512xf32> to vector<8x128xf32>
    %331 = arith.negf %330 : vector<8x128xf32>
    %332 = math.exp %331 : vector<8x128xf32>
    %cst_110 = arith.constant 1.000000e+00 : f32
    %333 = vector.broadcast %cst_110 : f32 to vector<8x128xf32>
    %334 = arith.addf %333, %332 : vector<8x128xf32>
    %335 = arith.divf %333, %334 : vector<8x128xf32>
    %336 = vector.extract_strided_slice %323 {offsets = [0, 256], sizes = [8, 128], strides = [1, 1]} : vector<8x512xf32> to vector<8x128xf32>
    %337 = math.tanh %336 : vector<8x128xf32>
    %338 = vector.extract_strided_slice %323 {offsets = [0, 384], sizes = [8, 128], strides = [1, 1]} : vector<8x512xf32> to vector<8x128xf32>
    %339 = arith.negf %338 : vector<8x128xf32>
    %340 = math.exp %339 : vector<8x128xf32>
    %cst_111 = arith.constant 1.000000e+00 : f32
    %341 = vector.broadcast %cst_111 : f32 to vector<8x128xf32>
    %342 = arith.addf %341, %340 : vector<8x128xf32>
    %343 = arith.divf %341, %342 : vector<8x128xf32>
    %344 = arith.mulf %335, %318 : vector<8x128xf32>
    %345 = arith.mulf %329, %337 : vector<8x128xf32>
    %346 = arith.addf %344, %345 : vector<8x128xf32>
    %347 = math.tanh %346 : vector<8x128xf32>
    %348 = arith.mulf %343, %347 : vector<8x128xf32>
    %c24_112 = arith.constant 24 : index
    %c0_113 = arith.constant 0 : index
    %349 = vector.load %arg17[%c24_112, %c0_113] : memref<64x512xf32, #tpu.memory_space<vmem>>, vector<8x512xf32>
    %cst_114 = arith.constant dense<0.000000e+00> : vector<8x512xf32>
    %350 = tpu.matmul %348, %262, %cst_114 {dimension_numbers = #tpu.dot_dimension_numbers<[1], [0], [0], [1], [0, 0, 1, 1], [], []>} : vector<8x128xf32>, vector<128x512xf32>, vector<8x512xf32> -> vector<8x512xf32>
    %351 = arith.addf %349, %350 : vector<8x512xf32>
    %352 = vector.extract_strided_slice %351 {offsets = [0, 0], sizes = [8, 128], strides = [1, 1]} : vector<8x512xf32> to vector<8x128xf32>
    %353 = arith.negf %352 : vector<8x128xf32>
    %354 = math.exp %353 : vector<8x128xf32>
    %cst_115 = arith.constant 1.000000e+00 : f32
    %355 = vector.broadcast %cst_115 : f32 to vector<8x128xf32>
    %356 = arith.addf %355, %354 : vector<8x128xf32>
    %357 = arith.divf %355, %356 : vector<8x128xf32>
    %358 = vector.extract_strided_slice %351 {offsets = [0, 128], sizes = [8, 128], strides = [1, 1]} : vector<8x512xf32> to vector<8x128xf32>
    %359 = arith.negf %358 : vector<8x128xf32>
    %360 = math.exp %359 : vector<8x128xf32>
    %cst_116 = arith.constant 1.000000e+00 : f32
    %361 = vector.broadcast %cst_116 : f32 to vector<8x128xf32>
    %362 = arith.addf %361, %360 : vector<8x128xf32>
    %363 = arith.divf %361, %362 : vector<8x128xf32>
    %364 = vector.extract_strided_slice %351 {offsets = [0, 256], sizes = [8, 128], strides = [1, 1]} : vector<8x512xf32> to vector<8x128xf32>
    %365 = math.tanh %364 : vector<8x128xf32>
    %366 = vector.extract_strided_slice %351 {offsets = [0, 384], sizes = [8, 128], strides = [1, 1]} : vector<8x512xf32> to vector<8x128xf32>
    %367 = arith.negf %366 : vector<8x128xf32>
    %368 = math.exp %367 : vector<8x128xf32>
    %cst_117 = arith.constant 1.000000e+00 : f32
    %369 = vector.broadcast %cst_117 : f32 to vector<8x128xf32>
    %370 = arith.addf %369, %368 : vector<8x128xf32>
    %371 = arith.divf %369, %370 : vector<8x128xf32>
    %372 = arith.mulf %363, %346 : vector<8x128xf32>
    %373 = arith.mulf %357, %365 : vector<8x128xf32>
    %374 = arith.addf %372, %373 : vector<8x128xf32>
    %375 = math.tanh %374 : vector<8x128xf32>
    %376 = arith.mulf %371, %375 : vector<8x128xf32>
    %c32_118 = arith.constant 32 : index
    %c0_119 = arith.constant 0 : index
    %377 = vector.load %arg17[%c32_118, %c0_119] : memref<64x512xf32, #tpu.memory_space<vmem>>, vector<8x512xf32>
    %cst_120 = arith.constant dense<0.000000e+00> : vector<8x512xf32>
    %378 = tpu.matmul %376, %262, %cst_120 {dimension_numbers = #tpu.dot_dimension_numbers<[1], [0], [0], [1], [0, 0, 1, 1], [], []>} : vector<8x128xf32>, vector<128x512xf32>, vector<8x512xf32> -> vector<8x512xf32>
    %379 = arith.addf %377, %378 : vector<8x512xf32>
    %380 = vector.extract_strided_slice %379 {offsets = [0, 0], sizes = [8, 128], strides = [1, 1]} : vector<8x512xf32> to vector<8x128xf32>
    %381 = arith.negf %380 : vector<8x128xf32>
    %382 = math.exp %381 : vector<8x128xf32>
    %cst_121 = arith.constant 1.000000e+00 : f32
    %383 = vector.broadcast %cst_121 : f32 to vector<8x128xf32>
    %384 = arith.addf %383, %382 : vector<8x128xf32>
    %385 = arith.divf %383, %384 : vector<8x128xf32>
    %386 = vector.extract_strided_slice %379 {offsets = [0, 128], sizes = [8, 128], strides = [1, 1]} : vector<8x512xf32> to vector<8x128xf32>
    %387 = arith.negf %386 : vector<8x128xf32>
    %388 = math.exp %387 : vector<8x128xf32>
    %cst_122 = arith.constant 1.000000e+00 : f32
    %389 = vector.broadcast %cst_122 : f32 to vector<8x128xf32>
    %390 = arith.addf %389, %388 : vector<8x128xf32>
    %391 = arith.divf %389, %390 : vector<8x128xf32>
    %392 = vector.extract_strided_slice %379 {offsets = [0, 256], sizes = [8, 128], strides = [1, 1]} : vector<8x512xf32> to vector<8x128xf32>
    %393 = math.tanh %392 : vector<8x128xf32>
    %394 = vector.extract_strided_slice %379 {offsets = [0, 384], sizes = [8, 128], strides = [1, 1]} : vector<8x512xf32> to vector<8x128xf32>
    %395 = arith.negf %394 : vector<8x128xf32>
    %396 = math.exp %395 : vector<8x128xf32>
    %cst_123 = arith.constant 1.000000e+00 : f32
    %397 = vector.broadcast %cst_123 : f32 to vector<8x128xf32>
    %398 = arith.addf %397, %396 : vector<8x128xf32>
    %399 = arith.divf %397, %398 : vector<8x128xf32>
    %400 = arith.mulf %391, %374 : vector<8x128xf32>
    %401 = arith.mulf %385, %393 : vector<8x128xf32>
    %402 = arith.addf %400, %401 : vector<8x128xf32>
    %403 = math.tanh %402 : vector<8x128xf32>
    %404 = arith.mulf %399, %403 : vector<8x128xf32>
    %c40_124 = arith.constant 40 : index
    %c0_125 = arith.constant 0 : index
    %405 = vector.load %arg17[%c40_124, %c0_125] : memref<64x512xf32, #tpu.memory_space<vmem>>, vector<8x512xf32>
    %cst_126 = arith.constant dense<0.000000e+00> : vector<8x512xf32>
    %406 = tpu.matmul %404, %262, %cst_126 {dimension_numbers = #tpu.dot_dimension_numbers<[1], [0], [0], [1], [0, 0, 1, 1], [], []>} : vector<8x128xf32>, vector<128x512xf32>, vector<8x512xf32> -> vector<8x512xf32>
    %407 = arith.addf %405, %406 : vector<8x512xf32>
    %408 = vector.extract_strided_slice %407 {offsets = [0, 0], sizes = [8, 128], strides = [1, 1]} : vector<8x512xf32> to vector<8x128xf32>
    %409 = arith.negf %408 : vector<8x128xf32>
    %410 = math.exp %409 : vector<8x128xf32>
    %cst_127 = arith.constant 1.000000e+00 : f32
    %411 = vector.broadcast %cst_127 : f32 to vector<8x128xf32>
    %412 = arith.addf %411, %410 : vector<8x128xf32>
    %413 = arith.divf %411, %412 : vector<8x128xf32>
    %414 = vector.extract_strided_slice %407 {offsets = [0, 128], sizes = [8, 128], strides = [1, 1]} : vector<8x512xf32> to vector<8x128xf32>
    %415 = arith.negf %414 : vector<8x128xf32>
    %416 = math.exp %415 : vector<8x128xf32>
    %cst_128 = arith.constant 1.000000e+00 : f32
    %417 = vector.broadcast %cst_128 : f32 to vector<8x128xf32>
    %418 = arith.addf %417, %416 : vector<8x128xf32>
    %419 = arith.divf %417, %418 : vector<8x128xf32>
    %420 = vector.extract_strided_slice %407 {offsets = [0, 256], sizes = [8, 128], strides = [1, 1]} : vector<8x512xf32> to vector<8x128xf32>
    %421 = math.tanh %420 : vector<8x128xf32>
    %422 = vector.extract_strided_slice %407 {offsets = [0, 384], sizes = [8, 128], strides = [1, 1]} : vector<8x512xf32> to vector<8x128xf32>
    %423 = arith.negf %422 : vector<8x128xf32>
    %424 = math.exp %423 : vector<8x128xf32>
    %cst_129 = arith.constant 1.000000e+00 : f32
    %425 = vector.broadcast %cst_129 : f32 to vector<8x128xf32>
    %426 = arith.addf %425, %424 : vector<8x128xf32>
    %427 = arith.divf %425, %426 : vector<8x128xf32>
    %428 = arith.mulf %419, %402 : vector<8x128xf32>
    %429 = arith.mulf %413, %421 : vector<8x128xf32>
    %430 = arith.addf %428, %429 : vector<8x128xf32>
    %431 = math.tanh %430 : vector<8x128xf32>
    %432 = arith.mulf %427, %431 : vector<8x128xf32>
    %c48_130 = arith.constant 48 : index
    %c0_131 = arith.constant 0 : index
    %433 = vector.load %arg17[%c48_130, %c0_131] : memref<64x512xf32, #tpu.memory_space<vmem>>, vector<8x512xf32>
    %cst_132 = arith.constant dense<0.000000e+00> : vector<8x512xf32>
    %434 = tpu.matmul %432, %262, %cst_132 {dimension_numbers = #tpu.dot_dimension_numbers<[1], [0], [0], [1], [0, 0, 1, 1], [], []>} : vector<8x128xf32>, vector<128x512xf32>, vector<8x512xf32> -> vector<8x512xf32>
    %435 = arith.addf %433, %434 : vector<8x512xf32>
    %436 = vector.extract_strided_slice %435 {offsets = [0, 0], sizes = [8, 128], strides = [1, 1]} : vector<8x512xf32> to vector<8x128xf32>
    %437 = arith.negf %436 : vector<8x128xf32>
    %438 = math.exp %437 : vector<8x128xf32>
    %cst_133 = arith.constant 1.000000e+00 : f32
    %439 = vector.broadcast %cst_133 : f32 to vector<8x128xf32>
    %440 = arith.addf %439, %438 : vector<8x128xf32>
    %441 = arith.divf %439, %440 : vector<8x128xf32>
    %442 = vector.extract_strided_slice %435 {offsets = [0, 128], sizes = [8, 128], strides = [1, 1]} : vector<8x512xf32> to vector<8x128xf32>
    %443 = arith.negf %442 : vector<8x128xf32>
    %444 = math.exp %443 : vector<8x128xf32>
    %cst_134 = arith.constant 1.000000e+00 : f32
    %445 = vector.broadcast %cst_134 : f32 to vector<8x128xf32>
    %446 = arith.addf %445, %444 : vector<8x128xf32>
    %447 = arith.divf %445, %446 : vector<8x128xf32>
    %448 = vector.extract_strided_slice %435 {offsets = [0, 256], sizes = [8, 128], strides = [1, 1]} : vector<8x512xf32> to vector<8x128xf32>
    %449 = math.tanh %448 : vector<8x128xf32>
    %450 = vector.extract_strided_slice %435 {offsets = [0, 384], sizes = [8, 128], strides = [1, 1]} : vector<8x512xf32> to vector<8x128xf32>
    %451 = arith.negf %450 : vector<8x128xf32>
    %452 = math.exp %451 : vector<8x128xf32>
    %cst_135 = arith.constant 1.000000e+00 : f32
    %453 = vector.broadcast %cst_135 : f32 to vector<8x128xf32>
    %454 = arith.addf %453, %452 : vector<8x128xf32>
    %455 = arith.divf %453, %454 : vector<8x128xf32>
    %456 = arith.mulf %447, %430 : vector<8x128xf32>
    %457 = arith.mulf %441, %449 : vector<8x128xf32>
    %458 = arith.addf %456, %457 : vector<8x128xf32>
    %459 = math.tanh %458 : vector<8x128xf32>
    %460 = arith.mulf %455, %459 : vector<8x128xf32>
    %c56_136 = arith.constant 56 : index
    %c0_137 = arith.constant 0 : index
    %461 = vector.load %arg17[%c56_136, %c0_137] : memref<64x512xf32, #tpu.memory_space<vmem>>, vector<8x512xf32>
    %cst_138 = arith.constant dense<0.000000e+00> : vector<8x512xf32>
    %462 = tpu.matmul %460, %262, %cst_138 {dimension_numbers = #tpu.dot_dimension_numbers<[1], [0], [0], [1], [0, 0, 1, 1], [], []>} : vector<8x128xf32>, vector<128x512xf32>, vector<8x512xf32> -> vector<8x512xf32>
    %463 = arith.addf %461, %462 : vector<8x512xf32>
    %464 = vector.extract_strided_slice %463 {offsets = [0, 0], sizes = [8, 128], strides = [1, 1]} : vector<8x512xf32> to vector<8x128xf32>
    %465 = arith.negf %464 : vector<8x128xf32>
    %466 = math.exp %465 : vector<8x128xf32>
    %cst_139 = arith.constant 1.000000e+00 : f32
    %467 = vector.broadcast %cst_139 : f32 to vector<8x128xf32>
    %468 = arith.addf %467, %466 : vector<8x128xf32>
    %469 = arith.divf %467, %468 : vector<8x128xf32>
    %470 = vector.extract_strided_slice %463 {offsets = [0, 128], sizes = [8, 128], strides = [1, 1]} : vector<8x512xf32> to vector<8x128xf32>
    %471 = arith.negf %470 : vector<8x128xf32>
    %472 = math.exp %471 : vector<8x128xf32>
    %cst_140 = arith.constant 1.000000e+00 : f32
    %473 = vector.broadcast %cst_140 : f32 to vector<8x128xf32>
    %474 = arith.addf %473, %472 : vector<8x128xf32>
    %475 = arith.divf %473, %474 : vector<8x128xf32>
    %476 = vector.extract_strided_slice %463 {offsets = [0, 256], sizes = [8, 128], strides = [1, 1]} : vector<8x512xf32> to vector<8x128xf32>
    %477 = math.tanh %476 : vector<8x128xf32>
    %478 = vector.extract_strided_slice %463 {offsets = [0, 384], sizes = [8, 128], strides = [1, 1]} : vector<8x512xf32> to vector<8x128xf32>
    %479 = arith.negf %478 : vector<8x128xf32>
    %480 = math.exp %479 : vector<8x128xf32>
    %cst_141 = arith.constant 1.000000e+00 : f32
    %481 = vector.broadcast %cst_141 : f32 to vector<8x128xf32>
    %482 = arith.addf %481, %480 : vector<8x128xf32>
    %483 = arith.divf %481, %482 : vector<8x128xf32>
    %484 = arith.mulf %475, %458 : vector<8x128xf32>
    %485 = arith.mulf %469, %477 : vector<8x128xf32>
    %486 = arith.addf %484, %485 : vector<8x128xf32>
    %487 = math.tanh %486 : vector<8x128xf32>
    %488 = arith.mulf %483, %487 : vector<8x128xf32>
    %489 = arith.addf %12, %488 : vector<8x128xf32>
    %c0_142 = arith.constant 0 : index
    %c0_143 = arith.constant 0 : index
    %490 = vector.load %arg12[%c0_142, %c0_143] : memref<128x128xf32, #tpu.memory_space<vmem>>, vector<128x128xf32>
    %cst_144 = arith.constant dense<0.000000e+00> : vector<8x128xf32>
    %491 = tpu.matmul %489, %490, %cst_144 {dimension_numbers = #tpu.dot_dimension_numbers<[1], [0], [0], [1], [0, 0, 1, 1], [], []>} : vector<8x128xf32>, vector<128x128xf32>, vector<8x128xf32> -> vector<8x128xf32>
    %c0_145 = arith.constant 0 : index
    %c0_146 = arith.constant 0 : index
    %492 = vector.load %arg13[%c0_145, %c0_146] : memref<1x128xf32, #tpu.memory_space<vmem>>, vector<1x128xf32>
    %493 = vector.broadcast %492 : vector<1x128xf32> to vector<8x128xf32>
    %494 = arith.addf %491, %493 : vector<8x128xf32>
    %cst_147 = arith.constant 0.000000e+00 : f32
    %495 = vector.broadcast %cst_147 : f32 to vector<8x128xf32>
    %496 = arith.maximumf %494, %495 : vector<8x128xf32>
    %c0_148 = arith.constant 0 : index
    %c0_149 = arith.constant 0 : index
    %497 = vector.load %arg14[%c0_148, %c0_149] : memref<128x128xf32, #tpu.memory_space<vmem>>, vector<128x128xf32>
    %cst_150 = arith.constant dense<0.000000e+00> : vector<8x128xf32>
    %498 = tpu.matmul %496, %497, %cst_150 {dimension_numbers = #tpu.dot_dimension_numbers<[1], [0], [0], [1], [0, 0, 1, 1], [], []>} : vector<8x128xf32>, vector<128x128xf32>, vector<8x128xf32> -> vector<8x128xf32>
    %c0_151 = arith.constant 0 : index
    %c0_152 = arith.constant 0 : index
    %499 = vector.load %arg15[%c0_151, %c0_152] : memref<1x128xf32, #tpu.memory_space<vmem>>, vector<1x128xf32>
    %500 = vector.broadcast %499 : vector<1x128xf32> to vector<8x128xf32>
    %501 = arith.addf %498, %500 : vector<8x128xf32>
    %c0_153 = arith.constant 0 : index
    %c0_154 = arith.constant 0 : index
    %502 = vector.load %arg16[%c0_153, %c0_154] : memref<8x128xf32, #tpu.memory_space<vmem>>, vector<8x128xf32>
    tpu.vector_store %arg16[%c0_153, %c0_154], %501 {strides = array<i32>} : memref<8x128xf32, #tpu.memory_space<vmem>>, vector<8x128xf32>,
    return
  }
}

</mosaic_0001>

<llo_original>
// kernel: vqa_forward.1
$region0: #{vqa_forward.1}
  #allocation0 [shape = 'u32[]', space=smem, size = 0x4, offset = 0x4, fixed_abs, tag = 'smem constant byte address 0x4 - core index']
  #allocation1 [shape = 'u32[144,128]{1,0:T(1,128)}', space=vmem, size = 0x12000, scoped, tag = 'internal scratch']
  #allocation2 [shape = 'f32[64,512]{1,0:T(8,128)}', space=vmem, size = 0x20000, scoped, tag = 'scratch operand']
  #allocation3 [shape = 'f32[64,128]{1,0:T(8,128)}', space=vmem, size = 0x8000, scoped, tag = 'scratch operand']
  %s0 = inlined_call_operand.vmem [shape: f32[64,32], index: 0, kind: input, shape index: {}]
  %s1 = inlined_call_operand.vmem [shape: f32[32,512], index: 1, kind: input, shape index: {}]
  %s2 = inlined_call_operand.vmem [shape: f32[128,512], index: 2, kind: input, shape index: {}]
  %s3 = inlined_call_operand.hbm [shape: f32[1,512], index: 3, kind: input, shape index: {}]
  %s4 = inlined_call_operand.hbm [shape: f32[128,512], index: 4, kind: input, shape index: {}]
  %s5 = inlined_call_operand.hbm [shape: f32[128,512], index: 5, kind: input, shape index: {}]
  %s6 = inlined_call_operand.hbm [shape: f32[1,512], index: 6, kind: input, shape index: {}]
  %s7 = inlined_call_operand.vmem [shape: f32[8,128], index: 7, kind: input, shape index: {}]
  %s8 = inlined_call_operand.vmem [shape: f32[128,128], index: 8, kind: input, shape index: {}]
  %s9 = inlined_call_operand.vmem [shape: f32[1,128], index: 9, kind: input, shape index: {}]
  %s10 = inlined_call_operand.vmem [shape: f32[128,128], index: 10, kind: input, shape index: {}]
  %s11 = inlined_call_operand.vmem [shape: f32[1,128], index: 11, kind: input, shape index: {}]
  %s12 = inlined_call_operand.hbm [shape: f32[128,128], index: 12, kind: input, shape index: {}]
  %s13 = inlined_call_operand.hbm [shape: f32[1,128], index: 13, kind: input, shape index: {}]
  %s14 = inlined_call_operand.hbm [shape: f32[128,128], index: 14, kind: input, shape index: {}]
  %s15 = inlined_call_operand.hbm [shape: f32[1,128], index: 15, kind: input, shape index: {}]
  %s16 = inlined_call_operand.vmem [shape: f32[8,128], index: 16, kind: output, shape index: {}]
  %s17 = sld [smem:[#allocation0]]
  $region106: #{vqa_forward.1} parent=0
    _
  %s19 = ssub.s32 1, %s17
  %s20 = scalar_select 0, %s19, %s17
  $region1: #{vqa_forward.1} parent=0
    #allocation4 [shape = 'u8[2048]{0}', space=vmem, size = 0x800, scoped, tag = 'input window, operand 3, single buffered']
    #allocation5 [shape = 's32[1]{0}', space=sflag, size = 0x4, scoped, tag = 'scoped memory for vqa_forward.1']
    #allocation6 [shape = 'u8[262144]{0}', space=vmem, size = 0x40000, scoped, tag = 'input window, operand 4, single buffered']
    #allocation7 [shape = 's32[1]{0}', space=sflag, size = 0x4, scoped, tag = 'scoped memory for vqa_forward.1']
    #allocation8 [shape = 'u8[262144]{0}', space=vmem, size = 0x40000, scoped, tag = 'input window, operand 5, single buffered']
    #allocation9 [shape = 'u8[2048]{0}', space=vmem, size = 0x800, scoped, tag = 'input window, operand 6, single buffered']
    #allocation10 [shape = 's32[1]{0}', space=sflag, size = 0x4, scoped, tag = 'scoped memory for vqa_forward.1']
    #allocation11 [shape = 'u8[65536]{0}', space=vmem, size = 0x10000, scoped, tag = 'input window, operand 12, single buffered']
    #allocation12 [shape = 'u8[512]{0}', space=vmem, size = 0x400, scoped, tag = 'input window, operand 13, single buffered']
    #allocation13 [shape = 's32[1]{0}', space=sflag, size = 0x4, scoped, tag = 'scoped memory for vqa_forward.1']
    #allocation14 [shape = 'u8[65536]{0}', space=vmem, size = 0x10000, scoped, tag = 'input window, operand 14, single buffered']
    #allocation15 [shape = 'u8[512]{0}', space=vmem, size = 0x400, scoped, tag = 'input window, operand 15, single buffered']
    #allocation16 [shape = 's32[1]{0}', space=sflag, size = 0x4, scoped, tag = 'scoped memory for vqa_forward.1']
    %21 = vsyncpa [#allocation5], 0
    %22 = vsyncpa [#allocation7], 0
    %23 = vsyncpa [#allocation10], 0
    %24 = vsyncpa [#allocation13], 0
    %25 = vsyncpa [#allocation16], 0
    // Predicated region
    $region2: #{vqa_forward.1} parent=1 // pred_check
      _
    $region3: #{vqa_forward.1} parent=1 // pred_check_branch
      %27 = sbr.rel (0) target = $region5
    $region4: #{vqa_forward.1} parent=1 // pred_region
      _
    $region5: #{vqa_forward.1} parent=1 // pred_fallthru
      _
    // Predicated region
    $region6: #{vqa_forward.1} parent=1 // pred_check
      _
    $region7: #{vqa_forward.1} parent=1 // pred_check_branch
      %29 = sbr.rel (0) target = $region9
    $region8: #{vqa_forward.1} parent=1 // pred_region
      _
    $region9: #{vqa_forward.1} parent=1 // pred_fallthru
      _
    // Predicated region
    $region10: #{vqa_forward.1} parent=1 // pred_check
      _
    $region11: #{vqa_forward.1} parent=1 // pred_check_branch
      %31 = sbr.rel (0) target = $region13
    $region12: #{vqa_forward.1} parent=1 // pred_region
      _
    $region13: #{vqa_forward.1} parent=1 // pred_fallthru
      _
    // Predicated region
    $region14: #{vqa_forward.1} parent=1 // pred_check
      _
    $region15: #{vqa_forward.1} parent=1 // pred_check_branch
      %33 = sbr.rel (0) target = $region17
    $region16: #{vqa_forward.1} parent=1 // pred_region
      %s35 = ssub.s32 64, 64
      %36 = vsyncadd [#allocation5], %s35
      %s38 = sshll.u32 [#allocation4], 4
      %s39 = int_to_ptr.vmem [resolvable:$true] %s38
      %41 = dma.hbm_to_vmem [thread:$0]  %s3, 64, %s39, [#allocation5]
    $region17: #{vqa_forward.1} parent=1 // pred_fallthru
      _
    // Predicated region
    $region18: #{vqa_forward.1} parent=1 // pred_check
      _
    $region19: #{vqa_forward.1} parent=1 // pred_check_branch
      %43 = sbr.rel (0) target = $region21
    $region20: #{vqa_forward.1} parent=1 // pred_region
      %s45 = ssub.s32 8192, 8192
      %46 = vsyncadd [#allocation7], %s45
      %s47 = sshll.u32 [#allocation6], 4
      %s48 = int_to_ptr.vmem [resolvable:$true] %s47
      %53 = dma.hbm_to_vmem [thread:$0]  %s4, 8192, %s48, [#allocation7], 512, 512, 32
    $region21: #{vqa_forward.1} parent=1 // pred_fallthru
      _
    // Predicated region
    $region22: #{vqa_forward.1} parent=1 // pred_check
      _
    $region23: #{vqa_forward.1} parent=1 // pred_check_branch
      %55 = sbr.rel (0) target = $region25
    $region24: #{vqa_forward.1} parent=1 // pred_region
      %s57 = ssub.s32 8192, 8192
      %58 = vsyncadd [#allocation7], %s57
      %s59 = sshll.u32 [#allocation8], 4
      %s60 = int_to_ptr.vmem [resolvable:$true] %s59
      %65 = dma.hbm_to_vmem [thread:$0]  %s5, 8192, %s60, [#allocation7], 512, 512, 32
    $region25: #{vqa_forward.1} parent=1 // pred_fallthru
      _
    // Predicated region
    $region26: #{vqa_forward.1} parent=1 // pred_check
      _
    $region27: #{vqa_forward.1} parent=1 // pred_check_branch
      %67 = sbr.rel (0) target = $region29
    $region28: #{vqa_forward.1} parent=1 // pred_region
      %s69 = ssub.s32 64, 64
      %70 = vsyncadd [#allocation10], %s69
      %s72 = sshll.u32 [#allocation9], 4
      %s73 = int_to_ptr.vmem [resolvable:$true] %s72
      %75 = dma.hbm_to_vmem [thread:$0]  %s6, 64, %s73, [#allocation10]
    $region29: #{vqa_forward.1} parent=1 // pred_fallthru
      _
    // Predicated region
    $region30: #{vqa_forward.1} parent=1 // pred_check
      _
    $region31: #{vqa_forward.1} parent=1 // pred_check_branch
      %77 = sbr.rel (0) target = $region33
    $region32: #{vqa_forward.1} parent=1 // pred_region
      _
    $region33: #{vqa_forward.1} parent=1 // pred_fallthru
      _
    // Predicated region
    $region34: #{vqa_forward.1} parent=1 // pred_check
      _
    $region35: #{vqa_forward.1} parent=1 // pred_check_branch
      %79 = sbr.rel (0) target = $region37
    $region36: #{vqa_forward.1} parent=1 // pred_region
      _
    $region37: #{vqa_forward.1} parent=1 // pred_fallthru
      _
    // Predicated region
    $region38: #{vqa_forward.1} parent=1 // pred_check
      _
    $region39: #{vqa_forward.1} parent=1 // pred_check_branch
      %81 = sbr.rel (0) target = $region41
    $region40: #{vqa_forward.1} parent=1 // pred_region
      _
    $region41: #{vqa_forward.1} parent=1 // pred_fallthru
      _
    // Predicated region
    $region42: #{vqa_forward.1} parent=1 // pred_check
      _
    $region43: #{vqa_forward.1} parent=1 // pred_check_branch
      %83 = sbr.rel (0) target = $region45
    $region44: #{vqa_forward.1} parent=1 // pred_region
      _
    $region45: #{vqa_forward.1} parent=1 // pred_fallthru
      _
    // Predicated region
    $region46: #{vqa_forward.1} parent=1 // pred_check
      _
    $region47: #{vqa_forward.1} parent=1 // pred_check_branch
      %85 = sbr.rel (0) target = $region49
    $region48: #{vqa_forward.1} parent=1 // pred_region
      _
    $region49: #{vqa_forward.1} parent=1 // pred_fallthru
      _
    // Predicated region
    $region50: #{vqa_forward.1} parent=1 // pred_check
      _
    $region51: #{vqa_forward.1} parent=1 // pred_check_branch
      %87 = sbr.rel (0) target = $region53
    $region52: #{vqa_forward.1} parent=1 // pred_region
      %s89 = ssub.s32 2048, 2048
      %90 = vsyncadd [#allocation10], %s89
      %s91 = sshll.u32 [#allocation11], 4
      %s92 = int_to_ptr.vmem [resolvable:$true] %s91
      %97 = dma.hbm_to_vmem [thread:$0]  %s12, 2048, %s92, [#allocation10], 128, 128, 8
    $region53: #{vqa_forward.1} parent=1 // pred_fallthru
      _
    // Predicated region
    $region54: #{vqa_forward.1} parent=1 // pred_check
      _
    $region55: #{vqa_forward.1} parent=1 // pred_check_branch
      %99 = sbr.rel (0) target = $region57
    $region56: #{vqa_forward.1} parent=1 // pred_region
      %s101 = ssub.s32 16, 16
      %102 = vsyncadd [#allocation13], %s101
      %s104 = sshll.u32 [#allocation12], 4
      %s105 = int_to_ptr.vmem [resolvable:$true] %s104
      %107 = dma.hbm_to_vmem [thread:$0]  %s13, 16, %s105, [#allocation13]
    $region57: #{vqa_forward.1} parent=1 // pred_fallthru
      _
    // Predicated region
    $region58: #{vqa_forward.1} parent=1 // pred_check
      _
    $region59: #{vqa_forward.1} parent=1 // pred_check_branch
      %109 = sbr.rel (0) target = $region61
    $region60: #{vqa_forward.1} parent=1 // pred_region
      %s111 = ssub.s32 2048, 2048
      %112 = vsyncadd [#allocation13], %s111
      %s113 = sshll.u32 [#allocation14], 4
      %s114 = int_to_ptr.vmem [resolvable:$true] %s113
      %119 = dma.hbm_to_vmem [thread:$0]  %s14, 2048, %s114, [#allocation13], 128, 128, 8
    $region61: #{vqa_forward.1} parent=1 // pred_fallthru
      _
    // Predicated region
    $region62: #{vqa_forward.1} parent=1 // pred_check
      _
    $region63: #{vqa_forward.1} parent=1 // pred_check_branch
      %121 = sbr.rel (0) target = $region65
    $region64: #{vqa_forward.1} parent=1 // pred_region
      %s123 = ssub.s32 16, 16
      %124 = vsyncadd [#allocation16], %s123
      %s126 = sshll.u32 [#allocation15], 4
      %s127 = int_to_ptr.vmem [resolvable:$true] %s126
      %129 = dma.hbm_to_vmem [thread:$0]  %s15, 16, %s127, [#allocation16]
    $region65: #{vqa_forward.1} parent=1 // pred_fallthru
      _
    // Predicated region
    $region66: #{vqa_forward.1} parent=1 // pred_check
      _
    $region67: #{vqa_forward.1} parent=1 // pred_check_branch
      %131 = sbr.rel (0) target = $region69
    $region68: #{vqa_forward.1} parent=1 // pred_region
      %132 = dma.done [#allocation5], 64
    $region69: #{vqa_forward.1} parent=1 // pred_fallthru
      _
    // Predicated region
    $region70: #{vqa_forward.1} parent=1 // pred_check
      _
    $region71: #{vqa_forward.1} parent=1 // pred_check_branch
      %134 = sbr.rel (0) target = $region73
    $region72: #{vqa_forward.1} parent=1 // pred_region
      %135 = dma.done [#allocation7], 8192
    $region73: #{vqa_forward.1} parent=1 // pred_fallthru
      _
    // Predicated region
    $region74: #{vqa_forward.1} parent=1 // pred_check
      _
    $region75: #{vqa_forward.1} parent=1 // pred_check_branch
      %137 = sbr.rel (0) target = $region77
    $region76: #{vqa_forward.1} parent=1 // pred_region
      %138 = dma.done [#allocation7], 8192
    $region77: #{vqa_forward.1} parent=1 // pred_fallthru
      _
    // Predicated region
    $region78: #{vqa_forward.1} parent=1 // pred_check
      _
    $region79: #{vqa_forward.1} parent=1 // pred_check_branch
      %140 = sbr.rel (0) target = $region81
    $region80: #{vqa_forward.1} parent=1 // pred_region
      %141 = dma.done [#allocation10], 64
    $region81: #{vqa_forward.1} parent=1 // pred_fallthru
      _
    // Predicated region
    $region82: #{vqa_forward.1} parent=1 // pred_check
      _
    $region83: #{vqa_forward.1} parent=1 // pred_check_branch
      %143 = sbr.rel (0) target = $region85
    $region84: #{vqa_forward.1} parent=1 // pred_region
      %144 = dma.done [#allocation10], 2048
    $region85: #{vqa_forward.1} parent=1 // pred_fallthru
      _
    // Predicated region
    $region86: #{vqa_forward.1} parent=1 // pred_check
      _
    $region87: #{vqa_forward.1} parent=1 // pred_check_branch
      %146 = sbr.rel (0) target = $region89
    $region88: #{vqa_forward.1} parent=1 // pred_region
      %147 = dma.done [#allocation13], 16
    $region89: #{vqa_forward.1} parent=1 // pred_fallthru
      _
    // Predicated region
    $region90: #{vqa_forward.1} parent=1 // pred_check
      _
    $region91: #{vqa_forward.1} parent=1 // pred_check_branch
      %149 = sbr.rel (0) target = $region93
    $region92: #{vqa_forward.1} parent=1 // pred_region
      %150 = dma.done [#allocation13], 2048
    $region93: #{vqa_forward.1} parent=1 // pred_fallthru
      _
    // Predicated region
    $region94: #{vqa_forward.1} parent=1 // pred_check
      _
    $region95: #{vqa_forward.1} parent=1 // pred_check_branch
      %152 = sbr.rel (0) target = $region97
    $region96: #{vqa_forward.1} parent=1 // pred_region
      %153 = dma.done [#allocation16], 16
    $region97: #{vqa_forward.1} parent=1 // pred_fallthru
      _
    %v154 = vld [vmem:[%s7] sm:$0xff]
    %v155 = vld [vmem:[%s8] sm:$0xff]
    %v156 = vld [vmem:[%s8 + $0x8] sm:$0xff]
    %v157 = vld [vmem:[%s8 + $0x10] sm:$0xff]
    %v158 = vld [vmem:[%s8 + $0x18] sm:$0xff]
    %v159 = vld [vmem:[%s8 + $0x20] sm:$0xff]
    %v160 = vld [vmem:[%s8 + $0x28] sm:$0xff]
    %v161 = vld [vmem:[%s8 + $0x30] sm:$0xff]
    %v162 = vld [vmem:[%s8 + $0x38] sm:$0xff]
    %v163 = vld [vmem:[%s8 + $0x40] sm:$0xff]
    %v164 = vld [vmem:[%s8 + $0x48] sm:$0xff]
    %v165 = vld [vmem:[%s8 + $0x50] sm:$0xff]
    %v166 = vld [vmem:[%s8 + $0x58] sm:$0xff]
    %v167 = vld [vmem:[%s8 + $0x60] sm:$0xff]
    %v168 = vld [vmem:[%s8 + $0x68] sm:$0xff]
    %v169 = vld [vmem:[%s8 + $0x70] sm:$0xff]
    %v170 = vld [vmem:[%s8 + $0x78] sm:$0xff]
    %v171 = vld [vmem:[%s9] sm:$0x1]
    %v173 = vlaneseq
    %v174 = vshrl.u32 %v173, 7
    %v175 = vsub.s32 0, %v174
    %v176 = vrot.slane %v171, %v175
    %178 = vmatprep.subr.mxu0 0.0
    %179 = vmatpush1.msra.mxu0 %v155
    %180 = vmatprep.subr.mxu0 0.0
    %181 = vmatpush1.msra.mxu0 %v156
    %182 = vmatprep.subr.mxu0 0.0
    %183 = vmatpush1.msra.mxu0 %v157
    %184 = vmatprep.subr.mxu0 0.0
    %185 = vmatpush1.msra.mxu0 %v158
    %186 = vmatprep.subr.mxu0 0.0
    %187 = vmatpush1.msra.mxu0 %v159
    %188 = vmatprep.subr.mxu0 0.0
    %189 = vmatpush1.msra.mxu0 %v160
    %190 = vmatprep.subr.mxu0 0.0
    %191 = vmatpush1.msra.mxu0 %v161
    %192 = vmatprep.subr.mxu0 0.0
    %193 = vmatpush1.msra.mxu0 %v162
    %194 = vmatprep.subr.mxu0 0.0
    %195 = vmatpush1.msra.mxu0 %v163
    %196 = vmatprep.subr.mxu0 0.0
    %197 = vmatpush1.msra.mxu0 %v164
    %198 = vmatprep.subr.mxu0 0.0
    %199 = vmatpush1.msra.mxu0 %v165
    %200 = vmatprep.subr.mxu0 0.0
    %201 = vmatpush1.msra.mxu0 %v166
    %202 = vmatprep.subr.mxu0 0.0
    %203 = vmatpush1.msra.mxu0 %v167
    %204 = vmatprep.subr.mxu0 0.0
    %205 = vmatpush1.msra.mxu0 %v168
    %206 = vmatprep.subr.mxu0 0.0
    %207 = vmatpush1.msra.mxu0 %v169
    %208 = vmatprep.subr.mxu0 0.0
    %209 = vmatpush1.msra.mxu0 %v170
    %210 = vmatprep.subr.mxu0 0.0
    %211 = vmatpush1.msra.mxu0 0.0
    %212 = vmatprep.subr.mxu0 0.0
    %213 = vmatpush1.msra.mxu0 0.0
    %214 = vmatprep.subr.mxu0 0.0
    %215 = vmatpush1.msra.mxu0 0.0
    %216 = vmatprep.subr.mxu0 0.0
    %217 = vmatpush1.msra.mxu0 0.0
    %218 = vmatprep.subr.mxu0 0.0
    %219 = vmatpush1.msra.mxu0 0.0
    %220 = vmatprep.subr.mxu0 0.0
    %221 = vmatpush1.msra.mxu0 0.0
    %222 = vmatprep.subr.mxu0 0.0
    %223 = vmatpush1.msra.mxu0 0.0
    %224 = vmatprep.subr.mxu0 0.0
    %225 = vmatpush1.msra.mxu0 0.0
    %226 = vmatprep.subr.mxu0 0.0
    %227 = vmatpush1.msra.mxu0 0.0
    %228 = vmatprep.subr.mxu0 0.0
    %229 = vmatpush1.msra.mxu0 0.0
    %230 = vmatprep.subr.mxu0 0.0
    %231 = vmatpush1.msra.mxu0 0.0
    %232 = vmatprep.subr.mxu0 0.0
    %233 = vmatpush1.msra.mxu0 0.0
    %234 = vmatprep.subr.mxu0 0.0
    %235 = vmatpush1.msra.mxu0 0.0
    %236 = vmatprep.subr.mxu0 0.0
    %237 = vmatpush1.msra.mxu0 0.0
    %238 = vmatprep.subr.mxu0 0.0
    %239 = vmatpush1.msra.mxu0 0.0
    %240 = vmatprep.subr.mxu0 0.0
    %241 = vmatpush1.msra.mxu0 0.0
    %242 = vmatprep.mubr.f32.mxu0 0.0
    %243 = vmatmul.mubr.f32.gmra.mrb[0].mxu0 %v154
    %v244 = vpop.f32.mrb[0].mxu0
    %v245 = vadd.f32 %v176, %v244
    %v246 = vpop.f32.mrb[0].mxu0
    %247 = vdwg.mxu0
    %v248 = vmax.f32 %v245, 0.0
    %v249 = vld [vmem:[%s10] sm:$0xff]
    %v250 = vld [vmem:[%s10 + $0x8] sm:$0xff]
    %v251 = vld [vmem:[%s10 + $0x10] sm:$0xff]
    %v252 = vld [vmem:[%s10 + $0x18] sm:$0xff]
    %v253 = vld [vmem:[%s10 + $0x20] sm:$0xff]
    %v254 = vld [vmem:[%s10 + $0x28] sm:$0xff]
    %v255 = vld [vmem:[%s10 + $0x30] sm:$0xff]
    %v256 = vld [vmem:[%s10 + $0x38] sm:$0xff]
    %v257 = vld [vmem:[%s10 + $0x40] sm:$0xff]
    %v258 = vld [vmem:[%s10 + $0x48] sm:$0xff]
    %v259 = vld [vmem:[%s10 + $0x50] sm:$0xff]
    %v260 = vld [vmem:[%s10 + $0x58] sm:$0xff]
    %v261 = vld [vmem:[%s10 + $0x60] sm:$0xff]
    %v262 = vld [vmem:[%s10 + $0x68] sm:$0xff]
    %v263 = vld [vmem:[%s10 + $0x70] sm:$0xff]
    %v264 = vld [vmem:[%s10 + $0x78] sm:$0xff]
    %v265 = vld [vmem:[%s11] sm:$0x1]
    %v267 = vlaneseq
    %v268 = vshrl.u32 %v267, 7
    %v269 = vsub.s32 0, %v268
    %v270 = vrot.slane %v265, %v269
    %272 = vmatprep.subr.mxu0 0.0
    %273 = vmatpush1.msra.mxu0 %v249
    %274 = vmatprep.subr.mxu0 0.0
    %275 = vmatpush1.msra.mxu0 %v250
    %276 = vmatprep.subr.mxu0 0.0
    %277 = vmatpush1.msra.mxu0 %v251
    %278 = vmatprep.subr.mxu0 0.0
    %279 = vmatpush1.msra.mxu0 %v252
    %280 = vmatprep.subr.mxu0 0.0
    %281 = vmatpush1.msra.mxu0 %v253
    %282 = vmatprep.subr.mxu0 0.0
    %283 = vmatpush1.msra.mxu0 %v254
    %284 = vmatprep.subr.mxu0 0.0
    %285 = vmatpush1.msra.mxu0 %v255
    %286 = vmatprep.subr.mxu0 0.0
    %287 = vmatpush1.msra.mxu0 %v256
    %288 = vmatprep.subr.mxu0 0.0
    %289 = vmatpush1.msra.mxu0 %v257
    %290 = vmatprep.subr.mxu0 0.0
    %291 = vmatpush1.msra.mxu0 %v258
    %292 = vmatprep.subr.mxu0 0.0
    %293 = vmatpush1.msra.mxu0 %v259
    %294 = vmatprep.subr.mxu0 0.0
    %295 = vmatpush1.msra.mxu0 %v260
    %296 = vmatprep.subr.mxu0 0.0
    %297 = vmatpush1.msra.mxu0 %v261
    %298 = vmatprep.subr.mxu0 0.0
    %299 = vmatpush1.msra.mxu0 %v262
    %300 = vmatprep.subr.mxu0 0.0
    %301 = vmatpush1.msra.mxu0 %v263
    %302 = vmatprep.subr.mxu0 0.0
    %303 = vmatpush1.msra.mxu0 %v264
    %304 = vmatprep.subr.mxu0 0.0
    %305 = vmatpush1.msra.mxu0 0.0
    %306 = vmatprep.subr.mxu0 0.0
    %307 = vmatpush1.msra.mxu0 0.0
    %308 = vmatprep.subr.mxu0 0.0
    %309 = vmatpush1.msra.mxu0 0.0
    %310 = vmatprep.subr.mxu0 0.0
    %311 = vmatpush1.msra.mxu0 0.0
    %312 = vmatprep.subr.mxu0 0.0
    %313 = vmatpush1.msra.mxu0 0.0
    %314 = vmatprep.subr.mxu0 0.0
    %315 = vmatpush1.msra.mxu0 0.0
    %316 = vmatprep.subr.mxu0 0.0
    %317 = vmatpush1.msra.mxu0 0.0
    %318 = vmatprep.subr.mxu0 0.0
    %319 = vmatpush1.msra.mxu0 0.0
    %320 = vmatprep.subr.mxu0 0.0
    %321 = vmatpush1.msra.mxu0 0.0
    %322 = vmatprep.subr.mxu0 0.0
    %323 = vmatpush1.msra.mxu0 0.0
    %324 = vmatprep.subr.mxu0 0.0
    %325 = vmatpush1.msra.mxu0 0.0
    %326 = vmatprep.subr.mxu0 0.0
    %327 = vmatpush1.msra.mxu0 0.0
    %328 = vmatprep.subr.mxu0 0.0
    %329 = vmatpush1.msra.mxu0 0.0
    %330 = vmatprep.subr.mxu0 0.0
    %331 = vmatpush1.msra.mxu0 0.0
    %332 = vmatprep.subr.mxu0 0.0
    %333 = vmatpush1.msra.mxu0 0.0
    %334 = vmatprep.subr.mxu0 0.0
    %335 = vmatpush1.msra.mxu0 0.0
    %336 = vmatprep.mubr.f32.mxu0 0.0
    %337 = vmatmul.mubr.f32.gmra.mrb[0].mxu0 %v248
    %v338 = vpop.f32.mrb[0].mxu0
    %v339 = vadd.f32 %v270, %v338
    %v340 = vpop.f32.mrb[0].mxu0
    %341 = vdwg.mxu0
    %v342 = vld [vmem:[%s0] sm:$0xff]
    %v343 = vld [vmem:[%s0 + $0x8] sm:$0xff]
    %v344 = vld [vmem:[%s0 + $0x10] sm:$0xff]
    %v345 = vld [vmem:[%s0 + $0x18] sm:$0xff]
    %v346 = vld [vmem:[%s0 + $0x20] sm:$0xff]
    %v347 = vld [vmem:[%s0 + $0x28] sm:$0xff]
    %v348 = vld [vmem:[%s0 + $0x30] sm:$0xff]
    %v349 = vld [vmem:[%s0 + $0x38] sm:$0xff]
    %v350 = vld [vmem:[%s1] sm:$0xff]
    %v351 = vld [vmem:[%s1 + $0x8] sm:$0xff]
    %v352 = vld [vmem:[%s1 + $0x10] sm:$0xff]
    %v353 = vld [vmem:[%s1 + $0x18] sm:$0xff]
    %v354 = vld [vmem:[%s1 + $0x20] sm:$0xff]
    %v355 = vld [vmem:[%s1 + $0x28] sm:$0xff]
    %v356 = vld [vmem:[%s1 + $0x30] sm:$0xff]
    %v357 = vld [vmem:[%s1 + $0x38] sm:$0xff]
    %v358 = vld [vmem:[%s1 + $0x40] sm:$0xff]
    %v359 = vld [vmem:[%s1 + $0x48] sm:$0xff]
    %v360 = vld [vmem:[%s1 + $0x50] sm:$0xff]
    %v361 = vld [vmem:[%s1 + $0x58] sm:$0xff]
    %v362 = vld [vmem:[%s1 + $0x60] sm:$0xff]
    %v363 = vld [vmem:[%s1 + $0x68] sm:$0xff]
    %v364 = vld [vmem:[%s1 + $0x70] sm:$0xff]
    %v365 = vld [vmem:[%s1 + $0x78] sm:$0xff]
    %v366 = vld [vmem:[#allocation4] sm:$0xf]
    %v368 = vlaneseq
    %v369 = vshrl.u32 %v368, 7
    %v370 = vsub.s32 0, %v369
    %v371 = vrot.slane %v366, %v370
    %v372 = vlaneseq
    %v373 = vshrl.u32 %v372, 7
    %v374 = vsub.s32 1, %v373
    %v375 = vrot.slane %v366, %v374
    %v376 = vlaneseq
    %v377 = vshrl.u32 %v376, 7
    %v378 = vsub.s32 2, %v377
    %v379 = vrot.slane %v366, %v378
    %v380 = vlaneseq
    %v381 = vshrl.u32 %v380, 7
    %v382 = vsub.s32 3, %v381
    %v383 = vrot.slane %v366, %v382
    %vm388 = vcmask 261120
    %v390 = vsel %vm388, %v342, 0
    %v393 = vsel %vm388, %v343, 0
    %v396 = vsel %vm388, %v344, 0
    %v399 = vsel %vm388, %v345, 0
    %v402 = vsel %vm388, %v346, 0
    %v405 = vsel %vm388, %v347, 0
    %v408 = vsel %vm388, %v348, 0
    %v411 = vsel %vm388, %v349, 0
    %413 = vmatprep.subr.mxu0 %v351
    %414 = vmatpush1.msra.mxu0 %v350
    %415 = vmatprep.subr.mxu0 %v355
    %416 = vmatpush1.msra.mxu0 %v354
    %417 = vmatprep.subr.mxu0 %v359
    %418 = vmatpush1.msra.mxu0 %v358
    %419 = vmatprep.subr.mxu0 %v363
    %420 = vmatpush1.msra.mxu0 %v362
    %421 = vmatprep.subr.mxu0 0.0
    %422 = vmatpush1.msra.mxu0 0.0
    %423 = vmatprep.subr.mxu0 0.0
    %424 = vmatpush1.msra.mxu0 0.0
    %425 = vmatprep.subr.mxu0 0.0
    %426 = vmatpush1.msra.mxu0 0.0
    %427 = vmatprep.subr.mxu0 0.0
    %428 = vmatpush1.msra.mxu0 0.0
    %429 = vmatprep.subr.mxu0 0.0
    %430 = vmatpush1.msra.mxu0 0.0
    %431 = vmatprep.subr.mxu0 0.0
    %432 = vmatpush1.msra.mxu0 0.0
    %433 = vmatprep.subr.mxu0 0.0
    %434 = vmatpush1.msra.mxu0 0.0
    %435 = vmatprep.subr.mxu0 0.0
    %436 = vmatpush1.msra.mxu0 0.0
    %437 = vmatprep.subr.mxu0 0.0
    %438 = vmatpush1.msra.mxu0 0.0
    %439 = vmatprep.subr.mxu0 0.0
    %440 = vmatpush1.msra.mxu0 0.0
    %441 = vmatprep.subr.mxu0 0.0
    %442 = vmatpush1.msra.mxu0 0.0
    %443 = vmatprep.subr.mxu0 0.0
    %444 = vmatpush1.msra.mxu0 0.0
    %445 = vmatprep.subr.mxu0 0.0
    %446 = vmatpush1.msra.mxu0 0.0
    %447 = vmatprep.subr.mxu0 0.0
    %448 = vmatpush1.msra.mxu0 0.0
    %449 = vmatprep.subr.mxu0 0.0
    %450 = vmatpush1.msra.mxu0 0.0
    %451 = vmatprep.subr.mxu0 0.0
    %452 = vmatpush1.msra.mxu0 0.0
    %453 = vmatprep.subr.mxu0 0.0
    %454 = vmatpush1.msra.mxu0 0.0
    %455 = vmatprep.subr.mxu0 0.0
    %456 = vmatpush1.msra.mxu0 0.0
    %457 = vmatprep.subr.mxu0 0.0
    %458 = vmatpush1.msra.mxu0 0.0
    %459 = vmatprep.subr.mxu0 0.0
    %460 = vmatpush1.msra.mxu0 0.0
    %461 = vmatprep.subr.mxu0 0.0
    %462 = vmatpush1.msra.mxu0 0.0
    %463 = vmatprep.subr.mxu0 0.0
    %464 = vmatpush1.msra.mxu0 0.0
    %465 = vmatprep.subr.mxu0 0.0
    %466 = vmatpush1.msra.mxu0 0.0
    %467 = vmatprep.subr.mxu0 0.0
    %468 = vmatpush1.msra.mxu0 0.0
    %469 = vmatprep.subr.mxu0 0.0
    %470 = vmatpush1.msra.mxu0 0.0
    %471 = vmatprep.subr.mxu0 0.0
    %472 = vmatpush1.msra.mxu0 0.0
    %473 = vmatprep.subr.mxu0 0.0
    %474 = vmatpush1.msra.mxu0 0.0
    %475 = vmatprep.subr.mxu0 0.0
    %476 = vmatpush1.msra.mxu0 0.0
    %477 = vmatprep.mubr.f32.mxu0 0.0
    %478 = vmatmul.mubr.f32.gmra.mrb[0].mxu0 %v390
    %v479 = vpop.f32.mrb[0].mxu0
    %v480 = vadd.f32 %v371, %v479
    %v481 = vpop.f32.mrb[0].mxu0
    %v482 = vadd.f32 %v375, %v481
    %483 = vmatprep.mubr.f32.mxu0 0.0
    %484 = vmatmul.mubr.f32.gmra.mrb[0].mxu0 %v393
    %v485 = vpop.f32.mrb[0].mxu0
    %v486 = vadd.f32 %v371, %v485
    %v487 = vpop.f32.mrb[0].mxu0
    %v488 = vadd.f32 %v375, %v487
    %489 = vmatprep.mubr.f32.mxu0 0.0
    %490 = vmatmul.mubr.f32.gmra.mrb[0].mxu0 %v396
    %v491 = vpop.f32.mrb[0].mxu0
    %v492 = vadd.f32 %v371, %v491
    %v493 = vpop.f32.mrb[0].mxu0
    %v494 = vadd.f32 %v375, %v493
    %495 = vmatprep.mubr.f32.mxu0 0.0
    %496 = vmatmul.mubr.f32.gmra.mrb[0].mxu0 %v399
    %v497 = vpop.f32.mrb[0].mxu0
    %v498 = vadd.f32 %v371, %v497
    %v499 = vpop.f32.mrb[0].mxu0
    %v500 = vadd.f32 %v375, %v499
    %501 = vmatprep.mubr.f32.mxu0 0.0
    %502 = vmatmul.mubr.f32.gmra.mrb[0].mxu0 %v402
    %v503 = vpop.f32.mrb[0].mxu0
    %v504 = vadd.f32 %v371, %v503
    %v505 = vpop.f32.mrb[0].mxu0
    %v506 = vadd.f32 %v375, %v505
    %507 = vmatprep.mubr.f32.mxu0 0.0
    %508 = vmatmul.mubr.f32.gmra.mrb[0].mxu0 %v405
    %v509 = vpop.f32.mrb[0].mxu0
    %v510 = vadd.f32 %v371, %v509
    %v511 = vpop.f32.mrb[0].mxu0
    %v512 = vadd.f32 %v375, %v511
    %513 = vmatprep.mubr.f32.mxu0 0.0
    %514 = vmatmul.mubr.f32.gmra.mrb[0].mxu0 %v408
    %v515 = vpop.f32.mrb[0].mxu0
    %v516 = vadd.f32 %v371, %v515
    %v517 = vpop.f32.mrb[0].mxu0
    %v518 = vadd.f32 %v375, %v517
    %519 = vmatprep.mubr.f32.mxu0 0.0
    %520 = vmatmul.mubr.f32.gmra.mrb[0].mxu0 %v411
    %v521 = vpop.f32.mrb[0].mxu0
    %v522 = vadd.f32 %v371, %v521
    %v523 = vpop.f32.mrb[0].mxu0
    %v524 = vadd.f32 %v375, %v523
    %525 = vdwg.mxu0
    %526 = vmatprep.subr.mxu0 %v353
    %527 = vmatpush1.msra.mxu0 %v352
    %528 = vmatprep.subr.mxu0 %v357
    %529 = vmatpush1.msra.mxu0 %v356
    %530 = vmatprep.subr.mxu0 %v361
    %531 = vmatpush1.msra.mxu0 %v360
    %532 = vmatprep.subr.mxu0 %v365
    %533 = vmatpush1.msra.mxu0 %v364
    %534 = vmatprep.subr.mxu0 0.0
    %535 = vmatpush1.msra.mxu0 0.0
    %536 = vmatprep.subr.mxu0 0.0
    %537 = vmatpush1.msra.mxu0 0.0
    %538 = vmatprep.subr.mxu0 0.0
    %539 = vmatpush1.msra.mxu0 0.0
    %540 = vmatprep.subr.mxu0 0.0
    %541 = vmatpush1.msra.mxu0 0.0
    %542 = vmatprep.subr.mxu0 0.0
    %543 = vmatpush1.msra.mxu0 0.0
    %544 = vmatprep.subr.mxu0 0.0
    %545 = vmatpush1.msra.mxu0 0.0
    %546 = vmatprep.subr.mxu0 0.0
    %547 = vmatpush1.msra.mxu0 0.0
    %548 = vmatprep.subr.mxu0 0.0
    %549 = vmatpush1.msra.mxu0 0.0
    %550 = vmatprep.subr.mxu0 0.0
    %551 = vmatpush1.msra.mxu0 0.0
    %552 = vmatprep.subr.mxu0 0.0
    %553 = vmatpush1.msra.mxu0 0.0
    %554 = vmatprep.subr.mxu0 0.0
    %555 = vmatpush1.msra.mxu0 0.0
    %556 = vmatprep.subr.mxu0 0.0
    %557 = vmatpush1.msra.mxu0 0.0
    %558 = vmatprep.subr.mxu0 0.0
    %559 = vmatpush1.msra.mxu0 0.0
    %560 = vmatprep.subr.mxu0 0.0
    %561 = vmatpush1.msra.mxu0 0.0
    %562 = vmatprep.subr.mxu0 0.0
    %563 = vmatpush1.msra.mxu0 0.0
    %564 = vmatprep.subr.mxu0 0.0
    %565 = vmatpush1.msra.mxu0 0.0
    %566 = vmatprep.subr.mxu0 0.0
    %567 = vmatpush1.msra.mxu0 0.0
    %568 = vmatprep.subr.mxu0 0.0
    %569 = vmatpush1.msra.mxu0 0.0
    %570 = vmatprep.subr.mxu0 0.0
    %571 = vmatpush1.msra.mxu0 0.0
    %572 = vmatprep.subr.mxu0 0.0
    %573 = vmatpush1.msra.mxu0 0.0
    %574 = vmatprep.subr.mxu0 0.0
    %575 = vmatpush1.msra.mxu0 0.0
    %576 = vmatprep.subr.mxu0 0.0
    %577 = vmatpush1.msra.mxu0 0.0
    %578 = vmatprep.subr.mxu0 0.0
    %579 = vmatpush1.msra.mxu0 0.0
    %580 = vmatprep.subr.mxu0 0.0
    %581 = vmatpush1.msra.mxu0 0.0
    %582 = vmatprep.subr.mxu0 0.0
    %583 = vmatpush1.msra.mxu0 0.0
    %584 = vmatprep.subr.mxu0 0.0
    %585 = vmatpush1.msra.mxu0 0.0
    %586 = vmatprep.subr.mxu0 0.0
    %587 = vmatpush1.msra.mxu0 0.0
    %588 = vmatprep.subr.mxu0 0.0
    %589 = vmatpush1.msra.mxu0 0.0
    %590 = vmatprep.mubr.f32.mxu0 0.0
    %591 = vmatmul.mubr.f32.gmra.mrb[0].mxu0 %v390
    %v592 = vpop.f32.mrb[0].mxu0
    %v593 = vadd.f32 %v379, %v592
    %v594 = vpop.f32.mrb[0].mxu0
    %v595 = vadd.f32 %v383, %v594
    %596 = vmatprep.mubr.f32.mxu0 0.0
    %597 = vmatmul.mubr.f32.gmra.mrb[0].mxu0 %v393
    %v598 = vpop.f32.mrb[0].mxu0
    %v599 = vadd.f32 %v379, %v598
    %v600 = vpop.f32.mrb[0].mxu0
    %v601 = vadd.f32 %v383, %v600
    %602 = vmatprep.mubr.f32.mxu0 0.0
    %603 = vmatmul.mubr.f32.gmra.mrb[0].mxu0 %v396
    %v604 = vpop.f32.mrb[0].mxu0
    %v605 = vadd.f32 %v379, %v604
    %v606 = vpop.f32.mrb[0].mxu0
    %v607 = vadd.f32 %v383, %v606
    %608 = vmatprep.mubr.f32.mxu0 0.0
    %609 = vmatmul.mubr.f32.gmra.mrb[0].mxu0 %v399
    %v610 = vpop.f32.mrb[0].mxu0
    %v611 = vadd.f32 %v379, %v610
    %v612 = vpop.f32.mrb[0].mxu0
    %v613 = vadd.f32 %v383, %v612
    %614 = vmatprep.mubr.f32.mxu0 0.0
    %615 = vmatmul.mubr.f32.gmra.mrb[0].mxu0 %v402
    %v616 = vpop.f32.mrb[0].mxu0
    %v617 = vadd.f32 %v379, %v616
    %v618 = vpop.f32.mrb[0].mxu0
    %v619 = vadd.f32 %v383, %v618
    %620 = vmatprep.mubr.f32.mxu0 0.0
    %621 = vmatmul.mubr.f32.gmra.mrb[0].mxu0 %v405
    %v622 = vpop.f32.mrb[0].mxu0
    %v623 = vadd.f32 %v379, %v622
    %v624 = vpop.f32.mrb[0].mxu0
    %v625 = vadd.f32 %v383, %v624
    %626 = vmatprep.mubr.f32.mxu0 0.0
    %627 = vmatmul.mubr.f32.gmra.mrb[0].mxu0 %v408
    %v628 = vpop.f32.mrb[0].mxu0
    %v629 = vadd.f32 %v379, %v628
    %v630 = vpop.f32.mrb[0].mxu0
    %v631 = vadd.f32 %v383, %v630
    %632 = vmatprep.mubr.f32.mxu0 0.0
    %633 = vmatmul.mubr.f32.gmra.mrb[0].mxu0 %v411
    %v634 = vpop.f32.mrb[0].mxu0
    %v635 = vadd.f32 %v379, %v634
    %v636 = vpop.f32.mrb[0].mxu0
    %v637 = vadd.f32 %v383, %v636
    %638 = vdwg.mxu0
    %639 = vst [vmem:[#allocation2] sm:$0xff] %v480
    %640 = vst [vmem:[#allocation2 + $0x8] sm:$0xff] %v482
    %641 = vst [vmem:[#allocation2 + $0x10] sm:$0xff] %v593
    %642 = vst [vmem:[#allocation2 + $0x18] sm:$0xff] %v595
    %643 = vst [vmem:[#allocation2 + $0x20] sm:$0xff] %v486
    %644 = vst [vmem:[#allocation2 + $0x28] sm:$0xff] %v488
    %645 = vst [vmem:[#allocation2 + $0x30] sm:$0xff] %v599
    %646 = vst [vmem:[#allocation2 + $0x38] sm:$0xff] %v601
    %647 = vst [vmem:[#allocation2 + $0x40] sm:$0xff] %v492
    %648 = vst [vmem:[#allocation2 + $0x48] sm:$0xff] %v494
    %649 = vst [vmem:[#allocation2 + $0x50] sm:$0xff] %v605
    %650 = vst [vmem:[#allocation2 + $0x58] sm:$0xff] %v607
    %651 = vst [vmem:[#allocation2 + $0x60] sm:$0xff] %v498
    %652 = vst [vmem:[#allocation2 + $0x68] sm:$0xff] %v500
    %653 = vst [vmem:[#allocation2 + $0x70] sm:$0xff] %v611
    %654 = vst [vmem:[#allocation2 + $0x78] sm:$0xff] %v613
    %655 = vst [vmem:[#allocation2 + $0x80] sm:$0xff] %v504
    %656 = vst [vmem:[#allocation2 + $0x88] sm:$0xff] %v506
    %657 = vst [vmem:[#allocation2 + $0x90] sm:$0xff] %v617
    %658 = vst [vmem:[#allocation2 + $0x98] sm:$0xff] %v619
    %659 = vst [vmem:[#allocation2 + $0xa0] sm:$0xff] %v510
    %660 = vst [vmem:[#allocation2 + $0xa8] sm:$0xff] %v512
    %661 = vst [vmem:[#allocation2 + $0xb0] sm:$0xff] %v623
    %662 = vst [vmem:[#allocation2 + $0xb8] sm:$0xff] %v625
    %663 = vst [vmem:[#allocation2 + $0xc0] sm:$0xff] %v516
    %664 = vst [vmem:[#allocation2 + $0xc8] sm:$0xff] %v518
    %665 = vst [vmem:[#allocation2 + $0xd0] sm:$0xff] %v629
    %666 = vst [vmem:[#allocation2 + $0xd8] sm:$0xff] %v631
    %667 = vst [vmem:[#allocation2 + $0xe0] sm:$0xff] %v522
    %668 = vst [vmem:[#allocation2 + $0xe8] sm:$0xff] %v524
    %669 = vst [vmem:[#allocation2 + $0xf0] sm:$0xff] %v635
    %670 = vst [vmem:[#allocation2 + $0xf8] sm:$0xff] %v637
    %v671 = vld [vmem:[%s2] sm:$0xff]
    %v672 = vld [vmem:[%s2 + $0x8] sm:$0xff]
    %v673 = vld [vmem:[%s2 + $0x10] sm:$0xff]
    %v674 = vld [vmem:[%s2 + $0x18] sm:$0xff]
    %v675 = vld [vmem:[%s2 + $0x20] sm:$0xff]
    %v676 = vld [vmem:[%s2 + $0x28] sm:$0xff]
    %v677 = vld [vmem:[%s2 + $0x30] sm:$0xff]
    %v678 = vld [vmem:[%s2 + $0x38] sm:$0xff]
    %v679 = vld [vmem:[%s2 + $0x40] sm:$0xff]
    %v680 = vld [vmem:[%s2 + $0x48] sm:$0xff]
    %v681 = vld [vmem:[%s2 + $0x50] sm:$0xff]
    %v682 = vld [vmem:[%s2 + $0x58] sm:$0xff]
    %v683 = vld [vmem:[%s2 + $0x60] sm:$0xff]
    %v684 = vld [vmem:[%s2 + $0x68] sm:$0xff]
    %v685 = vld [vmem:[%s2 + $0x70] sm:$0xff]
    %v686 = vld [vmem:[%s2 + $0x78] sm:$0xff]
    %v687 = vld [vmem:[%s2 + $0x80] sm:$0xff]
    %v688 = vld [vmem:[%s2 + $0x88] sm:$0xff]
    %v689 = vld [vmem:[%s2 + $0x90] sm:$0xff]
    %v690 = vld [vmem:[%s2 + $0x98] sm:$0xff]
    %v691 = vld [vmem:[%s2 + $0xa0] sm:$0xff]
    %v692 = vld [vmem:[%s2 + $0xa8] sm:$0xff]
    %v693 = vld [vmem:[%s2 + $0xb0] sm:$0xff]
    %v694 = vld [vmem:[%s2 + $0xb8] sm:$0xff]
    %v695 = vld [vmem:[%s2 + $0xc0] sm:$0xff]
    %v696 = vld [vmem:[%s2 + $0xc8] sm:$0xff]
    %v697 = vld [vmem:[%s2 + $0xd0] sm:$0xff]
    %v698 = vld [vmem:[%s2 + $0xd8] sm:$0xff]
    %v699 = vld [vmem:[%s2 + $0xe0] sm:$0xff]
    %v700 = vld [vmem:[%s2 + $0xe8] sm:$0xff]
    %v701 = vld [vmem:[%s2 + $0xf0] sm:$0xff]
    %v702 = vld [vmem:[%s2 + $0xf8] sm:$0xff]
    %v703 = vld [vmem:[%s2 + $0x100] sm:$0xff]
    %v704 = vld [vmem:[%s2 + $0x108] sm:$0xff]
    %v705 = vld [vmem:[%s2 + $0x110] sm:$0xff]
    %v706 = vld [vmem:[%s2 + $0x118] sm:$0xff]
    %v707 = vld [vmem:[%s2 + $0x120] sm:$0xff]
    %v708 = vld [vmem:[%s2 + $0x128] sm:$0xff]
    %v709 = vld [vmem:[%s2 + $0x130] sm:$0xff]
    %v710 = vld [vmem:[%s2 + $0x138] sm:$0xff]
    %v711 = vld [vmem:[%s2 + $0x140] sm:$0xff]
    %v712 = vld [vmem:[%s2 + $0x148] sm:$0xff]
    %v713 = vld [vmem:[%s2 + $0x150] sm:$0xff]
    %v714 = vld [vmem:[%s2 + $0x158] sm:$0xff]
    %v715 = vld [vmem:[%s2 + $0x160] sm:$0xff]
    %v716 = vld [vmem:[%s2 + $0x168] sm:$0xff]
    %v717 = vld [vmem:[%s2 + $0x170] sm:$0xff]
    %v718 = vld [vmem:[%s2 + $0x178] sm:$0xff]
    %v719 = vld [vmem:[%s2 + $0x180] sm:$0xff]
    %v720 = vld [vmem:[%s2 + $0x188] sm:$0xff]
    %v721 = vld [vmem:[%s2 + $0x190] sm:$0xff]
    %v722 = vld [vmem:[%s2 + $0x198] sm:$0xff]
    %v723 = vld [vmem:[%s2 + $0x1a0] sm:$0xff]
    %v724 = vld [vmem:[%s2 + $0x1a8] sm:$0xff]
    %v725 = vld [vmem:[%s2 + $0x1b0] sm:$0xff]
    %v726 = vld [vmem:[%s2 + $0x1b8] sm:$0xff]
    %v727 = vld [vmem:[%s2 + $0x1c0] sm:$0xff]
    %v728 = vld [vmem:[%s2 + $0x1c8] sm:$0xff]
    %v729 = vld [vmem:[%s2 + $0x1d0] sm:$0xff]
    %v730 = vld [vmem:[%s2 + $0x1d8] sm:$0xff]
    %v731 = vld [vmem:[%s2 + $0x1e0] sm:$0xff]
    %v732 = vld [vmem:[%s2 + $0x1e8] sm:$0xff]
    %v733 = vld [vmem:[%s2 + $0x1f0] sm:$0xff]
    %v734 = vld [vmem:[%s2 + $0x1f8] sm:$0xff]
    %v735 = vld [vmem:[#allocation2] sm:$0xff]
    %v736 = vld [vmem:[#allocation2 + $0x8] sm:$0xff]
    %v737 = vld [vmem:[#allocation2 + $0x10] sm:$0xff]
    %v738 = vld [vmem:[#allocation2 + $0x18] sm:$0xff]
    %739 = vmatprep.subr.mxu0 %v672
    %740 = vmatpush1.msra.mxu0 %v671
    %741 = vmatprep.subr.mxu0 %v676
    %742 = vmatpush1.msra.mxu0 %v675
    %743 = vmatprep.subr.mxu0 %v680
    %744 = vmatpush1.msra.mxu0 %v679
    %745 = vmatprep.subr.mxu0 %v684
    %746 = vmatpush1.msra.mxu0 %v683
    %747 = vmatprep.subr.mxu0 %v688
    %748 = vmatpush1.msra.mxu0 %v687
    %749 = vmatprep.subr.mxu0 %v692
    %750 = vmatpush1.msra.mxu0 %v691
    %751 = vmatprep.subr.mxu0 %v696
    %752 = vmatpush1.msra.mxu0 %v695
    %753 = vmatprep.subr.mxu0 %v700
    %754 = vmatpush1.msra.mxu0 %v699
    %755 = vmatprep.subr.mxu0 %v704
    %756 = vmatpush1.msra.mxu0 %v703
    %757 = vmatprep.subr.mxu0 %v708
    %758 = vmatpush1.msra.mxu0 %v707
    %759 = vmatprep.subr.mxu0 %v712
    %760 = vmatpush1.msra.mxu0 %v711
    %761 = vmatprep.subr.mxu0 %v716
    %762 = vmatpush1.msra.mxu0 %v715
    %763 = vmatprep.subr.mxu0 %v720
    %764 = vmatpush1.msra.mxu0 %v719
    %765 = vmatprep.subr.mxu0 %v724
    %766 = vmatpush1.msra.mxu0 %v723
    %767 = vmatprep.subr.mxu0 %v728
    %768 = vmatpush1.msra.mxu0 %v727
    %769 = vmatprep.subr.mxu0 %v732
    %770 = vmatpush1.msra.mxu0 %v731
    %771 = vmatprep.subr.mxu0 0.0
    %772 = vmatpush1.msra.mxu0 0.0
    %773 = vmatprep.subr.mxu0 0.0
    %774 = vmatpush1.msra.mxu0 0.0
    %775 = vmatprep.subr.mxu0 0.0
    %776 = vmatpush1.msra.mxu0 0.0
    %777 = vmatprep.subr.mxu0 0.0
    %778 = vmatpush1.msra.mxu0 0.0
    %779 = vmatprep.subr.mxu0 0.0
    %780 = vmatpush1.msra.mxu0 0.0
    %781 = vmatprep.subr.mxu0 0.0
    %782 = vmatpush1.msra.mxu0 0.0
    %783 = vmatprep.subr.mxu0 0.0
    %784 = vmatpush1.msra.mxu0 0.0
    %785 = vmatprep.subr.mxu0 0.0
    %786 = vmatpush1.msra.mxu0 0.0
    %787 = vmatprep.subr.mxu0 0.0
    %788 = vmatpush1.msra.mxu0 0.0
    %789 = vmatprep.subr.mxu0 0.0
    %790 = vmatpush1.msra.mxu0 0.0
    %791 = vmatprep.subr.mxu0 0.0
    %792 = vmatpush1.msra.mxu0 0.0
    %793 = vmatprep.subr.mxu0 0.0
    %794 = vmatpush1.msra.mxu0 0.0
    %795 = vmatprep.subr.mxu0 0.0
    %796 = vmatpush1.msra.mxu0 0.0
    %797 = vmatprep.subr.mxu0 0.0
    %798 = vmatpush1.msra.mxu0 0.0
    %799 = vmatprep.subr.mxu0 0.0
    %800 = vmatpush1.msra.mxu0 0.0
    %801 = vmatprep.subr.mxu0 0.0
    %802 = vmatpush1.msra.mxu0 0.0
    %803 = vmatprep.mubr.f32.mxu0 0.0
    %804 = vmatmul.mubr.f32.gmra.mrb[0].mxu0 0.0
    %v805 = vpop.f32.mrb[0].mxu0
    %v806 = vadd.f32 0.0, %v805
    %v807 = vpop.f32.mrb[0].mxu0
    %v808 = vadd.f32 0.0, %v807
    %809 = vdwg.mxu0
    %810 = vmatprep.subr.mxu0 %v674
    %811 = vmatpush1.msra.mxu0 %v673
    %812 = vmatprep.subr.mxu0 %v678
    %813 = vmatpush1.msra.mxu0 %v677
    %814 = vmatprep.subr.mxu0 %v682
    %815 = vmatpush1.msra.mxu0 %v681
    %816 = vmatprep.subr.mxu0 %v686
    %817 = vmatpush1.msra.mxu0 %v685
    %818 = vmatprep.subr.mxu0 %v690
    %819 = vmatpush1.msra.mxu0 %v689
    %820 = vmatprep.subr.mxu0 %v694
    %821 = vmatpush1.msra.mxu0 %v693
    %822 = vmatprep.subr.mxu0 %v698
    %823 = vmatpush1.msra.mxu0 %v697
    %824 = vmatprep.subr.mxu0 %v702
    %825 = vmatpush1.msra.mxu0 %v701
    %826 = vmatprep.subr.mxu0 %v706
    %827 = vmatpush1.msra.mxu0 %v705
    %828 = vmatprep.subr.mxu0 %v710
    %829 = vmatpush1.msra.mxu0 %v709
    %830 = vmatprep.subr.mxu0 %v714
    %831 = vmatpush1.msra.mxu0 %v713
    %832 = vmatprep.subr.mxu0 %v718
    %833 = vmatpush1.msra.mxu0 %v717
    %834 = vmatprep.subr.mxu0 %v722
    %835 = vmatpush1.msra.mxu0 %v721
    %836 = vmatprep.subr.mxu0 %v726
    %837 = vmatpush1.msra.mxu0 %v725
    %838 = vmatprep.subr.mxu0 %v730
    %839 = vmatpush1.msra.mxu0 %v729
    %840 = vmatprep.subr.mxu0 %v734
    %841 = vmatpush1.msra.mxu0 %v733
    %842 = vmatprep.subr.mxu0 0.0
    %843 = vmatpush1.msra.mxu0 0.0
    %844 = vmatprep.subr.mxu0 0.0
    %845 = vmatpush1.msra.mxu0 0.0
    %846 = vmatprep.subr.mxu0 0.0
    %847 = vmatpush1.msra.mxu0 0.0
    %848 = vmatprep.subr.mxu0 0.0
    %849 = vmatpush1.msra.mxu0 0.0
    %850 = vmatprep.subr.mxu0 0.0
    %851 = vmatpush1.msra.mxu0 0.0
    %852 = vmatprep.subr.mxu0 0.0
    %853 = vmatpush1.msra.mxu0 0.0
    %854 = vmatprep.subr.mxu0 0.0
    %855 = vmatpush1.msra.mxu0 0.0
    %856 = vmatprep.subr.mxu0 0.0
    %857 = vmatpush1.msra.mxu0 0.0
    %858 = vmatprep.subr.mxu0 0.0
    %859 = vmatpush1.msra.mxu0 0.0
    %860 = vmatprep.subr.mxu0 0.0
    %861 = vmatpush1.msra.mxu0 0.0
    %862 = vmatprep.subr.mxu0 0.0
    %863 = vmatpush1.msra.mxu0 0.0
    %864 = vmatprep.subr.mxu0 0.0
    %865 = vmatpush1.msra.mxu0 0.0
    %866 = vmatprep.subr.mxu0 0.0
    %867 = vmatpush1.msra.mxu0 0.0
    %868 = vmatprep.subr.mxu0 0.0
    %869 = vmatpush1.msra.mxu0 0.0
    %870 = vmatprep.subr.mxu0 0.0
    %871 = vmatpush1.msra.mxu0 0.0
    %872 = vmatprep.subr.mxu0 0.0
    %873 = vmatpush1.msra.mxu0 0.0
    %874 = vmatprep.mubr.f32.mxu0 0.0
    %875 = vmatmul.mubr.f32.gmra.mrb[0].mxu0 0.0
    %v876 = vpop.f32.mrb[0].mxu0
    %v877 = vadd.f32 0.0, %v876
    %v878 = vpop.f32.mrb[0].mxu0
    %v879 = vadd.f32 0.0, %v878
    %880 = vdwg.mxu0
    %v881 = vadd.f32 %v735, %v806
    %v882 = vadd.f32 %v736, %v808
    %v883 = vadd.f32 %v737, %v877
    %v884 = vadd.f32 %v738, %v879
    %v885 = vxor.u32 %v881, 2147483648
    %v886 = vmul.f32 %v885, 1.442695
    %v887 = vpow.pop %v886
    %v888 = vadd.f32 %v887, 1.0
    %v889 = vrcp.pop %v888
    %v890 = vmul.f32 1.0, %v889
    %v891 = vxor.u32 %v882, 2147483648
    %v892 = vmul.f32 %v891, 1.442695
    %v893 = vpow.pop %v892
    %v894 = vadd.f32 %v893, 1.0
    %v895 = vrcp.pop %v894
    %v896 = vmul.f32 1.0, %v895
    %v897 = vtanh.pop %v883
    %v898 = vxor.u32 %v884, 2147483648
    %v899 = vmul.f32 %v898, 1.442695
    %v900 = vpow.pop %v899
    %v901 = vadd.f32 %v900, 1.0
    %v902 = vrcp.pop %v901
    %v903 = vmul.f32 1.0, %v902
    %v904 = vmul.f32 %v896, 0.0
    %v905 = vmul.f32 %v890, %v897
    %v906 = vadd.f32 %v904, %v905
    %v907 = vtanh.pop %v906
    %v908 = vmul.f32 %v903, %v907
    %909 = vst [vmem:[#allocation3] sm:$0xff] %v908
    %v910 = vld [vmem:[#allocation2 + $0x20] sm:$0xff]
    %v911 = vld [vmem:[#allocation2 + $0x28] sm:$0xff]
    %v912 = vld [vmem:[#allocation2 + $0x30] sm:$0xff]
    %v913 = vld [vmem:[#allocation2 + $0x38] sm:$0xff]
    %914 = vmatprep.subr.mxu0 %v672
    %915 = vmatpush1.msra.mxu0 %v671
    %916 = vmatprep.subr.mxu0 %v676
    %917 = vmatpush1.msra.mxu0 %v675
    %918 = vmatprep.subr.mxu0 %v680
    %919 = vmatpush1.msra.mxu0 %v679
    %920 = vmatprep.subr.mxu0 %v684
    %921 = vmatpush1.msra.mxu0 %v683
    %922 = vmatprep.subr.mxu0 %v688
    %923 = vmatpush1.msra.mxu0 %v687
    %924 = vmatprep.subr.mxu0 %v692
    %925 = vmatpush1.msra.mxu0 %v691
    %926 = vmatprep.subr.mxu0 %v696
    %927 = vmatpush1.msra.mxu0 %v695
    %928 = vmatprep.subr.mxu0 %v700
    %929 = vmatpush1.msra.mxu0 %v699
    %930 = vmatprep.subr.mxu0 %v704
    %931 = vmatpush1.msra.mxu0 %v703
    %932 = vmatprep.subr.mxu0 %v708
    %933 = vmatpush1.msra.mxu0 %v707
    %934 = vmatprep.subr.mxu0 %v712
    %935 = vmatpush1.msra.mxu0 %v711
    %936 = vmatprep.subr.mxu0 %v716
    %937 = vmatpush1.msra.mxu0 %v715
    %938 = vmatprep.subr.mxu0 %v720
    %939 = vmatpush1.msra.mxu0 %v719
    %940 = vmatprep.subr.mxu0 %v724
    %941 = vmatpush1.msra.mxu0 %v723
    %942 = vmatprep.subr.mxu0 %v728
    %943 = vmatpush1.msra.mxu0 %v727
    %944 = vmatprep.subr.mxu0 %v732
    %945 = vmatpush1.msra.mxu0 %v731
    %946 = vmatprep.subr.mxu0 0.0
    %947 = vmatpush1.msra.mxu0 0.0
    %948 = vmatprep.subr.mxu0 0.0
    %949 = vmatpush1.msra.mxu0 0.0
    %950 = vmatprep.subr.mxu0 0.0
    %951 = vmatpush1.msra.mxu0 0.0
    %952 = vmatprep.subr.mxu0 0.0
    %953 = vmatpush1.msra.mxu0 0.0
    %954 = vmatprep.subr.mxu0 0.0
    %955 = vmatpush1.msra.mxu0 0.0
    %956 = vmatprep.subr.mxu0 0.0
    %957 = vmatpush1.msra.mxu0 0.0
    %958 = vmatprep.subr.mxu0 0.0
    %959 = vmatpush1.msra.mxu0 0.0
    %960 = vmatprep.subr.mxu0 0.0
    %961 = vmatpush1.msra.mxu0 0.0
    %962 = vmatprep.subr.mxu0 0.0
    %963 = vmatpush1.msra.mxu0 0.0
    %964 = vmatprep.subr.mxu0 0.0
    %965 = vmatpush1.msra.mxu0 0.0
    %966 = vmatprep.subr.mxu0 0.0
    %967 = vmatpush1.msra.mxu0 0.0
    %968 = vmatprep.subr.mxu0 0.0
    %969 = vmatpush1.msra.mxu0 0.0
    %970 = vmatprep.subr.mxu0 0.0
    %971 = vmatpush1.msra.mxu0 0.0
    %972 = vmatprep.subr.mxu0 0.0
    %973 = vmatpush1.msra.mxu0 0.0
    %974 = vmatprep.subr.mxu0 0.0
    %975 = vmatpush1.msra.mxu0 0.0
    %976 = vmatprep.subr.mxu0 0.0
    %977 = vmatpush1.msra.mxu0 0.0
    %978 = vmatprep.mubr.f32.mxu0 0.0
    %979 = vmatmul.mubr.f32.gmra.mrb[0].mxu0 %v908
    %v980 = vpop.f32.mrb[0].mxu0
    %v981 = vadd.f32 0.0, %v980
    %v982 = vpop.f32.mrb[0].mxu0
    %v983 = vadd.f32 0.0, %v982
    %984 = vdwg.mxu0
    %985 = vmatprep.subr.mxu0 %v674
    %986 = vmatpush1.msra.mxu0 %v673
    %987 = vmatprep.subr.mxu0 %v678
    %988 = vmatpush1.msra.mxu0 %v677
    %989 = vmatprep.subr.mxu0 %v682
    %990 = vmatpush1.msra.mxu0 %v681
    %991 = vmatprep.subr.mxu0 %v686
    %992 = vmatpush1.msra.mxu0 %v685
    %993 = vmatprep.subr.mxu0 %v690
    %994 = vmatpush1.msra.mxu0 %v689
    %995 = vmatprep.subr.mxu0 %v694
    %996 = vmatpush1.msra.mxu0 %v693
    %997 = vmatprep.subr.mxu0 %v698
    %998 = vmatpush1.msra.mxu0 %v697
    %999 = vmatprep.subr.mxu0 %v702
    %1000 = vmatpush1.msra.mxu0 %v701
    %1001 = vmatprep.subr.mxu0 %v706
    %1002 = vmatpush1.msra.mxu0 %v705
    %1003 = vmatprep.subr.mxu0 %v710
    %1004 = vmatpush1.msra.mxu0 %v709
    %1005 = vmatprep.subr.mxu0 %v714
    %1006 = vmatpush1.msra.mxu0 %v713
    %1007 = vmatprep.subr.mxu0 %v718
    %1008 = vmatpush1.msra.mxu0 %v717
    %1009 = vmatprep.subr.mxu0 %v722
    %1010 = vmatpush1.msra.mxu0 %v721
    %1011 = vmatprep.subr.mxu0 %v726
    %1012 = vmatpush1.msra.mxu0 %v725
    %1013 = vmatprep.subr.mxu0 %v730
    %1014 = vmatpush1.msra.mxu0 %v729
    %1015 = vmatprep.subr.mxu0 %v734
    %1016 = vmatpush1.msra.mxu0 %v733
    %1017 = vmatprep.subr.mxu0 0.0
    %1018 = vmatpush1.msra.mxu0 0.0
    %1019 = vmatprep.subr.mxu0 0.0
    %1020 = vmatpush1.msra.mxu0 0.0
    %1021 = vmatprep.subr.mxu0 0.0
    %1022 = vmatpush1.msra.mxu0 0.0
    %1023 = vmatprep.subr.mxu0 0.0
    %1024 = vmatpush1.msra.mxu0 0.0
    %1025 = vmatprep.subr.mxu0 0.0
    %1026 = vmatpush1.msra.mxu0 0.0
    %1027 = vmatprep.subr.mxu0 0.0
    %1028 = vmatpush1.msra.mxu0 0.0
    %1029 = vmatprep.subr.mxu0 0.0
    %1030 = vmatpush1.msra.mxu0 0.0
    %1031 = vmatprep.subr.mxu0 0.0
    %1032 = vmatpush1.msra.mxu0 0.0
    %1033 = vmatprep.subr.mxu0 0.0
    %1034 = vmatpush1.msra.mxu0 0.0
    %1035 = vmatprep.subr.mxu0 0.0
    %1036 = vmatpush1.msra.mxu0 0.0
    %1037 = vmatprep.subr.mxu0 0.0
    %1038 = vmatpush1.msra.mxu0 0.0
    %1039 = vmatprep.subr.mxu0 0.0
    %1040 = vmatpush1.msra.mxu0 0.0
    %1041 = vmatprep.subr.mxu0 0.0
    %1042 = vmatpush1.msra.mxu0 0.0
    %1043 = vmatprep.subr.mxu0 0.0
    %1044 = vmatpush1.msra.mxu0 0.0
    %1045 = vmatprep.subr.mxu0 0.0
    %1046 = vmatpush1.msra.mxu0 0.0
    %1047 = vmatprep.subr.mxu0 0.0
    %1048 = vmatpush1.msra.mxu0 0.0
    %1049 = vmatprep.mubr.f32.mxu0 0.0
    %1050 = vmatmul.mubr.f32.gmra.mrb[0].mxu0 %v908
    %v1051 = vpop.f32.mrb[0].mxu0
    %v1052 = vadd.f32 0.0, %v1051
    %v1053 = vpop.f32.mrb[0].mxu0
    %v1054 = vadd.f32 0.0, %v1053
    %1055 = vdwg.mxu0
    %v1056 = vadd.f32 %v910, %v981
    %v1057 = vadd.f32 %v911, %v983
    %v1058 = vadd.f32 %v912, %v1052
    %v1059 = vadd.f32 %v913, %v1054
    %v1060 = vxor.u32 %v1056, 2147483648
    %v1061 = vmul.f32 %v1060, 1.442695
    %v1062 = vpow.pop %v1061
    %v1063 = vadd.f32 %v1062, 1.0
    %v1064 = vrcp.pop %v1063
    %v1065 = vmul.f32 1.0, %v1064
    %v1066 = vxor.u32 %v1057, 2147483648
    %v1067 = vmul.f32 %v1066, 1.442695
    %v1068 = vpow.pop %v1067
    %v1069 = vadd.f32 %v1068, 1.0
    %v1070 = vrcp.pop %v1069
    %v1071 = vmul.f32 1.0, %v1070
    %v1072 = vtanh.pop %v1058
    %v1073 = vxor.u32 %v1059, 2147483648
    %v1074 = vmul.f32 %v1073, 1.442695
    %v1075 = vpow.pop %v1074
    %v1076 = vadd.f32 %v1075, 1.0
    %v1077 = vrcp.pop %v1076
    %v1078 = vmul.f32 1.0, %v1077
    %v1079 = vmul.f32 %v1071, %v906
    %v1080 = vmul.f32 %v1065, %v1072
    %v1081 = vadd.f32 %v1079, %v1080
    %v1082 = vtanh.pop %v1081
    %v1083 = vmul.f32 %v1078, %v1082
    %1084 = vst [vmem:[#allocation3 + $0x8] sm:$0xff] %v1083
    %v1085 = vld [vmem:[#allocation2 + $0x40] sm:$0xff]
    %v1086 = vld [vmem:[#allocation2 + $0x48] sm:$0xff]
    %v1087 = vld [vmem:[#allocation2 + $0x50] sm:$0xff]
    %v1088 = vld [vmem:[#allocation2 + $0x58] sm:$0xff]
    %1089 = vmatprep.subr.mxu0 %v672
    %1090 = vmatpush1.msra.mxu0 %v671
    %1091 = vmatprep.subr.mxu0 %v676
    %1092 = vmatpush1.msra.mxu0 %v675
    %1093 = vmatprep.subr.mxu0 %v680
    %1094 = vmatpush1.msra.mxu0 %v679
    %1095 = vmatprep.subr.mxu0 %v684
    %1096 = vmatpush1.msra.mxu0 %v683
    %1097 = vmatprep.subr.mxu0 %v688
    %1098 = vmatpush1.msra.mxu0 %v687
    %1099 = vmatprep.subr.mxu0 %v692
    %1100 = vmatpush1.msra.mxu0 %v691
    %1101 = vmatprep.subr.mxu0 %v696
    %1102 = vmatpush1.msra.mxu0 %v695
    %1103 = vmatprep.subr.mxu0 %v700
    %1104 = vmatpush1.msra.mxu0 %v699
    %1105 = vmatprep.subr.mxu0 %v704
    %1106 = vmatpush1.msra.mxu0 %v703
    %1107 = vmatprep.subr.mxu0 %v708
    %1108 = vmatpush1.msra.mxu0 %v707
    %1109 = vmatprep.subr.mxu0 %v712
    %1110 = vmatpush1.msra.mxu0 %v711
    %1111 = vmatprep.subr.mxu0 %v716
    %1112 = vmatpush1.msra.mxu0 %v715
    %1113 = vmatprep.subr.mxu0 %v720
    %1114 = vmatpush1.msra.mxu0 %v719
    %1115 = vmatprep.subr.mxu0 %v724
    %1116 = vmatpush1.msra.mxu0 %v723
    %1117 = vmatprep.subr.mxu0 %v728
    %1118 = vmatpush1.msra.mxu0 %v727
    %1119 = vmatprep.subr.mxu0 %v732
    %1120 = vmatpush1.msra.mxu0 %v731
    %1121 = vmatprep.subr.mxu0 0.0
    %1122 = vmatpush1.msra.mxu0 0.0
    %1123 = vmatprep.subr.mxu0 0.0
    %1124 = vmatpush1.msra.mxu0 0.0
    %1125 = vmatprep.subr.mxu0 0.0
    %1126 = vmatpush1.msra.mxu0 0.0
    %1127 = vmatprep.subr.mxu0 0.0
    %1128 = vmatpush1.msra.mxu0 0.0
    %1129 = vmatprep.subr.mxu0 0.0
    %1130 = vmatpush1.msra.mxu0 0.0
    %1131 = vmatprep.subr.mxu0 0.0
    %1132 = vmatpush1.msra.mxu0 0.0
    %1133 = vmatprep.subr.mxu0 0.0
    %1134 = vmatpush1.msra.mxu0 0.0
    %1135 = vmatprep.subr.mxu0 0.0
    %1136 = vmatpush1.msra.mxu0 0.0
    %1137 = vmatprep.subr.mxu0 0.0
    %1138 = vmatpush1.msra.mxu0 0.0
    %1139 = vmatprep.subr.mxu0 0.0
    %1140 = vmatpush1.msra.mxu0 0.0
    %1141 = vmatprep.subr.mxu0 0.0
    %1142 = vmatpush1.msra.mxu0 0.0
    %1143 = vmatprep.subr.mxu0 0.0
    %1144 = vmatpush1.msra.mxu0 0.0
    %1145 = vmatprep.subr.mxu0 0.0
    %1146 = vmatpush1.msra.mxu0 0.0
    %1147 = vmatprep.subr.mxu0 0.0
    %1148 = vmatpush1.msra.mxu0 0.0
    %1149 = vmatprep.subr.mxu0 0.0
    %1150 = vmatpush1.msra.mxu0 0.0
    %1151 = vmatprep.subr.mxu0 0.0
    %1152 = vmatpush1.msra.mxu0 0.0
    %1153 = vmatprep.mubr.f32.mxu0 0.0
    %1154 = vmatmul.mubr.f32.gmra.mrb[0].mxu0 %v1083
    %v1155 = vpop.f32.mrb[0].mxu0
    %v1156 = vadd.f32 0.0, %v1155
    %v1157 = vpop.f32.mrb[0].mxu0
    %v1158 = vadd.f32 0.0, %v1157
    %1159 = vdwg.mxu0
    %1160 = vmatprep.subr.mxu0 %v674
    %1161 = vmatpush1.msra.mxu0 %v673
    %1162 = vmatprep.subr.mxu0 %v678
    %1163 = vmatpush1.msra.mxu0 %v677
    %1164 = vmatprep.subr.mxu0 %v682
    %1165 = vmatpush1.msra.mxu0 %v681
    %1166 = vmatprep.subr.mxu0 %v686
    %1167 = vmatpush1.msra.mxu0 %v685
    %1168 = vmatprep.subr.mxu0 %v690
    %1169 = vmatpush1.msra.mxu0 %v689
    %1170 = vmatprep.subr.mxu0 %v694
    %1171 = vmatpush1.msra.mxu0 %v693
    %1172 = vmatprep.subr.mxu0 %v698
    %1173 = vmatpush1.msra.mxu0 %v697
    %1174 = vmatprep.subr.mxu0 %v702
    %1175 = vmatpush1.msra.mxu0 %v701
    %1176 = vmatprep.subr.mxu0 %v706
    %1177 = vmatpush1.msra.mxu0 %v705
    %1178 = vmatprep.subr.mxu0 %v710
    %1179 = vmatpush1.msra.mxu0 %v709
    %1180 = vmatprep.subr.mxu0 %v714
    %1181 = vmatpush1.msra.mxu0 %v713
    %1182 = vmatprep.subr.mxu0 %v718
    %1183 = vmatpush1.msra.mxu0 %v717
    %1184 = vmatprep.subr.mxu0 %v722
    %1185 = vmatpush1.msra.mxu0 %v721
    %1186 = vmatprep.subr.mxu0 %v726
    %1187 = vmatpush1.msra.mxu0 %v725
    %1188 = vmatprep.subr.mxu0 %v730
    %1189 = vmatpush1.msra.mxu0 %v729
    %1190 = vmatprep.subr.mxu0 %v734
    %1191 = vmatpush1.msra.mxu0 %v733
    %1192 = vmatprep.subr.mxu0 0.0
    %1193 = vmatpush1.msra.mxu0 0.0
    %1194 = vmatprep.subr.mxu0 0.0
    %1195 = vmatpush1.msra.mxu0 0.0
    %1196 = vmatprep.subr.mxu0 0.0
    %1197 = vmatpush1.msra.mxu0 0.0
    %1198 = vmatprep.subr.mxu0 0.0
    %1199 = vmatpush1.msra.mxu0 0.0
    %1200 = vmatprep.subr.mxu0 0.0
    %1201 = vmatpush1.msra.mxu0 0.0
    %1202 = vmatprep.subr.mxu0 0.0
    %1203 = vmatpush1.msra.mxu0 0.0
    %1204 = vmatprep.subr.mxu0 0.0
    %1205 = vmatpush1.msra.mxu0 0.0
    %1206 = vmatprep.subr.mxu0 0.0
    %1207 = vmatpush1.msra.mxu0 0.0
    %1208 = vmatprep.subr.mxu0 0.0
    %1209 = vmatpush1.msra.mxu0 0.0
    %1210 = vmatprep.subr.mxu0 0.0
    %1211 = vmatpush1.msra.mxu0 0.0
    %1212 = vmatprep.subr.mxu0 0.0
    %1213 = vmatpush1.msra.mxu0 0.0
    %1214 = vmatprep.subr.mxu0 0.0
    %1215 = vmatpush1.msra.mxu0 0.0
    %1216 = vmatprep.subr.mxu0 0.0
    %1217 = vmatpush1.msra.mxu0 0.0
    %1218 = vmatprep.subr.mxu0 0.0
    %1219 = vmatpush1.msra.mxu0 0.0
    %1220 = vmatprep.subr.mxu0 0.0
    %1221 = vmatpush1.msra.mxu0 0.0
    %1222 = vmatprep.subr.mxu0 0.0
    %1223 = vmatpush1.msra.mxu0 0.0
    %1224 = vmatprep.mubr.f32.mxu0 0.0
    %1225 = vmatmul.mubr.f32.gmra.mrb[0].mxu0 %v1083
    %v1226 = vpop.f32.mrb[0].mxu0
    %v1227 = vadd.f32 0.0, %v1226
    %v1228 = vpop.f32.mrb[0].mxu0
    %v1229 = vadd.f32 0.0, %v1228
    %1230 = vdwg.mxu0
    %v1231 = vadd.f32 %v1085, %v1156
    %v1232 = vadd.f32 %v1086, %v1158
    %v1233 = vadd.f32 %v1087, %v1227
    %v1234 = vadd.f32 %v1088, %v1229
    %v1235 = vxor.u32 %v1231, 2147483648
    %v1236 = vmul.f32 %v1235, 1.442695
    %v1237 = vpow.pop %v1236
    %v1238 = vadd.f32 %v1237, 1.0
    %v1239 = vrcp.pop %v1238
    %v1240 = vmul.f32 1.0, %v1239
    %v1241 = vxor.u32 %v1232, 2147483648
    %v1242 = vmul.f32 %v1241, 1.442695
    %v1243 = vpow.pop %v1242
    %v1244 = vadd.f32 %v1243, 1.0
    %v1245 = vrcp.pop %v1244
    %v1246 = vmul.f32 1.0, %v1245
    %v1247 = vtanh.pop %v1233
    %v1248 = vxor.u32 %v1234, 2147483648
    %v1249 = vmul.f32 %v1248, 1.442695
    %v1250 = vpow.pop %v1249
    %v1251 = vadd.f32 %v1250, 1.0
    %v1252 = vrcp.pop %v1251
    %v1253 = vmul.f32 1.0, %v1252
    %v1254 = vmul.f32 %v1246, %v1081
    %v1255 = vmul.f32 %v1240, %v1247
    %v1256 = vadd.f32 %v1254, %v1255
    %v1257 = vtanh.pop %v1256
    %v1258 = vmul.f32 %v1253, %v1257
    %1259 = vst [vmem:[#allocation3 + $0x10] sm:$0xff] %v1258
    %v1260 = vld [vmem:[#allocation2 + $0x60] sm:$0xff]
    %v1261 = vld [vmem:[#allocation2 + $0x68] sm:$0xff]
    %v1262 = vld [vmem:[#allocation2 + $0x70] sm:$0xff]
    %v1263 = vld [vmem:[#allocation2 + $0x78] sm:$0xff]
    %1264 = vmatprep.subr.mxu0 %v672
    %1265 = vmatpush1.msra.mxu0 %v671
    %1266 = vmatprep.subr.mxu0 %v676
    %1267 = vmatpush1.msra.mxu0 %v675
    %1268 = vmatprep.subr.mxu0 %v680
    %1269 = vmatpush1.msra.mxu0 %v679
    %1270 = vmatprep.subr.mxu0 %v684
    %1271 = vmatpush1.msra.mxu0 %v683
    %1272 = vmatprep.subr.mxu0 %v688
    %1273 = vmatpush1.msra.mxu0 %v687
    %1274 = vmatprep.subr.mxu0 %v692
    %1275 = vmatpush1.msra.mxu0 %v691
    %1276 = vmatprep.subr.mxu0 %v696
    %1277 = vmatpush1.msra.mxu0 %v695
    %1278 = vmatprep.subr.mxu0 %v700
    %1279 = vmatpush1.msra.mxu0 %v699
    %1280 = vmatprep.subr.mxu0 %v704
    %1281 = vmatpush1.msra.mxu0 %v703
    %1282 = vmatprep.subr.mxu0 %v708
    %1283 = vmatpush1.msra.mxu0 %v707
    %1284 = vmatprep.subr.mxu0 %v712
    %1285 = vmatpush1.msra.mxu0 %v711
    %1286 = vmatprep.subr.mxu0 %v716
    %1287 = vmatpush1.msra.mxu0 %v715
    %1288 = vmatprep.subr.mxu0 %v720
    %1289 = vmatpush1.msra.mxu0 %v719
    %1290 = vmatprep.subr.mxu0 %v724
    %1291 = vmatpush1.msra.mxu0 %v723
    %1292 = vmatprep.subr.mxu0 %v728
    %1293 = vmatpush1.msra.mxu0 %v727
    %1294 = vmatprep.subr.mxu0 %v732
    %1295 = vmatpush1.msra.mxu0 %v731
    %1296 = vmatprep.subr.mxu0 0.0
    %1297 = vmatpush1.msra.mxu0 0.0
    %1298 = vmatprep.subr.mxu0 0.0
    %1299 = vmatpush1.msra.mxu0 0.0
    %1300 = vmatprep.subr.mxu0 0.0
    %1301 = vmatpush1.msra.mxu0 0.0
    %1302 = vmatprep.subr.mxu0 0.0
    %1303 = vmatpush1.msra.mxu0 0.0
    %1304 = vmatprep.subr.mxu0 0.0
    %1305 = vmatpush1.msra.mxu0 0.0
    %1306 = vmatprep.subr.mxu0 0.0
    %1307 = vmatpush1.msra.mxu0 0.0
    %1308 = vmatprep.subr.mxu0 0.0
    %1309 = vmatpush1.msra.mxu0 0.0
    %1310 = vmatprep.subr.mxu0 0.0
    %1311 = vmatpush1.msra.mxu0 0.0
    %1312 = vmatprep.subr.mxu0 0.0
    %1313 = vmatpush1.msra.mxu0 0.0
    %1314 = vmatprep.subr.mxu0 0.0
    %1315 = vmatpush1.msra.mxu0 0.0
    %1316 = vmatprep.subr.mxu0 0.0
    %1317 = vmatpush1.msra.mxu0 0.0
    %1318 = vmatprep.subr.mxu0 0.0
    %1319 = vmatpush1.msra.mxu0 0.0
    %1320 = vmatprep.subr.mxu0 0.0
    %1321 = vmatpush1.msra.mxu0 0.0
    %1322 = vmatprep.subr.mxu0 0.0
    %1323 = vmatpush1.msra.mxu0 0.0
    %1324 = vmatprep.subr.mxu0 0.0
    %1325 = vmatpush1.msra.mxu0 0.0
    %1326 = vmatprep.subr.mxu0 0.0
    %1327 = vmatpush1.msra.mxu0 0.0
    %1328 = vmatprep.mubr.f32.mxu0 0.0
    %1329 = vmatmul.mubr.f32.gmra.mrb[0].mxu0 %v1258
    %v1330 = vpop.f32.mrb[0].mxu0
    %v1331 = vadd.f32 0.0, %v1330
    %v1332 = vpop.f32.mrb[0].mxu0
    %v1333 = vadd.f32 0.0, %v1332
    %1334 = vdwg.mxu0
    %1335 = vmatprep.subr.mxu0 %v674
    %1336 = vmatpush1.msra.mxu0 %v673
    %1337 = vmatprep.subr.mxu0 %v678
    %1338 = vmatpush1.msra.mxu0 %v677
    %1339 = vmatprep.subr.mxu0 %v682
    %1340 = vmatpush1.msra.mxu0 %v681
    %1341 = vmatprep.subr.mxu0 %v686
    %1342 = vmatpush1.msra.mxu0 %v685
    %1343 = vmatprep.subr.mxu0 %v690
    %1344 = vmatpush1.msra.mxu0 %v689
    %1345 = vmatprep.subr.mxu0 %v694
    %1346 = vmatpush1.msra.mxu0 %v693
    %1347 = vmatprep.subr.mxu0 %v698
    %1348 = vmatpush1.msra.mxu0 %v697
    %1349 = vmatprep.subr.mxu0 %v702
    %1350 = vmatpush1.msra.mxu0 %v701
    %1351 = vmatprep.subr.mxu0 %v706
    %1352 = vmatpush1.msra.mxu0 %v705
    %1353 = vmatprep.subr.mxu0 %v710
    %1354 = vmatpush1.msra.mxu0 %v709
    %1355 = vmatprep.subr.mxu0 %v714
    %1356 = vmatpush1.msra.mxu0 %v713
    %1357 = vmatprep.subr.mxu0 %v718
    %1358 = vmatpush1.msra.mxu0 %v717
    %1359 = vmatprep.subr.mxu0 %v722
    %1360 = vmatpush1.msra.mxu0 %v721
    %1361 = vmatprep.subr.mxu0 %v726
    %1362 = vmatpush1.msra.mxu0 %v725
    %1363 = vmatprep.subr.mxu0 %v730
    %1364 = vmatpush1.msra.mxu0 %v729
    %1365 = vmatprep.subr.mxu0 %v734
    %1366 = vmatpush1.msra.mxu0 %v733
    %1367 = vmatprep.subr.mxu0 0.0
    %1368 = vmatpush1.msra.mxu0 0.0
    %1369 = vmatprep.subr.mxu0 0.0
    %1370 = vmatpush1.msra.mxu0 0.0
    %1371 = vmatprep.subr.mxu0 0.0
    %1372 = vmatpush1.msra.mxu0 0.0
    %1373 = vmatprep.subr.mxu0 0.0
    %1374 = vmatpush1.msra.mxu0 0.0
    %1375 = vmatprep.subr.mxu0 0.0
    %1376 = vmatpush1.msra.mxu0 0.0
    %1377 = vmatprep.subr.mxu0 0.0
    %1378 = vmatpush1.msra.mxu0 0.0
    %1379 = vmatprep.subr.mxu0 0.0
    %1380 = vmatpush1.msra.mxu0 0.0
    %1381 = vmatprep.subr.mxu0 0.0
    %1382 = vmatpush1.msra.mxu0 0.0
    %1383 = vmatprep.subr.mxu0 0.0
    %1384 = vmatpush1.msra.mxu0 0.0
    %1385 = vmatprep.subr.mxu0 0.0
    %1386 = vmatpush1.msra.mxu0 0.0
    %1387 = vmatprep.subr.mxu0 0.0
    %1388 = vmatpush1.msra.mxu0 0.0
    %1389 = vmatprep.subr.mxu0 0.0
    %1390 = vmatpush1.msra.mxu0 0.0
    %1391 = vmatprep.subr.mxu0 0.0
    %1392 = vmatpush1.msra.mxu0 0.0
    %1393 = vmatprep.subr.mxu0 0.0
    %1394 = vmatpush1.msra.mxu0 0.0
    %1395 = vmatprep.subr.mxu0 0.0
    %1396 = vmatpush1.msra.mxu0 0.0
    %1397 = vmatprep.subr.mxu0 0.0
    %1398 = vmatpush1.msra.mxu0 0.0
    %1399 = vmatprep.mubr.f32.mxu0 0.0
    %1400 = vmatmul.mubr.f32.gmra.mrb[0].mxu0 %v1258
    %v1401 = vpop.f32.mrb[0].mxu0
    %v1402 = vadd.f32 0.0, %v1401
    %v1403 = vpop.f32.mrb[0].mxu0
    %v1404 = vadd.f32 0.0, %v1403
    %1405 = vdwg.mxu0
    %v1406 = vadd.f32 %v1260, %v1331
    %v1407 = vadd.f32 %v1261, %v1333
    %v1408 = vadd.f32 %v1262, %v1402
    %v1409 = vadd.f32 %v1263, %v1404
    %v1410 = vxor.u32 %v1406, 2147483648
    %v1411 = vmul.f32 %v1410, 1.442695
    %v1412 = vpow.pop %v1411
    %v1413 = vadd.f32 %v1412, 1.0
    %v1414 = vrcp.pop %v1413
    %v1415 = vmul.f32 1.0, %v1414
    %v1416 = vxor.u32 %v1407, 2147483648
    %v1417 = vmul.f32 %v1416, 1.442695
    %v1418 = vpow.pop %v1417
    %v1419 = vadd.f32 %v1418, 1.0
    %v1420 = vrcp.pop %v1419
    %v1421 = vmul.f32 1.0, %v1420
    %v1422 = vtanh.pop %v1408
    %v1423 = vxor.u32 %v1409, 2147483648
    %v1424 = vmul.f32 %v1423, 1.442695
    %v1425 = vpow.pop %v1424
    %v1426 = vadd.f32 %v1425, 1.0
    %v1427 = vrcp.pop %v1426
    %v1428 = vmul.f32 1.0, %v1427
    %v1429 = vmul.f32 %v1421, %v1256
    %v1430 = vmul.f32 %v1415, %v1422
    %v1431 = vadd.f32 %v1429, %v1430
    %v1432 = vtanh.pop %v1431
    %v1433 = vmul.f32 %v1428, %v1432
    %1434 = vst [vmem:[#allocation3 + $0x18] sm:$0xff] %v1433
    %v1435 = vld [vmem:[#allocation2 + $0x80] sm:$0xff]
    %v1436 = vld [vmem:[#allocation2 + $0x88] sm:$0xff]
    %v1437 = vld [vmem:[#allocation2 + $0x90] sm:$0xff]
    %v1438 = vld [vmem:[#allocation2 + $0x98] sm:$0xff]
    %1439 = vmatprep.subr.mxu0 %v672
    %1440 = vmatpush1.msra.mxu0 %v671
    %1441 = vmatprep.subr.mxu0 %v676
    %1442 = vmatpush1.msra.mxu0 %v675
    %1443 = vmatprep.subr.mxu0 %v680
    %1444 = vmatpush1.msra.mxu0 %v679
    %1445 = vmatprep.subr.mxu0 %v684
    %1446 = vmatpush1.msra.mxu0 %v683
    %1447 = vmatprep.subr.mxu0 %v688
    %1448 = vmatpush1.msra.mxu0 %v687
    %1449 = vmatprep.subr.mxu0 %v692
    %1450 = vmatpush1.msra.mxu0 %v691
    %1451 = vmatprep.subr.mxu0 %v696
    %1452 = vmatpush1.msra.mxu0 %v695
    %1453 = vmatprep.subr.mxu0 %v700
    %1454 = vmatpush1.msra.mxu0 %v699
    %1455 = vmatprep.subr.mxu0 %v704
    %1456 = vmatpush1.msra.mxu0 %v703
    %1457 = vmatprep.subr.mxu0 %v708
    %1458 = vmatpush1.msra.mxu0 %v707
    %1459 = vmatprep.subr.mxu0 %v712
    %1460 = vmatpush1.msra.mxu0 %v711
    %1461 = vmatprep.subr.mxu0 %v716
    %1462 = vmatpush1.msra.mxu0 %v715
    %1463 = vmatprep.subr.mxu0 %v720
    %1464 = vmatpush1.msra.mxu0 %v719
    %1465 = vmatprep.subr.mxu0 %v724
    %1466 = vmatpush1.msra.mxu0 %v723
    %1467 = vmatprep.subr.mxu0 %v728
    %1468 = vmatpush1.msra.mxu0 %v727
    %1469 = vmatprep.subr.mxu0 %v732
    %1470 = vmatpush1.msra.mxu0 %v731
    %1471 = vmatprep.subr.mxu0 0.0
    %1472 = vmatpush1.msra.mxu0 0.0
    %1473 = vmatprep.subr.mxu0 0.0
    %1474 = vmatpush1.msra.mxu0 0.0
    %1475 = vmatprep.subr.mxu0 0.0
    %1476 = vmatpush1.msra.mxu0 0.0
    %1477 = vmatprep.subr.mxu0 0.0
    %1478 = vmatpush1.msra.mxu0 0.0
    %1479 = vmatprep.subr.mxu0 0.0
    %1480 = vmatpush1.msra.mxu0 0.0
    %1481 = vmatprep.subr.mxu0 0.0
    %1482 = vmatpush1.msra.mxu0 0.0
    %1483 = vmatprep.subr.mxu0 0.0
    %1484 = vmatpush1.msra.mxu0 0.0
    %1485 = vmatprep.subr.mxu0 0.0
    %1486 = vmatpush1.msra.mxu0 0.0
    %1487 = vmatprep.subr.mxu0 0.0
    %1488 = vmatpush1.msra.mxu0 0.0
    %1489 = vmatprep.subr.mxu0 0.0
    %1490 = vmatpush1.msra.mxu0 0.0
    %1491 = vmatprep.subr.mxu0 0.0
    %1492 = vmatpush1.msra.mxu0 0.0
    %1493 = vmatprep.subr.mxu0 0.0
    %1494 = vmatpush1.msra.mxu0 0.0
    %1495 = vmatprep.subr.mxu0 0.0
    %1496 = vmatpush1.msra.mxu0 0.0
    %1497 = vmatprep.subr.mxu0 0.0
    %1498 = vmatpush1.msra.mxu0 0.0
    %1499 = vmatprep.subr.mxu0 0.0
    %1500 = vmatpush1.msra.mxu0 0.0
    %1501 = vmatprep.subr.mxu0 0.0
    %1502 = vmatpush1.msra.mxu0 0.0
    %1503 = vmatprep.mubr.f32.mxu0 0.0
    %1504 = vmatmul.mubr.f32.gmra.mrb[0].mxu0 %v1433
    %v1505 = vpop.f32.mrb[0].mxu0
    %v1506 = vadd.f32 0.0, %v1505
    %v1507 = vpop.f32.mrb[0].mxu0
    %v1508 = vadd.f32 0.0, %v1507
    %1509 = vdwg.mxu0
    %1510 = vmatprep.subr.mxu0 %v674
    %1511 = vmatpush1.msra.mxu0 %v673
    %1512 = vmatprep.subr.mxu0 %v678
    %1513 = vmatpush1.msra.mxu0 %v677
    %1514 = vmatprep.subr.mxu0 %v682
    %1515 = vmatpush1.msra.mxu0 %v681
    %1516 = vmatprep.subr.mxu0 %v686
    %1517 = vmatpush1.msra.mxu0 %v685
    %1518 = vmatprep.subr.mxu0 %v690
    %1519 = vmatpush1.msra.mxu0 %v689
    %1520 = vmatprep.subr.mxu0 %v694
    %1521 = vmatpush1.msra.mxu0 %v693
    %1522 = vmatprep.subr.mxu0 %v698
    %1523 = vmatpush1.msra.mxu0 %v697
    %1524 = vmatprep.subr.mxu0 %v702
    %1525 = vmatpush1.msra.mxu0 %v701
    %1526 = vmatprep.subr.mxu0 %v706
    %1527 = vmatpush1.msra.mxu0 %v705
    %1528 = vmatprep.subr.mxu0 %v710
    %1529 = vmatpush1.msra.mxu0 %v709
    %1530 = vmatprep.subr.mxu0 %v714
    %1531 = vmatpush1.msra.mxu0 %v713
    %1532 = vmatprep.subr.mxu0 %v718
    %1533 = vmatpush1.msra.mxu0 %v717
    %1534 = vmatprep.subr.mxu0 %v722
    %1535 = vmatpush1.msra.mxu0 %v721
    %1536 = vmatprep.subr.mxu0 %v726
    %1537 = vmatpush1.msra.mxu0 %v725
    %1538 = vmatprep.subr.mxu0 %v730
    %1539 = vmatpush1.msra.mxu0 %v729
    %1540 = vmatprep.subr.mxu0 %v734
    %1541 = vmatpush1.msra.mxu0 %v733
    %1542 = vmatprep.subr.mxu0 0.0
    %1543 = vmatpush1.msra.mxu0 0.0
    %1544 = vmatprep.subr.mxu0 0.0
    %1545 = vmatpush1.msra.mxu0 0.0
    %1546 = vmatprep.subr.mxu0 0.0
    %1547 = vmatpush1.msra.mxu0 0.0
    %1548 = vmatprep.subr.mxu0 0.0
    %1549 = vmatpush1.msra.mxu0 0.0
    %1550 = vmatprep.subr.mxu0 0.0
    %1551 = vmatpush1.msra.mxu0 0.0
    %1552 = vmatprep.subr.mxu0 0.0
    %1553 = vmatpush1.msra.mxu0 0.0
    %1554 = vmatprep.subr.mxu0 0.0
    %1555 = vmatpush1.msra.mxu0 0.0
    %1556 = vmatprep.subr.mxu0 0.0
    %1557 = vmatpush1.msra.mxu0 0.0
    %1558 = vmatprep.subr.mxu0 0.0
    %1559 = vmatpush1.msra.mxu0 0.0
    %1560 = vmatprep.subr.mxu0 0.0
    %1561 = vmatpush1.msra.mxu0 0.0
    %1562 = vmatprep.subr.mxu0 0.0
    %1563 = vmatpush1.msra.mxu0 0.0
    %1564 = vmatprep.subr.mxu0 0.0
    %1565 = vmatpush1.msra.mxu0 0.0
    %1566 = vmatprep.subr.mxu0 0.0
    %1567 = vmatpush1.msra.mxu0 0.0
    %1568 = vmatprep.subr.mxu0 0.0
    %1569 = vmatpush1.msra.mxu0 0.0
    %1570 = vmatprep.subr.mxu0 0.0
    %1571 = vmatpush1.msra.mxu0 0.0
    %1572 = vmatprep.subr.mxu0 0.0
    %1573 = vmatpush1.msra.mxu0 0.0
    %1574 = vmatprep.mubr.f32.mxu0 0.0
    %1575 = vmatmul.mubr.f32.gmra.mrb[0].mxu0 %v1433
    %v1576 = vpop.f32.mrb[0].mxu0
    %v1577 = vadd.f32 0.0, %v1576
    %v1578 = vpop.f32.mrb[0].mxu0
    %v1579 = vadd.f32 0.0, %v1578
    %1580 = vdwg.mxu0
    %v1581 = vadd.f32 %v1435, %v1506
    %v1582 = vadd.f32 %v1436, %v1508
    %v1583 = vadd.f32 %v1437, %v1577
    %v1584 = vadd.f32 %v1438, %v1579
    %v1585 = vxor.u32 %v1581, 2147483648
    %v1586 = vmul.f32 %v1585, 1.442695
    %v1587 = vpow.pop %v1586
    %v1588 = vadd.f32 %v1587, 1.0
    %v1589 = vrcp.pop %v1588
    %v1590 = vmul.f32 1.0, %v1589
    %v1591 = vxor.u32 %v1582, 2147483648
    %v1592 = vmul.f32 %v1591, 1.442695
    %v1593 = vpow.pop %v1592
    %v1594 = vadd.f32 %v1593, 1.0
    %v1595 = vrcp.pop %v1594
    %v1596 = vmul.f32 1.0, %v1595
    %v1597 = vtanh.pop %v1583
    %v1598 = vxor.u32 %v1584, 2147483648
    %v1599 = vmul.f32 %v1598, 1.442695
    %v1600 = vpow.pop %v1599
    %v1601 = vadd.f32 %v1600, 1.0
    %v1602 = vrcp.pop %v1601
    %v1603 = vmul.f32 1.0, %v1602
    %v1604 = vmul.f32 %v1596, %v1431
    %v1605 = vmul.f32 %v1590, %v1597
    %v1606 = vadd.f32 %v1604, %v1605
    %v1607 = vtanh.pop %v1606
    %v1608 = vmul.f32 %v1603, %v1607
    %1609 = vst [vmem:[#allocation3 + $0x20] sm:$0xff] %v1608
    %v1610 = vld [vmem:[#allocation2 + $0xa0] sm:$0xff]
    %v1611 = vld [vmem:[#allocation2 + $0xa8] sm:$0xff]
    %v1612 = vld [vmem:[#allocation2 + $0xb0] sm:$0xff]
    %v1613 = vld [vmem:[#allocation2 + $0xb8] sm:$0xff]
    %1614 = vmatprep.subr.mxu0 %v672
    %1615 = vmatpush1.msra.mxu0 %v671
    %1616 = vmatprep.subr.mxu0 %v676
    %1617 = vmatpush1.msra.mxu0 %v675
    %1618 = vmatprep.subr.mxu0 %v680
    %1619 = vmatpush1.msra.mxu0 %v679
    %1620 = vmatprep.subr.mxu0 %v684
    %1621 = vmatpush1.msra.mxu0 %v683
    %1622 = vmatprep.subr.mxu0 %v688
    %1623 = vmatpush1.msra.mxu0 %v687
    %1624 = vmatprep.subr.mxu0 %v692
    %1625 = vmatpush1.msra.mxu0 %v691
    %1626 = vmatprep.subr.mxu0 %v696
    %1627 = vmatpush1.msra.mxu0 %v695
    %1628 = vmatprep.subr.mxu0 %v700
    %1629 = vmatpush1.msra.mxu0 %v699
    %1630 = vmatprep.subr.mxu0 %v704
    %1631 = vmatpush1.msra.mxu0 %v703
    %1632 = vmatprep.subr.mxu0 %v708
    %1633 = vmatpush1.msra.mxu0 %v707
    %1634 = vmatprep.subr.mxu0 %v712
    %1635 = vmatpush1.msra.mxu0 %v711
    %1636 = vmatprep.subr.mxu0 %v716
    %1637 = vmatpush1.msra.mxu0 %v715
    %1638 = vmatprep.subr.mxu0 %v720
    %1639 = vmatpush1.msra.mxu0 %v719
    %1640 = vmatprep.subr.mxu0 %v724
    %1641 = vmatpush1.msra.mxu0 %v723
    %1642 = vmatprep.subr.mxu0 %v728
    %1643 = vmatpush1.msra.mxu0 %v727
    %1644 = vmatprep.subr.mxu0 %v732
    %1645 = vmatpush1.msra.mxu0 %v731
    %1646 = vmatprep.subr.mxu0 0.0
    %1647 = vmatpush1.msra.mxu0 0.0
    %1648 = vmatprep.subr.mxu0 0.0
    %1649 = vmatpush1.msra.mxu0 0.0
    %1650 = vmatprep.subr.mxu0 0.0
    %1651 = vmatpush1.msra.mxu0 0.0
    %1652 = vmatprep.subr.mxu0 0.0
    %1653 = vmatpush1.msra.mxu0 0.0
    %1654 = vmatprep.subr.mxu0 0.0
    %1655 = vmatpush1.msra.mxu0 0.0
    %1656 = vmatprep.subr.mxu0 0.0
    %1657 = vmatpush1.msra.mxu0 0.0
    %1658 = vmatprep.subr.mxu0 0.0
    %1659 = vmatpush1.msra.mxu0 0.0
    %1660 = vmatprep.subr.mxu0 0.0
    %1661 = vmatpush1.msra.mxu0 0.0
    %1662 = vmatprep.subr.mxu0 0.0
    %1663 = vmatpush1.msra.mxu0 0.0
    %1664 = vmatprep.subr.mxu0 0.0
    %1665 = vmatpush1.msra.mxu0 0.0
    %1666 = vmatprep.subr.mxu0 0.0
    %1667 = vmatpush1.msra.mxu0 0.0
    %1668 = vmatprep.subr.mxu0 0.0
    %1669 = vmatpush1.msra.mxu0 0.0
    %1670 = vmatprep.subr.mxu0 0.0
    %1671 = vmatpush1.msra.mxu0 0.0
    %1672 = vmatprep.subr.mxu0 0.0
    %1673 = vmatpush1.msra.mxu0 0.0
    %1674 = vmatprep.subr.mxu0 0.0
    %1675 = vmatpush1.msra.mxu0 0.0
    %1676 = vmatprep.subr.mxu0 0.0
    %1677 = vmatpush1.msra.mxu0 0.0
    %1678 = vmatprep.mubr.f32.mxu0 0.0
    %1679 = vmatmul.mubr.f32.gmra.mrb[0].mxu0 %v1608
    %v1680 = vpop.f32.mrb[0].mxu0
    %v1681 = vadd.f32 0.0, %v1680
    %v1682 = vpop.f32.mrb[0].mxu0
    %v1683 = vadd.f32 0.0, %v1682
    %1684 = vdwg.mxu0
    %1685 = vmatprep.subr.mxu0 %v674
    %1686 = vmatpush1.msra.mxu0 %v673
    %1687 = vmatprep.subr.mxu0 %v678
    %1688 = vmatpush1.msra.mxu0 %v677
    %1689 = vmatprep.subr.mxu0 %v682
    %1690 = vmatpush1.msra.mxu0 %v681
    %1691 = vmatprep.subr.mxu0 %v686
    %1692 = vmatpush1.msra.mxu0 %v685
    %1693 = vmatprep.subr.mxu0 %v690
    %1694 = vmatpush1.msra.mxu0 %v689
    %1695 = vmatprep.subr.mxu0 %v694
    %1696 = vmatpush1.msra.mxu0 %v693
    %1697 = vmatprep.subr.mxu0 %v698
    %1698 = vmatpush1.msra.mxu0 %v697
    %1699 = vmatprep.subr.mxu0 %v702
    %1700 = vmatpush1.msra.mxu0 %v701
    %1701 = vmatprep.subr.mxu0 %v706
    %1702 = vmatpush1.msra.mxu0 %v705
    %1703 = vmatprep.subr.mxu0 %v710
    %1704 = vmatpush1.msra.mxu0 %v709
    %1705 = vmatprep.subr.mxu0 %v714
    %1706 = vmatpush1.msra.mxu0 %v713
    %1707 = vmatprep.subr.mxu0 %v718
    %1708 = vmatpush1.msra.mxu0 %v717
    %1709 = vmatprep.subr.mxu0 %v722
    %1710 = vmatpush1.msra.mxu0 %v721
    %1711 = vmatprep.subr.mxu0 %v726
    %1712 = vmatpush1.msra.mxu0 %v725
    %1713 = vmatprep.subr.mxu0 %v730
    %1714 = vmatpush1.msra.mxu0 %v729
    %1715 = vmatprep.subr.mxu0 %v734
    %1716 = vmatpush1.msra.mxu0 %v733
    %1717 = vmatprep.subr.mxu0 0.0
    %1718 = vmatpush1.msra.mxu0 0.0
    %1719 = vmatprep.subr.mxu0 0.0
    %1720 = vmatpush1.msra.mxu0 0.0
    %1721 = vmatprep.subr.mxu0 0.0
    %1722 = vmatpush1.msra.mxu0 0.0
    %1723 = vmatprep.subr.mxu0 0.0
    %1724 = vmatpush1.msra.mxu0 0.0
    %1725 = vmatprep.subr.mxu0 0.0
    %1726 = vmatpush1.msra.mxu0 0.0
    %1727 = vmatprep.subr.mxu0 0.0
    %1728 = vmatpush1.msra.mxu0 0.0
    %1729 = vmatprep.subr.mxu0 0.0
    %1730 = vmatpush1.msra.mxu0 0.0
    %1731 = vmatprep.subr.mxu0 0.0
    %1732 = vmatpush1.msra.mxu0 0.0
    %1733 = vmatprep.subr.mxu0 0.0
    %1734 = vmatpush1.msra.mxu0 0.0
    %1735 = vmatprep.subr.mxu0 0.0
    %1736 = vmatpush1.msra.mxu0 0.0
    %1737 = vmatprep.subr.mxu0 0.0
    %1738 = vmatpush1.msra.mxu0 0.0
    %1739 = vmatprep.subr.mxu0 0.0
    %1740 = vmatpush1.msra.mxu0 0.0
    %1741 = vmatprep.subr.mxu0 0.0
    %1742 = vmatpush1.msra.mxu0 0.0
    %1743 = vmatprep.subr.mxu0 0.0
    %1744 = vmatpush1.msra.mxu0 0.0
    %1745 = vmatprep.subr.mxu0 0.0
    %1746 = vmatpush1.msra.mxu0 0.0
    %1747 = vmatprep.subr.mxu0 0.0
    %1748 = vmatpush1.msra.mxu0 0.0
    %1749 = vmatprep.mubr.f32.mxu0 0.0
    %1750 = vmatmul.mubr.f32.gmra.mrb[0].mxu0 %v1608
    %v1751 = vpop.f32.mrb[0].mxu0
    %v1752 = vadd.f32 0.0, %v1751
    %v1753 = vpop.f32.mrb[0].mxu0
    %v1754 = vadd.f32 0.0, %v1753
    %1755 = vdwg.mxu0
    %v1756 = vadd.f32 %v1610, %v1681
    %v1757 = vadd.f32 %v1611, %v1683
    %v1758 = vadd.f32 %v1612, %v1752
    %v1759 = vadd.f32 %v1613, %v1754
    %v1760 = vxor.u32 %v1756, 2147483648
    %v1761 = vmul.f32 %v1760, 1.442695
    %v1762 = vpow.pop %v1761
    %v1763 = vadd.f32 %v1762, 1.0
    %v1764 = vrcp.pop %v1763
    %v1765 = vmul.f32 1.0, %v1764
    %v1766 = vxor.u32 %v1757, 2147483648
    %v1767 = vmul.f32 %v1766, 1.442695
    %v1768 = vpow.pop %v1767
    %v1769 = vadd.f32 %v1768, 1.0
    %v1770 = vrcp.pop %v1769
    %v1771 = vmul.f32 1.0, %v1770
    %v1772 = vtanh.pop %v1758
    %v1773 = vxor.u32 %v1759, 2147483648
    %v1774 = vmul.f32 %v1773, 1.442695
    %v1775 = vpow.pop %v1774
    %v1776 = vadd.f32 %v1775, 1.0
    %v1777 = vrcp.pop %v1776
    %v1778 = vmul.f32 1.0, %v1777
    %v1779 = vmul.f32 %v1771, %v1606
    %v1780 = vmul.f32 %v1765, %v1772
    %v1781 = vadd.f32 %v1779, %v1780
    %v1782 = vtanh.pop %v1781
    %v1783 = vmul.f32 %v1778, %v1782
    %1784 = vst [vmem:[#allocation3 + $0x28] sm:$0xff] %v1783
    %v1785 = vld [vmem:[#allocation2 + $0xc0] sm:$0xff]
    %v1786 = vld [vmem:[#allocation2 + $0xc8] sm:$0xff]
    %v1787 = vld [vmem:[#allocation2 + $0xd0] sm:$0xff]
    %v1788 = vld [vmem:[#allocation2 + $0xd8] sm:$0xff]
    %1789 = vmatprep.subr.mxu0 %v672
    %1790 = vmatpush1.msra.mxu0 %v671
    %1791 = vmatprep.subr.mxu0 %v676
    %1792 = vmatpush1.msra.mxu0 %v675
    %1793 = vmatprep.subr.mxu0 %v680
    %1794 = vmatpush1.msra.mxu0 %v679
    %1795 = vmatprep.subr.mxu0 %v684
    %1796 = vmatpush1.msra.mxu0 %v683
    %1797 = vmatprep.subr.mxu0 %v688
    %1798 = vmatpush1.msra.mxu0 %v687
    %1799 = vmatprep.subr.mxu0 %v692
    %1800 = vmatpush1.msra.mxu0 %v691
    %1801 = vmatprep.subr.mxu0 %v696
    %1802 = vmatpush1.msra.mxu0 %v695
    %1803 = vmatprep.subr.mxu0 %v700
    %1804 = vmatpush1.msra.mxu0 %v699
    %1805 = vmatprep.subr.mxu0 %v704
    %1806 = vmatpush1.msra.mxu0 %v703
    %1807 = vmatprep.subr.mxu0 %v708
    %1808 = vmatpush1.msra.mxu0 %v707
    %1809 = vmatprep.subr.mxu0 %v712
    %1810 = vmatpush1.msra.mxu0 %v711
    %1811 = vmatprep.subr.mxu0 %v716
    %1812 = vmatpush1.msra.mxu0 %v715
    %1813 = vmatprep.subr.mxu0 %v720
    %1814 = vmatpush1.msra.mxu0 %v719
    %1815 = vmatprep.subr.mxu0 %v724
    %1816 = vmatpush1.msra.mxu0 %v723
    %1817 = vmatprep.subr.mxu0 %v728
    %1818 = vmatpush1.msra.mxu0 %v727
    %1819 = vmatprep.subr.mxu0 %v732
    %1820 = vmatpush1.msra.mxu0 %v731
    %1821 = vmatprep.subr.mxu0 0.0
    %1822 = vmatpush1.msra.mxu0 0.0
    %1823 = vmatprep.subr.mxu0 0.0
    %1824 = vmatpush1.msra.mxu0 0.0
    %1825 = vmatprep.subr.mxu0 0.0
    %1826 = vmatpush1.msra.mxu0 0.0
    %1827 = vmatprep.subr.mxu0 0.0
    %1828 = vmatpush1.msra.mxu0 0.0
    %1829 = vmatprep.subr.mxu0 0.0
    %1830 = vmatpush1.msra.mxu0 0.0
    %1831 = vmatprep.subr.mxu0 0.0
    %1832 = vmatpush1.msra.mxu0 0.0
    %1833 = vmatprep.subr.mxu0 0.0
    %1834 = vmatpush1.msra.mxu0 0.0
    %1835 = vmatprep.subr.mxu0 0.0
    %1836 = vmatpush1.msra.mxu0 0.0
    %1837 = vmatprep.subr.mxu0 0.0
    %1838 = vmatpush1.msra.mxu0 0.0
    %1839 = vmatprep.subr.mxu0 0.0
    %1840 = vmatpush1.msra.mxu0 0.0
    %1841 = vmatprep.subr.mxu0 0.0
    %1842 = vmatpush1.msra.mxu0 0.0
    %1843 = vmatprep.subr.mxu0 0.0
    %1844 = vmatpush1.msra.mxu0 0.0
    %1845 = vmatprep.subr.mxu0 0.0
    %1846 = vmatpush1.msra.mxu0 0.0
    %1847 = vmatprep.subr.mxu0 0.0
    %1848 = vmatpush1.msra.mxu0 0.0
    %1849 = vmatprep.subr.mxu0 0.0
    %1850 = vmatpush1.msra.mxu0 0.0
    %1851 = vmatprep.subr.mxu0 0.0
    %1852 = vmatpush1.msra.mxu0 0.0
    %1853 = vmatprep.mubr.f32.mxu0 0.0
    %1854 = vmatmul.mubr.f32.gmra.mrb[0].mxu0 %v1783
    %v1855 = vpop.f32.mrb[0].mxu0
    %v1856 = vadd.f32 0.0, %v1855
    %v1857 = vpop.f32.mrb[0].mxu0
    %v1858 = vadd.f32 0.0, %v1857
    %1859 = vdwg.mxu0
    %1860 = vmatprep.subr.mxu0 %v674
    %1861 = vmatpush1.msra.mxu0 %v673
    %1862 = vmatprep.subr.mxu0 %v678
    %1863 = vmatpush1.msra.mxu0 %v677
    %1864 = vmatprep.subr.mxu0 %v682
    %1865 = vmatpush1.msra.mxu0 %v681
    %1866 = vmatprep.subr.mxu0 %v686
    %1867 = vmatpush1.msra.mxu0 %v685
    %1868 = vmatprep.subr.mxu0 %v690
    %1869 = vmatpush1.msra.mxu0 %v689
    %1870 = vmatprep.subr.mxu0 %v694
    %1871 = vmatpush1.msra.mxu0 %v693
    %1872 = vmatprep.subr.mxu0 %v698
    %1873 = vmatpush1.msra.mxu0 %v697
    %1874 = vmatprep.subr.mxu0 %v702
    %1875 = vmatpush1.msra.mxu0 %v701
    %1876 = vmatprep.subr.mxu0 %v706
    %1877 = vmatpush1.msra.mxu0 %v705
    %1878 = vmatprep.subr.mxu0 %v710
    %1879 = vmatpush1.msra.mxu0 %v709
    %1880 = vmatprep.subr.mxu0 %v714
    %1881 = vmatpush1.msra.mxu0 %v713
    %1882 = vmatprep.subr.mxu0 %v718
    %1883 = vmatpush1.msra.mxu0 %v717
    %1884 = vmatprep.subr.mxu0 %v722
    %1885 = vmatpush1.msra.mxu0 %v721
    %1886 = vmatprep.subr.mxu0 %v726
    %1887 = vmatpush1.msra.mxu0 %v725
    %1888 = vmatprep.subr.mxu0 %v730
    %1889 = vmatpush1.msra.mxu0 %v729
    %1890 = vmatprep.subr.mxu0 %v734
    %1891 = vmatpush1.msra.mxu0 %v733
    %1892 = vmatprep.subr.mxu0 0.0
    %1893 = vmatpush1.msra.mxu0 0.0
    %1894 = vmatprep.subr.mxu0 0.0
    %1895 = vmatpush1.msra.mxu0 0.0
    %1896 = vmatprep.subr.mxu0 0.0
    %1897 = vmatpush1.msra.mxu0 0.0
    %1898 = vmatprep.subr.mxu0 0.0
    %1899 = vmatpush1.msra.mxu0 0.0
    %1900 = vmatprep.subr.mxu0 0.0
    %1901 = vmatpush1.msra.mxu0 0.0
    %1902 = vmatprep.subr.mxu0 0.0
    %1903 = vmatpush1.msra.mxu0 0.0
    %1904 = vmatprep.subr.mxu0 0.0
    %1905 = vmatpush1.msra.mxu0 0.0
    %1906 = vmatprep.subr.mxu0 0.0
    %1907 = vmatpush1.msra.mxu0 0.0
    %1908 = vmatprep.subr.mxu0 0.0
    %1909 = vmatpush1.msra.mxu0 0.0
    %1910 = vmatprep.subr.mxu0 0.0
    %1911 = vmatpush1.msra.mxu0 0.0
    %1912 = vmatprep.subr.mxu0 0.0
    %1913 = vmatpush1.msra.mxu0 0.0
    %1914 = vmatprep.subr.mxu0 0.0
    %1915 = vmatpush1.msra.mxu0 0.0
    %1916 = vmatprep.subr.mxu0 0.0
    %1917 = vmatpush1.msra.mxu0 0.0
    %1918 = vmatprep.subr.mxu0 0.0
    %1919 = vmatpush1.msra.mxu0 0.0
    %1920 = vmatprep.subr.mxu0 0.0
    %1921 = vmatpush1.msra.mxu0 0.0
    %1922 = vmatprep.subr.mxu0 0.0
    %1923 = vmatpush1.msra.mxu0 0.0
    %1924 = vmatprep.mubr.f32.mxu0 0.0
    %1925 = vmatmul.mubr.f32.gmra.mrb[0].mxu0 %v1783
    %v1926 = vpop.f32.mrb[0].mxu0
    %v1927 = vadd.f32 0.0, %v1926
    %v1928 = vpop.f32.mrb[0].mxu0
    %v1929 = vadd.f32 0.0, %v1928
    %1930 = vdwg.mxu0
    %v1931 = vadd.f32 %v1785, %v1856
    %v1932 = vadd.f32 %v1786, %v1858
    %v1933 = vadd.f32 %v1787, %v1927
    %v1934 = vadd.f32 %v1788, %v1929
    %v1935 = vxor.u32 %v1931, 2147483648
    %v1936 = vmul.f32 %v1935, 1.442695
    %v1937 = vpow.pop %v1936
    %v1938 = vadd.f32 %v1937, 1.0
    %v1939 = vrcp.pop %v1938
    %v1940 = vmul.f32 1.0, %v1939
    %v1941 = vxor.u32 %v1932, 2147483648
    %v1942 = vmul.f32 %v1941, 1.442695
    %v1943 = vpow.pop %v1942
    %v1944 = vadd.f32 %v1943, 1.0
    %v1945 = vrcp.pop %v1944
    %v1946 = vmul.f32 1.0, %v1945
    %v1947 = vtanh.pop %v1933
    %v1948 = vxor.u32 %v1934, 2147483648
    %v1949 = vmul.f32 %v1948, 1.442695
    %v1950 = vpow.pop %v1949
    %v1951 = vadd.f32 %v1950, 1.0
    %v1952 = vrcp.pop %v1951
    %v1953 = vmul.f32 1.0, %v1952
    %v1954 = vmul.f32 %v1946, %v1781
    %v1955 = vmul.f32 %v1940, %v1947
    %v1956 = vadd.f32 %v1954, %v1955
    %v1957 = vtanh.pop %v1956
    %v1958 = vmul.f32 %v1953, %v1957
    %1959 = vst [vmem:[#allocation3 + $0x30] sm:$0xff] %v1958
    %v1960 = vld [vmem:[#allocation2 + $0xe0] sm:$0xff]
    %v1961 = vld [vmem:[#allocation2 + $0xe8] sm:$0xff]
    %v1962 = vld [vmem:[#allocation2 + $0xf0] sm:$0xff]
    %v1963 = vld [vmem:[#allocation2 + $0xf8] sm:$0xff]
    %1964 = vmatprep.subr.mxu0 %v672
    %1965 = vmatpush1.msra.mxu0 %v671
    %1966 = vmatprep.subr.mxu0 %v676
    %1967 = vmatpush1.msra.mxu0 %v675
    %1968 = vmatprep.subr.mxu0 %v680
    %1969 = vmatpush1.msra.mxu0 %v679
    %1970 = vmatprep.subr.mxu0 %v684
    %1971 = vmatpush1.msra.mxu0 %v683
    %1972 = vmatprep.subr.mxu0 %v688
    %1973 = vmatpush1.msra.mxu0 %v687
    %1974 = vmatprep.subr.mxu0 %v692
    %1975 = vmatpush1.msra.mxu0 %v691
    %1976 = vmatprep.subr.mxu0 %v696
    %1977 = vmatpush1.msra.mxu0 %v695
    %1978 = vmatprep.subr.mxu0 %v700
    %1979 = vmatpush1.msra.mxu0 %v699
    %1980 = vmatprep.subr.mxu0 %v704
    %1981 = vmatpush1.msra.mxu0 %v703
    %1982 = vmatprep.subr.mxu0 %v708
    %1983 = vmatpush1.msra.mxu0 %v707
    %1984 = vmatprep.subr.mxu0 %v712
    %1985 = vmatpush1.msra.mxu0 %v711
    %1986 = vmatprep.subr.mxu0 %v716
    %1987 = vmatpush1.msra.mxu0 %v715
    %1988 = vmatprep.subr.mxu0 %v720
    %1989 = vmatpush1.msra.mxu0 %v719
    %1990 = vmatprep.subr.mxu0 %v724
    %1991 = vmatpush1.msra.mxu0 %v723
    %1992 = vmatprep.subr.mxu0 %v728
    %1993 = vmatpush1.msra.mxu0 %v727
    %1994 = vmatprep.subr.mxu0 %v732
    %1995 = vmatpush1.msra.mxu0 %v731
    %1996 = vmatprep.subr.mxu0 0.0
    %1997 = vmatpush1.msra.mxu0 0.0
    %1998 = vmatprep.subr.mxu0 0.0
    %1999 = vmatpush1.msra.mxu0 0.0
    %2000 = vmatprep.subr.mxu0 0.0
    %2001 = vmatpush1.msra.mxu0 0.0
    %2002 = vmatprep.subr.mxu0 0.0
    %2003 = vmatpush1.msra.mxu0 0.0
    %2004 = vmatprep.subr.mxu0 0.0
    %2005 = vmatpush1.msra.mxu0 0.0
    %2006 = vmatprep.subr.mxu0 0.0
    %2007 = vmatpush1.msra.mxu0 0.0
    %2008 = vmatprep.subr.mxu0 0.0
    %2009 = vmatpush1.msra.mxu0 0.0
    %2010 = vmatprep.subr.mxu0 0.0
    %2011 = vmatpush1.msra.mxu0 0.0
    %2012 = vmatprep.subr.mxu0 0.0
    %2013 = vmatpush1.msra.mxu0 0.0
    %2014 = vmatprep.subr.mxu0 0.0
    %2015 = vmatpush1.msra.mxu0 0.0
    %2016 = vmatprep.subr.mxu0 0.0
    %2017 = vmatpush1.msra.mxu0 0.0
    %2018 = vmatprep.subr.mxu0 0.0
    %2019 = vmatpush1.msra.mxu0 0.0
    %2020 = vmatprep.subr.mxu0 0.0
    %2021 = vmatpush1.msra.mxu0 0.0
    %2022 = vmatprep.subr.mxu0 0.0
    %2023 = vmatpush1.msra.mxu0 0.0
    %2024 = vmatprep.subr.mxu0 0.0
    %2025 = vmatpush1.msra.mxu0 0.0
    %2026 = vmatprep.subr.mxu0 0.0
    %2027 = vmatpush1.msra.mxu0 0.0
    %2028 = vmatprep.mubr.f32.mxu0 0.0
    %2029 = vmatmul.mubr.f32.gmra.mrb[0].mxu0 %v1958
    %v2030 = vpop.f32.mrb[0].mxu0
    %v2031 = vadd.f32 0.0, %v2030
    %v2032 = vpop.f32.mrb[0].mxu0
    %v2033 = vadd.f32 0.0, %v2032
    %2034 = vdwg.mxu0
    %2035 = vmatprep.subr.mxu0 %v674
    %2036 = vmatpush1.msra.mxu0 %v673
    %2037 = vmatprep.subr.mxu0 %v678
    %2038 = vmatpush1.msra.mxu0 %v677
    %2039 = vmatprep.subr.mxu0 %v682
    %2040 = vmatpush1.msra.mxu0 %v681
    %2041 = vmatprep.subr.mxu0 %v686
    %2042 = vmatpush1.msra.mxu0 %v685
    %2043 = vmatprep.subr.mxu0 %v690
    %2044 = vmatpush1.msra.mxu0 %v689
    %2045 = vmatprep.subr.mxu0 %v694
    %2046 = vmatpush1.msra.mxu0 %v693
    %2047 = vmatprep.subr.mxu0 %v698
    %2048 = vmatpush1.msra.mxu0 %v697
    %2049 = vmatprep.subr.mxu0 %v702
    %2050 = vmatpush1.msra.mxu0 %v701
    %2051 = vmatprep.subr.mxu0 %v706
    %2052 = vmatpush1.msra.mxu0 %v705
    %2053 = vmatprep.subr.mxu0 %v710
    %2054 = vmatpush1.msra.mxu0 %v709
    %2055 = vmatprep.subr.mxu0 %v714
    %2056 = vmatpush1.msra.mxu0 %v713
    %2057 = vmatprep.subr.mxu0 %v718
    %2058 = vmatpush1.msra.mxu0 %v717
    %2059 = vmatprep.subr.mxu0 %v722
    %2060 = vmatpush1.msra.mxu0 %v721
    %2061 = vmatprep.subr.mxu0 %v726
    %2062 = vmatpush1.msra.mxu0 %v725
    %2063 = vmatprep.subr.mxu0 %v730
    %2064 = vmatpush1.msra.mxu0 %v729
    %2065 = vmatprep.subr.mxu0 %v734
    %2066 = vmatpush1.msra.mxu0 %v733
    %2067 = vmatprep.subr.mxu0 0.0
    %2068 = vmatpush1.msra.mxu0 0.0
    %2069 = vmatprep.subr.mxu0 0.0
    %2070 = vmatpush1.msra.mxu0 0.0
    %2071 = vmatprep.subr.mxu0 0.0
    %2072 = vmatpush1.msra.mxu0 0.0
    %2073 = vmatprep.subr.mxu0 0.0
    %2074 = vmatpush1.msra.mxu0 0.0
    %2075 = vmatprep.subr.mxu0 0.0
    %2076 = vmatpush1.msra.mxu0 0.0
    %2077 = vmatprep.subr.mxu0 0.0
    %2078 = vmatpush1.msra.mxu0 0.0
    %2079 = vmatprep.subr.mxu0 0.0
    %2080 = vmatpush1.msra.mxu0 0.0
    %2081 = vmatprep.subr.mxu0 0.0
    %2082 = vmatpush1.msra.mxu0 0.0
    %2083 = vmatprep.subr.mxu0 0.0
    %2084 = vmatpush1.msra.mxu0 0.0
    %2085 = vmatprep.subr.mxu0 0.0
    %2086 = vmatpush1.msra.mxu0 0.0
    %2087 = vmatprep.subr.mxu0 0.0
    %2088 = vmatpush1.msra.mxu0 0.0
    %2089 = vmatprep.subr.mxu0 0.0
    %2090 = vmatpush1.msra.mxu0 0.0
    %2091 = vmatprep.subr.mxu0 0.0
    %2092 = vmatpush1.msra.mxu0 0.0
    %2093 = vmatprep.subr.mxu0 0.0
    %2094 = vmatpush1.msra.mxu0 0.0
    %2095 = vmatprep.subr.mxu0 0.0
    %2096 = vmatpush1.msra.mxu0 0.0
    %2097 = vmatprep.subr.mxu0 0.0
    %2098 = vmatpush1.msra.mxu0 0.0
    %2099 = vmatprep.mubr.f32.mxu0 0.0
    %2100 = vmatmul.mubr.f32.gmra.mrb[0].mxu0 %v1958
    %v2101 = vpop.f32.mrb[0].mxu0
    %v2102 = vadd.f32 0.0, %v2101
    %v2103 = vpop.f32.mrb[0].mxu0
    %v2104 = vadd.f32 0.0, %v2103
    %2105 = vdwg.mxu0
    %v2106 = vadd.f32 %v1960, %v2031
    %v2107 = vadd.f32 %v1961, %v2033
    %v2108 = vadd.f32 %v1962, %v2102
    %v2109 = vadd.f32 %v1963, %v2104
    %v2110 = vxor.u32 %v2106, 2147483648
    %v2111 = vmul.f32 %v2110, 1.442695
    %v2112 = vpow.pop %v2111
    %v2113 = vadd.f32 %v2112, 1.0
    %v2114 = vrcp.pop %v2113
    %v2115 = vmul.f32 1.0, %v2114
    %v2116 = vxor.u32 %v2107, 2147483648
    %v2117 = vmul.f32 %v2116, 1.442695
    %v2118 = vpow.pop %v2117
    %v2119 = vadd.f32 %v2118, 1.0
    %v2120 = vrcp.pop %v2119
    %v2121 = vmul.f32 1.0, %v2120
    %v2122 = vtanh.pop %v2108
    %v2123 = vxor.u32 %v2109, 2147483648
    %v2124 = vmul.f32 %v2123, 1.442695
    %v2125 = vpow.pop %v2124
    %v2126 = vadd.f32 %v2125, 1.0
    %v2127 = vrcp.pop %v2126
    %v2128 = vmul.f32 1.0, %v2127
    %v2129 = vmul.f32 %v2121, %v1956
    %v2130 = vmul.f32 %v2115, %v2122
    %v2131 = vadd.f32 %v2129, %v2130
    %v2132 = vtanh.pop %v2131
    %v2133 = vmul.f32 %v2128, %v2132
    %2134 = vst [vmem:[#allocation3 + $0x38] sm:$0xff] %v2133
    %v2135 = vld [vmem:[#allocation3] sm:$0xff]
    %v2136 = vld [vmem:[#allocation3 + $0x8] sm:$0xff]
    %v2137 = vld [vmem:[#allocation3 + $0x10] sm:$0xff]
    %v2138 = vld [vmem:[#allocation3 + $0x18] sm:$0xff]
    %v2139 = vld [vmem:[#allocation3 + $0x20] sm:$0xff]
    %v2140 = vld [vmem:[#allocation3 + $0x28] sm:$0xff]
    %v2141 = vld [vmem:[#allocation3 + $0x30] sm:$0xff]
    %v2142 = vld [vmem:[#allocation3 + $0x38] sm:$0xff]
    %v2143 = vld [vmem:[#allocation6] sm:$0xff]
    %v2144 = vld [vmem:[#allocation6 + $0x8] sm:$0xff]
    %v2145 = vld [vmem:[#allocation6 + $0x10] sm:$0xff]
    %v2146 = vld [vmem:[#allocation6 + $0x18] sm:$0xff]
    %v2147 = vld [vmem:[#allocation6 + $0x20] sm:$0xff]
    %v2148 = vld [vmem:[#allocation6 + $0x28] sm:$0xff]
    %v2149 = vld [vmem:[#allocation6 + $0x30] sm:$0xff]
    %v2150 = vld [vmem:[#allocation6 + $0x38] sm:$0xff]
    %v2151 = vld [vmem:[#allocation6 + $0x40] sm:$0xff]
    %v2152 = vld [vmem:[#allocation6 + $0x48] sm:$0xff]
    %v2153 = vld [vmem:[#allocation6 + $0x50] sm:$0xff]
    %v2154 = vld [vmem:[#allocation6 + $0x58] sm:$0xff]
    %v2155 = vld [vmem:[#allocation6 + $0x60] sm:$0xff]
    %v2156 = vld [vmem:[#allocation6 + $0x68] sm:$0xff]
    %v2157 = vld [vmem:[#allocation6 + $0x70] sm:$0xff]
    %v2158 = vld [vmem:[#allocation6 + $0x78] sm:$0xff]
    %v2159 = vld [vmem:[#allocation6 + $0x80] sm:$0xff]
    %v2160 = vld [vmem:[#allocation6 + $0x88] sm:$0xff]
    %v2161 = vld [vmem:[#allocation6 + $0x90] sm:$0xff]
    %v2162 = vld [vmem:[#allocation6 + $0x98] sm:$0xff]
    %v2163 = vld [vmem:[#allocation6 + $0xa0] sm:$0xff]
    %v2164 = vld [vmem:[#allocation6 + $0xa8] sm:$0xff]
    %v2165 = vld [vmem:[#allocation6 + $0xb0] sm:$0xff]
    %v2166 = vld [vmem:[#allocation6 + $0xb8] sm:$0xff]
    %v2167 = vld [vmem:[#allocation6 + $0xc0] sm:$0xff]
    %v2168 = vld [vmem:[#allocation6 + $0xc8] sm:$0xff]
    %v2169 = vld [vmem:[#allocation6 + $0xd0] sm:$0xff]
    %v2170 = vld [vmem:[#allocation6 + $0xd8] sm:$0xff]
    %v2171 = vld [vmem:[#allocation6 + $0xe0] sm:$0xff]
    %v2172 = vld [vmem:[#allocation6 + $0xe8] sm:$0xff]
    %v2173 = vld [vmem:[#allocation6 + $0xf0] sm:$0xff]
    %v2174 = vld [vmem:[#allocation6 + $0xf8] sm:$0xff]
    %v2175 = vld [vmem:[#allocation6 + $0x100] sm:$0xff]
    %v2176 = vld [vmem:[#allocation6 + $0x108] sm:$0xff]
    %v2177 = vld [vmem:[#allocation6 + $0x110] sm:$0xff]
    %v2178 = vld [vmem:[#allocation6 + $0x118] sm:$0xff]
    %v2179 = vld [vmem:[#allocation6 + $0x120] sm:$0xff]
    %v2180 = vld [vmem:[#allocation6 + $0x128] sm:$0xff]
    %v2181 = vld [vmem:[#allocation6 + $0x130] sm:$0xff]
    %v2182 = vld [vmem:[#allocation6 + $0x138] sm:$0xff]
    %v2183 = vld [vmem:[#allocation6 + $0x140] sm:$0xff]
    %v2184 = vld [vmem:[#allocation6 + $0x148] sm:$0xff]
    %v2185 = vld [vmem:[#allocation6 + $0x150] sm:$0xff]
    %v2186 = vld [vmem:[#allocation6 + $0x158] sm:$0xff]
    %v2187 = vld [vmem:[#allocation6 + $0x160] sm:$0xff]
    %v2188 = vld [vmem:[#allocation6 + $0x168] sm:$0xff]
    %v2189 = vld [vmem:[#allocation6 + $0x170] sm:$0xff]
    %v2190 = vld [vmem:[#allocation6 + $0x178] sm:$0xff]
    %v2191 = vld [vmem:[#allocation6 + $0x180] sm:$0xff]
    %v2192 = vld [vmem:[#allocation6 + $0x188] sm:$0xff]
    %v2193 = vld [vmem:[#allocation6 + $0x190] sm:$0xff]
    %v2194 = vld [vmem:[#allocation6 + $0x198] sm:$0xff]
    %v2195 = vld [vmem:[#allocation6 + $0x1a0] sm:$0xff]
    %v2196 = vld [vmem:[#allocation6 + $0x1a8] sm:$0xff]
    %v2197 = vld [vmem:[#allocation6 + $0x1b0] sm:$0xff]
    %v2198 = vld [vmem:[#allocation6 + $0x1b8] sm:$0xff]
    %v2199 = vld [vmem:[#allocation6 + $0x1c0] sm:$0xff]
    %v2200 = vld [vmem:[#allocation6 + $0x1c8] sm:$0xff]
    %v2201 = vld [vmem:[#allocation6 + $0x1d0] sm:$0xff]
    %v2202 = vld [vmem:[#allocation6 + $0x1d8] sm:$0xff]
    %v2203 = vld [vmem:[#allocation6 + $0x1e0] sm:$0xff]
    %v2204 = vld [vmem:[#allocation6 + $0x1e8] sm:$0xff]
    %v2205 = vld [vmem:[#allocation6 + $0x1f0] sm:$0xff]
    %v2206 = vld [vmem:[#allocation6 + $0x1f8] sm:$0xff]
    %v2207 = vld [vmem:[#allocation9] sm:$0xf]
    %v2209 = vlaneseq
    %v2210 = vshrl.u32 %v2209, 7
    %v2211 = vsub.s32 0, %v2210
    %v2212 = vrot.slane %v2207, %v2211
    %v2213 = vlaneseq
    %v2214 = vshrl.u32 %v2213, 7
    %v2215 = vsub.s32 1, %v2214
    %v2216 = vrot.slane %v2207, %v2215
    %v2217 = vlaneseq
    %v2218 = vshrl.u32 %v2217, 7
    %v2219 = vsub.s32 2, %v2218
    %v2220 = vrot.slane %v2207, %v2219
    %v2221 = vlaneseq
    %v2222 = vshrl.u32 %v2221, 7
    %v2223 = vsub.s32 3, %v2222
    %v2224 = vrot.slane %v2207, %v2223
    %2229 = vmatprep.subr.mxu0 %v2144
    %2230 = vmatpush1.msra.mxu0 %v2143
    %2231 = vmatprep.subr.mxu0 %v2148
    %2232 = vmatpush1.msra.mxu0 %v2147
    %2233 = vmatprep.subr.mxu0 %v2152
    %2234 = vmatpush1.msra.mxu0 %v2151
    %2235 = vmatprep.subr.mxu0 %v2156
    %2236 = vmatpush1.msra.mxu0 %v2155
    %2237 = vmatprep.subr.mxu0 %v2160
    %2238 = vmatpush1.msra.mxu0 %v2159
    %2239 = vmatprep.subr.mxu0 %v2164
    %2240 = vmatpush1.msra.mxu0 %v2163
    %2241 = vmatprep.subr.mxu0 %v2168
    %2242 = vmatpush1.msra.mxu0 %v2167
    %2243 = vmatprep.subr.mxu0 %v2172
    %2244 = vmatpush1.msra.mxu0 %v2171
    %2245 = vmatprep.subr.mxu0 %v2176
    %2246 = vmatpush1.msra.mxu0 %v2175
    %2247 = vmatprep.subr.mxu0 %v2180
    %2248 = vmatpush1.msra.mxu0 %v2179
    %2249 = vmatprep.subr.mxu0 %v2184
    %2250 = vmatpush1.msra.mxu0 %v2183
    %2251 = vmatprep.subr.mxu0 %v2188
    %2252 = vmatpush1.msra.mxu0 %v2187
    %2253 = vmatprep.subr.mxu0 %v2192
    %2254 = vmatpush1.msra.mxu0 %v2191
    %2255 = vmatprep.subr.mxu0 %v2196
    %2256 = vmatpush1.msra.mxu0 %v2195
    %2257 = vmatprep.subr.mxu0 %v2200
    %2258 = vmatpush1.msra.mxu0 %v2199
    %2259 = vmatprep.subr.mxu0 %v2204
    %2260 = vmatpush1.msra.mxu0 %v2203
    %2261 = vmatprep.subr.mxu0 0.0
    %2262 = vmatpush1.msra.mxu0 0.0
    %2263 = vmatprep.subr.mxu0 0.0
    %2264 = vmatpush1.msra.mxu0 0.0
    %2265 = vmatprep.subr.mxu0 0.0
    %2266 = vmatpush1.msra.mxu0 0.0
    %2267 = vmatprep.subr.mxu0 0.0
    %2268 = vmatpush1.msra.mxu0 0.0
    %2269 = vmatprep.subr.mxu0 0.0
    %2270 = vmatpush1.msra.mxu0 0.0
    %2271 = vmatprep.subr.mxu0 0.0
    %2272 = vmatpush1.msra.mxu0 0.0
    %2273 = vmatprep.subr.mxu0 0.0
    %2274 = vmatpush1.msra.mxu0 0.0
    %2275 = vmatprep.subr.mxu0 0.0
    %2276 = vmatpush1.msra.mxu0 0.0
    %2277 = vmatprep.subr.mxu0 0.0
    %2278 = vmatpush1.msra.mxu0 0.0
    %2279 = vmatprep.subr.mxu0 0.0
    %2280 = vmatpush1.msra.mxu0 0.0
    %2281 = vmatprep.subr.mxu0 0.0
    %2282 = vmatpush1.msra.mxu0 0.0
    %2283 = vmatprep.subr.mxu0 0.0
    %2284 = vmatpush1.msra.mxu0 0.0
    %2285 = vmatprep.subr.mxu0 0.0
    %2286 = vmatpush1.msra.mxu0 0.0
    %2287 = vmatprep.subr.mxu0 0.0
    %2288 = vmatpush1.msra.mxu0 0.0
    %2289 = vmatprep.subr.mxu0 0.0
    %2290 = vmatpush1.msra.mxu0 0.0
    %2291 = vmatprep.subr.mxu0 0.0
    %2292 = vmatpush1.msra.mxu0 0.0
    %2293 = vmatprep.mubr.f32.mxu0 0.0
    %2294 = vmatmul.mubr.f32.gmra.mrb[0].mxu0 %v2135
    %v2295 = vpop.f32.mrb[0].mxu0
    %v2296 = vadd.f32 %v2212, %v2295
    %v2297 = vpop.f32.mrb[0].mxu0
    %v2298 = vadd.f32 %v2216, %v2297
    %2299 = vmatprep.mubr.f32.mxu0 0.0
    %2300 = vmatmul.mubr.f32.gmra.mrb[0].mxu0 %v2136
    %v2301 = vpop.f32.mrb[0].mxu0
    %v2302 = vadd.f32 %v2212, %v2301
    %v2303 = vpop.f32.mrb[0].mxu0
    %v2304 = vadd.f32 %v2216, %v2303
    %2305 = vmatprep.mubr.f32.mxu0 0.0
    %2306 = vmatmul.mubr.f32.gmra.mrb[0].mxu0 %v2137
    %v2307 = vpop.f32.mrb[0].mxu0
    %v2308 = vadd.f32 %v2212, %v2307
    %v2309 = vpop.f32.mrb[0].mxu0
    %v2310 = vadd.f32 %v2216, %v2309
    %2311 = vmatprep.mubr.f32.mxu0 0.0
    %2312 = vmatmul.mubr.f32.gmra.mrb[0].mxu0 %v2138
    %v2313 = vpop.f32.mrb[0].mxu0
    %v2314 = vadd.f32 %v2212, %v2313
    %v2315 = vpop.f32.mrb[0].mxu0
    %v2316 = vadd.f32 %v2216, %v2315
    %2317 = vmatprep.mubr.f32.mxu0 0.0
    %2318 = vmatmul.mubr.f32.gmra.mrb[0].mxu0 %v2139
    %v2319 = vpop.f32.mrb[0].mxu0
    %v2320 = vadd.f32 %v2212, %v2319
    %v2321 = vpop.f32.mrb[0].mxu0
    %v2322 = vadd.f32 %v2216, %v2321
    %2323 = vmatprep.mubr.f32.mxu0 0.0
    %2324 = vmatmul.mubr.f32.gmra.mrb[0].mxu0 %v2140
    %v2325 = vpop.f32.mrb[0].mxu0
    %v2326 = vadd.f32 %v2212, %v2325
    %v2327 = vpop.f32.mrb[0].mxu0
    %v2328 = vadd.f32 %v2216, %v2327
    %2329 = vmatprep.mubr.f32.mxu0 0.0
    %2330 = vmatmul.mubr.f32.gmra.mrb[0].mxu0 %v2141
    %v2331 = vpop.f32.mrb[0].mxu0
    %v2332 = vadd.f32 %v2212, %v2331
    %v2333 = vpop.f32.mrb[0].mxu0
    %v2334 = vadd.f32 %v2216, %v2333
    %2335 = vmatprep.mubr.f32.mxu0 0.0
    %2336 = vmatmul.mubr.f32.gmra.mrb[0].mxu0 %v2142
    %v2337 = vpop.f32.mrb[0].mxu0
    %v2338 = vadd.f32 %v2212, %v2337
    %v2339 = vpop.f32.mrb[0].mxu0
    %v2340 = vadd.f32 %v2216, %v2339
    %2341 = vdwg.mxu0
    %2342 = vmatprep.subr.mxu0 %v2146
    %2343 = vmatpush1.msra.mxu0 %v2145
    %2344 = vmatprep.subr.mxu0 %v2150
    %2345 = vmatpush1.msra.mxu0 %v2149
    %2346 = vmatprep.subr.mxu0 %v2154
    %2347 = vmatpush1.msra.mxu0 %v2153
    %2348 = vmatprep.subr.mxu0 %v2158
    %2349 = vmatpush1.msra.mxu0 %v2157
    %2350 = vmatprep.subr.mxu0 %v2162
    %2351 = vmatpush1.msra.mxu0 %v2161
    %2352 = vmatprep.subr.mxu0 %v2166
    %2353 = vmatpush1.msra.mxu0 %v2165
    %2354 = vmatprep.subr.mxu0 %v2170
    %2355 = vmatpush1.msra.mxu0 %v2169
    %2356 = vmatprep.subr.mxu0 %v2174
    %2357 = vmatpush1.msra.mxu0 %v2173
    %2358 = vmatprep.subr.mxu0 %v2178
    %2359 = vmatpush1.msra.mxu0 %v2177
    %2360 = vmatprep.subr.mxu0 %v2182
    %2361 = vmatpush1.msra.mxu0 %v2181
    %2362 = vmatprep.subr.mxu0 %v2186
    %2363 = vmatpush1.msra.mxu0 %v2185
    %2364 = vmatprep.subr.mxu0 %v2190
    %2365 = vmatpush1.msra.mxu0 %v2189
    %2366 = vmatprep.subr.mxu0 %v2194
    %2367 = vmatpush1.msra.mxu0 %v2193
    %2368 = vmatprep.subr.mxu0 %v2198
    %2369 = vmatpush1.msra.mxu0 %v2197
    %2370 = vmatprep.subr.mxu0 %v2202
    %2371 = vmatpush1.msra.mxu0 %v2201
    %2372 = vmatprep.subr.mxu0 %v2206
    %2373 = vmatpush1.msra.mxu0 %v2205
    %2374 = vmatprep.subr.mxu0 0.0
    %2375 = vmatpush1.msra.mxu0 0.0
    %2376 = vmatprep.subr.mxu0 0.0
    %2377 = vmatpush1.msra.mxu0 0.0
    %2378 = vmatprep.subr.mxu0 0.0
    %2379 = vmatpush1.msra.mxu0 0.0
    %2380 = vmatprep.subr.mxu0 0.0
    %2381 = vmatpush1.msra.mxu0 0.0
    %2382 = vmatprep.subr.mxu0 0.0
    %2383 = vmatpush1.msra.mxu0 0.0
    %2384 = vmatprep.subr.mxu0 0.0
    %2385 = vmatpush1.msra.mxu0 0.0
    %2386 = vmatprep.subr.mxu0 0.0
    %2387 = vmatpush1.msra.mxu0 0.0
    %2388 = vmatprep.subr.mxu0 0.0
    %2389 = vmatpush1.msra.mxu0 0.0
    %2390 = vmatprep.subr.mxu0 0.0
    %2391 = vmatpush1.msra.mxu0 0.0
    %2392 = vmatprep.subr.mxu0 0.0
    %2393 = vmatpush1.msra.mxu0 0.0
    %2394 = vmatprep.subr.mxu0 0.0
    %2395 = vmatpush1.msra.mxu0 0.0
    %2396 = vmatprep.subr.mxu0 0.0
    %2397 = vmatpush1.msra.mxu0 0.0
    %2398 = vmatprep.subr.mxu0 0.0
    %2399 = vmatpush1.msra.mxu0 0.0
    %2400 = vmatprep.subr.mxu0 0.0
    %2401 = vmatpush1.msra.mxu0 0.0
    %2402 = vmatprep.subr.mxu0 0.0
    %2403 = vmatpush1.msra.mxu0 0.0
    %2404 = vmatprep.subr.mxu0 0.0
    %2405 = vmatpush1.msra.mxu0 0.0
    %2406 = vmatprep.mubr.f32.mxu0 0.0
    %2407 = vmatmul.mubr.f32.gmra.mrb[0].mxu0 %v2135
    %v2408 = vpop.f32.mrb[0].mxu0
    %v2409 = vadd.f32 %v2220, %v2408
    %v2410 = vpop.f32.mrb[0].mxu0
    %v2411 = vadd.f32 %v2224, %v2410
    %2412 = vmatprep.mubr.f32.mxu0 0.0
    %2413 = vmatmul.mubr.f32.gmra.mrb[0].mxu0 %v2136
    %v2414 = vpop.f32.mrb[0].mxu0
    %v2415 = vadd.f32 %v2220, %v2414
    %v2416 = vpop.f32.mrb[0].mxu0
    %v2417 = vadd.f32 %v2224, %v2416
    %2418 = vmatprep.mubr.f32.mxu0 0.0
    %2419 = vmatmul.mubr.f32.gmra.mrb[0].mxu0 %v2137
    %v2420 = vpop.f32.mrb[0].mxu0
    %v2421 = vadd.f32 %v2220, %v2420
    %v2422 = vpop.f32.mrb[0].mxu0
    %v2423 = vadd.f32 %v2224, %v2422
    %2424 = vmatprep.mubr.f32.mxu0 0.0
    %2425 = vmatmul.mubr.f32.gmra.mrb[0].mxu0 %v2138
    %v2426 = vpop.f32.mrb[0].mxu0
    %v2427 = vadd.f32 %v2220, %v2426
    %v2428 = vpop.f32.mrb[0].mxu0
    %v2429 = vadd.f32 %v2224, %v2428
    %2430 = vmatprep.mubr.f32.mxu0 0.0
    %2431 = vmatmul.mubr.f32.gmra.mrb[0].mxu0 %v2139
    %v2432 = vpop.f32.mrb[0].mxu0
    %v2433 = vadd.f32 %v2220, %v2432
    %v2434 = vpop.f32.mrb[0].mxu0
    %v2435 = vadd.f32 %v2224, %v2434
    %2436 = vmatprep.mubr.f32.mxu0 0.0
    %2437 = vmatmul.mubr.f32.gmra.mrb[0].mxu0 %v2140
    %v2438 = vpop.f32.mrb[0].mxu0
    %v2439 = vadd.f32 %v2220, %v2438
    %v2440 = vpop.f32.mrb[0].mxu0
    %v2441 = vadd.f32 %v2224, %v2440
    %2442 = vmatprep.mubr.f32.mxu0 0.0
    %2443 = vmatmul.mubr.f32.gmra.mrb[0].mxu0 %v2141
    %v2444 = vpop.f32.mrb[0].mxu0
    %v2445 = vadd.f32 %v2220, %v2444
    %v2446 = vpop.f32.mrb[0].mxu0
    %v2447 = vadd.f32 %v2224, %v2446
    %2448 = vmatprep.mubr.f32.mxu0 0.0
    %2449 = vmatmul.mubr.f32.gmra.mrb[0].mxu0 %v2142
    %v2450 = vpop.f32.mrb[0].mxu0
    %v2451 = vadd.f32 %v2220, %v2450
    %v2452 = vpop.f32.mrb[0].mxu0
    %v2453 = vadd.f32 %v2224, %v2452
    %2454 = vdwg.mxu0
    %2455 = vst [vmem:[#allocation2] sm:$0xff] %v2296
    %2456 = vst [vmem:[#allocation2 + $0x8] sm:$0xff] %v2298
    %2457 = vst [vmem:[#allocation2 + $0x10] sm:$0xff] %v2409
    %2458 = vst [vmem:[#allocation2 + $0x18] sm:$0xff] %v2411
    %2459 = vst [vmem:[#allocation2 + $0x20] sm:$0xff] %v2302
    %2460 = vst [vmem:[#allocation2 + $0x28] sm:$0xff] %v2304
    %2461 = vst [vmem:[#allocation2 + $0x30] sm:$0xff] %v2415
    %2462 = vst [vmem:[#allocation2 + $0x38] sm:$0xff] %v2417
    %2463 = vst [vmem:[#allocation2 + $0x40] sm:$0xff] %v2308
    %2464 = vst [vmem:[#allocation2 + $0x48] sm:$0xff] %v2310
    %2465 = vst [vmem:[#allocation2 + $0x50] sm:$0xff] %v2421
    %2466 = vst [vmem:[#allocation2 + $0x58] sm:$0xff] %v2423
    %2467 = vst [vmem:[#allocation2 + $0x60] sm:$0xff] %v2314
    %2468 = vst [vmem:[#allocation2 + $0x68] sm:$0xff] %v2316
    %2469 = vst [vmem:[#allocation2 + $0x70] sm:$0xff] %v2427
    %2470 = vst [vmem:[#allocation2 + $0x78] sm:$0xff] %v2429
    %2471 = vst [vmem:[#allocation2 + $0x80] sm:$0xff] %v2320
    %2472 = vst [vmem:[#allocation2 + $0x88] sm:$0xff] %v2322
    %2473 = vst [vmem:[#allocation2 + $0x90] sm:$0xff] %v2433
    %2474 = vst [vmem:[#allocation2 + $0x98] sm:$0xff] %v2435
    %2475 = vst [vmem:[#allocation2 + $0xa0] sm:$0xff] %v2326
    %2476 = vst [vmem:[#allocation2 + $0xa8] sm:$0xff] %v2328
    %2477 = vst [vmem:[#allocation2 + $0xb0] sm:$0xff] %v2439
    %2478 = vst [vmem:[#allocation2 + $0xb8] sm:$0xff] %v2441
    %2479 = vst [vmem:[#allocation2 + $0xc0] sm:$0xff] %v2332
    %2480 = vst [vmem:[#allocation2 + $0xc8] sm:$0xff] %v2334
    %2481 = vst [vmem:[#allocation2 + $0xd0] sm:$0xff] %v2445
    %2482 = vst [vmem:[#allocation2 + $0xd8] sm:$0xff] %v2447
    %2483 = vst [vmem:[#allocation2 + $0xe0] sm:$0xff] %v2338
    %2484 = vst [vmem:[#allocation2 + $0xe8] sm:$0xff] %v2340
    %2485 = vst [vmem:[#allocation2 + $0xf0] sm:$0xff] %v2451
    %2486 = vst [vmem:[#allocation2 + $0xf8] sm:$0xff] %v2453
    %v2487 = vld [vmem:[#allocation8] sm:$0xff]
    %v2488 = vld [vmem:[#allocation8 + $0x8] sm:$0xff]
    %v2489 = vld [vmem:[#allocation8 + $0x10] sm:$0xff]
    %v2490 = vld [vmem:[#allocation8 + $0x18] sm:$0xff]
    %v2491 = vld [vmem:[#allocation8 + $0x20] sm:$0xff]
    %v2492 = vld [vmem:[#allocation8 + $0x28] sm:$0xff]
    %v2493 = vld [vmem:[#allocation8 + $0x30] sm:$0xff]
    %v2494 = vld [vmem:[#allocation8 + $0x38] sm:$0xff]
    %v2495 = vld [vmem:[#allocation8 + $0x40] sm:$0xff]
    %v2496 = vld [vmem:[#allocation8 + $0x48] sm:$0xff]
    %v2497 = vld [vmem:[#allocation8 + $0x50] sm:$0xff]
    %v2498 = vld [vmem:[#allocation8 + $0x58] sm:$0xff]
    %v2499 = vld [vmem:[#allocation8 + $0x60] sm:$0xff]
    %v2500 = vld [vmem:[#allocation8 + $0x68] sm:$0xff]
    %v2501 = vld [vmem:[#allocation8 + $0x70] sm:$0xff]
    %v2502 = vld [vmem:[#allocation8 + $0x78] sm:$0xff]
    %v2503 = vld [vmem:[#allocation8 + $0x80] sm:$0xff]
    %v2504 = vld [vmem:[#allocation8 + $0x88] sm:$0xff]
    %v2505 = vld [vmem:[#allocation8 + $0x90] sm:$0xff]
    %v2506 = vld [vmem:[#allocation8 + $0x98] sm:$0xff]
    %v2507 = vld [vmem:[#allocation8 + $0xa0] sm:$0xff]
    %v2508 = vld [vmem:[#allocation8 + $0xa8] sm:$0xff]
    %v2509 = vld [vmem:[#allocation8 + $0xb0] sm:$0xff]
    %v2510 = vld [vmem:[#allocation8 + $0xb8] sm:$0xff]
    %v2511 = vld [vmem:[#allocation8 + $0xc0] sm:$0xff]
    %v2512 = vld [vmem:[#allocation8 + $0xc8] sm:$0xff]
    %v2513 = vld [vmem:[#allocation8 + $0xd0] sm:$0xff]
    %v2514 = vld [vmem:[#allocation8 + $0xd8] sm:$0xff]
    %v2515 = vld [vmem:[#allocation8 + $0xe0] sm:$0xff]
    %v2516 = vld [vmem:[#allocation8 + $0xe8] sm:$0xff]
    %v2517 = vld [vmem:[#allocation8 + $0xf0] sm:$0xff]
    %v2518 = vld [vmem:[#allocation8 + $0xf8] sm:$0xff]
    %v2519 = vld [vmem:[#allocation8 + $0x100] sm:$0xff]
    %v2520 = vld [vmem:[#allocation8 + $0x108] sm:$0xff]
    %v2521 = vld [vmem:[#allocation8 + $0x110] sm:$0xff]
    %v2522 = vld [vmem:[#allocation8 + $0x118] sm:$0xff]
    %v2523 = vld [vmem:[#allocation8 + $0x120] sm:$0xff]
    %v2524 = vld [vmem:[#allocation8 + $0x128] sm:$0xff]
    %v2525 = vld [vmem:[#allocation8 + $0x130] sm:$0xff]
    %v2526 = vld [vmem:[#allocation8 + $0x138] sm:$0xff]
    %v2527 = vld [vmem:[#allocation8 + $0x140] sm:$0xff]
    %v2528 = vld [vmem:[#allocation8 + $0x148] sm:$0xff]
    %v2529 = vld [vmem:[#allocation8 + $0x150] sm:$0xff]
    %v2530 = vld [vmem:[#allocation8 + $0x158] sm:$0xff]
    %v2531 = vld [vmem:[#allocation8 + $0x160] sm:$0xff]
    %v2532 = vld [vmem:[#allocation8 + $0x168] sm:$0xff]
    %v2533 = vld [vmem:[#allocation8 + $0x170] sm:$0xff]
    %v2534 = vld [vmem:[#allocation8 + $0x178] sm:$0xff]
    %v2535 = vld [vmem:[#allocation8 + $0x180] sm:$0xff]
    %v2536 = vld [vmem:[#allocation8 + $0x188] sm:$0xff]
    %v2537 = vld [vmem:[#allocation8 + $0x190] sm:$0xff]
    %v2538 = vld [vmem:[#allocation8 + $0x198] sm:$0xff]
    %v2539 = vld [vmem:[#allocation8 + $0x1a0] sm:$0xff]
    %v2540 = vld [vmem:[#allocation8 + $0x1a8] sm:$0xff]
    %v2541 = vld [vmem:[#allocation8 + $0x1b0] sm:$0xff]
    %v2542 = vld [vmem:[#allocation8 + $0x1b8] sm:$0xff]
    %v2543 = vld [vmem:[#allocation8 + $0x1c0] sm:$0xff]
    %v2544 = vld [vmem:[#allocation8 + $0x1c8] sm:$0xff]
    %v2545 = vld [vmem:[#allocation8 + $0x1d0] sm:$0xff]
    %v2546 = vld [vmem:[#allocation8 + $0x1d8] sm:$0xff]
    %v2547 = vld [vmem:[#allocation8 + $0x1e0] sm:$0xff]
    %v2548 = vld [vmem:[#allocation8 + $0x1e8] sm:$0xff]
    %v2549 = vld [vmem:[#allocation8 + $0x1f0] sm:$0xff]
    %v2550 = vld [vmem:[#allocation8 + $0x1f8] sm:$0xff]
    %v2551 = vld [vmem:[#allocation2] sm:$0xff]
    %v2552 = vld [vmem:[#allocation2 + $0x8] sm:$0xff]
    %v2553 = vld [vmem:[#allocation2 + $0x10] sm:$0xff]
    %v2554 = vld [vmem:[#allocation2 + $0x18] sm:$0xff]
    %2555 = vmatprep.subr.mxu0 %v2488
    %2556 = vmatpush1.msra.mxu0 %v2487
    %2557 = vmatprep.subr.mxu0 %v2492
    %2558 = vmatpush1.msra.mxu0 %v2491
    %2559 = vmatprep.subr.mxu0 %v2496
    %2560 = vmatpush1.msra.mxu0 %v2495
    %2561 = vmatprep.subr.mxu0 %v2500
    %2562 = vmatpush1.msra.mxu0 %v2499
    %2563 = vmatprep.subr.mxu0 %v2504
    %2564 = vmatpush1.msra.mxu0 %v2503
    %2565 = vmatprep.subr.mxu0 %v2508
    %2566 = vmatpush1.msra.mxu0 %v2507
    %2567 = vmatprep.subr.mxu0 %v2512
    %2568 = vmatpush1.msra.mxu0 %v2511
    %2569 = vmatprep.subr.mxu0 %v2516
    %2570 = vmatpush1.msra.mxu0 %v2515
    %2571 = vmatprep.subr.mxu0 %v2520
    %2572 = vmatpush1.msra.mxu0 %v2519
    %2573 = vmatprep.subr.mxu0 %v2524
    %2574 = vmatpush1.msra.mxu0 %v2523
    %2575 = vmatprep.subr.mxu0 %v2528
    %2576 = vmatpush1.msra.mxu0 %v2527
    %2577 = vmatprep.subr.mxu0 %v2532
    %2578 = vmatpush1.msra.mxu0 %v2531
    %2579 = vmatprep.subr.mxu0 %v2536
    %2580 = vmatpush1.msra.mxu0 %v2535
    %2581 = vmatprep.subr.mxu0 %v2540
    %2582 = vmatpush1.msra.mxu0 %v2539
    %2583 = vmatprep.subr.mxu0 %v2544
    %2584 = vmatpush1.msra.mxu0 %v2543
    %2585 = vmatprep.subr.mxu0 %v2548
    %2586 = vmatpush1.msra.mxu0 %v2547
    %2587 = vmatprep.subr.mxu0 0.0
    %2588 = vmatpush1.msra.mxu0 0.0
    %2589 = vmatprep.subr.mxu0 0.0
    %2590 = vmatpush1.msra.mxu0 0.0
    %2591 = vmatprep.subr.mxu0 0.0
    %2592 = vmatpush1.msra.mxu0 0.0
    %2593 = vmatprep.subr.mxu0 0.0
    %2594 = vmatpush1.msra.mxu0 0.0
    %2595 = vmatprep.subr.mxu0 0.0
    %2596 = vmatpush1.msra.mxu0 0.0
    %2597 = vmatprep.subr.mxu0 0.0
    %2598 = vmatpush1.msra.mxu0 0.0
    %2599 = vmatprep.subr.mxu0 0.0
    %2600 = vmatpush1.msra.mxu0 0.0
    %2601 = vmatprep.subr.mxu0 0.0
    %2602 = vmatpush1.msra.mxu0 0.0
    %2603 = vmatprep.subr.mxu0 0.0
    %2604 = vmatpush1.msra.mxu0 0.0
    %2605 = vmatprep.subr.mxu0 0.0
    %2606 = vmatpush1.msra.mxu0 0.0
    %2607 = vmatprep.subr.mxu0 0.0
    %2608 = vmatpush1.msra.mxu0 0.0
    %2609 = vmatprep.subr.mxu0 0.0
    %2610 = vmatpush1.msra.mxu0 0.0
    %2611 = vmatprep.subr.mxu0 0.0
    %2612 = vmatpush1.msra.mxu0 0.0
    %2613 = vmatprep.subr.mxu0 0.0
    %2614 = vmatpush1.msra.mxu0 0.0
    %2615 = vmatprep.subr.mxu0 0.0
    %2616 = vmatpush1.msra.mxu0 0.0
    %2617 = vmatprep.subr.mxu0 0.0
    %2618 = vmatpush1.msra.mxu0 0.0
    %2619 = vmatprep.mubr.f32.mxu0 0.0
    %2620 = vmatmul.mubr.f32.gmra.mrb[0].mxu0 0.0
    %v2621 = vpop.f32.mrb[0].mxu0
    %v2622 = vadd.f32 0.0, %v2621
    %v2623 = vpop.f32.mrb[0].mxu0
    %v2624 = vadd.f32 0.0, %v2623
    %2625 = vdwg.mxu0
    %2626 = vmatprep.subr.mxu0 %v2490
    %2627 = vmatpush1.msra.mxu0 %v2489
    %2628 = vmatprep.subr.mxu0 %v2494
    %2629 = vmatpush1.msra.mxu0 %v2493
    %2630 = vmatprep.subr.mxu0 %v2498
    %2631 = vmatpush1.msra.mxu0 %v2497
    %2632 = vmatprep.subr.mxu0 %v2502
    %2633 = vmatpush1.msra.mxu0 %v2501
    %2634 = vmatprep.subr.mxu0 %v2506
    %2635 = vmatpush1.msra.mxu0 %v2505
    %2636 = vmatprep.subr.mxu0 %v2510
    %2637 = vmatpush1.msra.mxu0 %v2509
    %2638 = vmatprep.subr.mxu0 %v2514
    %2639 = vmatpush1.msra.mxu0 %v2513
    %2640 = vmatprep.subr.mxu0 %v2518
    %2641 = vmatpush1.msra.mxu0 %v2517
    %2642 = vmatprep.subr.mxu0 %v2522
    %2643 = vmatpush1.msra.mxu0 %v2521
    %2644 = vmatprep.subr.mxu0 %v2526
    %2645 = vmatpush1.msra.mxu0 %v2525
    %2646 = vmatprep.subr.mxu0 %v2530
    %2647 = vmatpush1.msra.mxu0 %v2529
    %2648 = vmatprep.subr.mxu0 %v2534
    %2649 = vmatpush1.msra.mxu0 %v2533
    %2650 = vmatprep.subr.mxu0 %v2538
    %2651 = vmatpush1.msra.mxu0 %v2537
    %2652 = vmatprep.subr.mxu0 %v2542
    %2653 = vmatpush1.msra.mxu0 %v2541
    %2654 = vmatprep.subr.mxu0 %v2546
    %2655 = vmatpush1.msra.mxu0 %v2545
    %2656 = vmatprep.subr.mxu0 %v2550
    %2657 = vmatpush1.msra.mxu0 %v2549
    %2658 = vmatprep.subr.mxu0 0.0
    %2659 = vmatpush1.msra.mxu0 0.0
    %2660 = vmatprep.subr.mxu0 0.0
    %2661 = vmatpush1.msra.mxu0 0.0
    %2662 = vmatprep.subr.mxu0 0.0
    %2663 = vmatpush1.msra.mxu0 0.0
    %2664 = vmatprep.subr.mxu0 0.0
    %2665 = vmatpush1.msra.mxu0 0.0
    %2666 = vmatprep.subr.mxu0 0.0
    %2667 = vmatpush1.msra.mxu0 0.0
    %2668 = vmatprep.subr.mxu0 0.0
    %2669 = vmatpush1.msra.mxu0 0.0
    %2670 = vmatprep.subr.mxu0 0.0
    %2671 = vmatpush1.msra.mxu0 0.0
    %2672 = vmatprep.subr.mxu0 0.0
    %2673 = vmatpush1.msra.mxu0 0.0
    %2674 = vmatprep.subr.mxu0 0.0
    %2675 = vmatpush1.msra.mxu0 0.0
    %2676 = vmatprep.subr.mxu0 0.0
    %2677 = vmatpush1.msra.mxu0 0.0
    %2678 = vmatprep.subr.mxu0 0.0
    %2679 = vmatpush1.msra.mxu0 0.0
    %2680 = vmatprep.subr.mxu0 0.0
    %2681 = vmatpush1.msra.mxu0 0.0
    %2682 = vmatprep.subr.mxu0 0.0
    %2683 = vmatpush1.msra.mxu0 0.0
    %2684 = vmatprep.subr.mxu0 0.0
    %2685 = vmatpush1.msra.mxu0 0.0
    %2686 = vmatprep.subr.mxu0 0.0
    %2687 = vmatpush1.msra.mxu0 0.0
    %2688 = vmatprep.subr.mxu0 0.0
    %2689 = vmatpush1.msra.mxu0 0.0
    %2690 = vmatprep.mubr.f32.mxu0 0.0
    %2691 = vmatmul.mubr.f32.gmra.mrb[0].mxu0 0.0
    %v2692 = vpop.f32.mrb[0].mxu0
    %v2693 = vadd.f32 0.0, %v2692
    %v2694 = vpop.f32.mrb[0].mxu0
    %v2695 = vadd.f32 0.0, %v2694
    %2696 = vdwg.mxu0
    %v2697 = vadd.f32 %v2551, %v2622
    %v2698 = vadd.f32 %v2552, %v2624
    %v2699 = vadd.f32 %v2553, %v2693
    %v2700 = vadd.f32 %v2554, %v2695
    %v2701 = vxor.u32 %v2697, 2147483648
    %v2702 = vmul.f32 %v2701, 1.442695
    %v2703 = vpow.pop %v2702
    %v2704 = vadd.f32 %v2703, 1.0
    %v2705 = vrcp.pop %v2704
    %v2706 = vmul.f32 1.0, %v2705
    %v2707 = vxor.u32 %v2698, 2147483648
    %v2708 = vmul.f32 %v2707, 1.442695
    %v2709 = vpow.pop %v2708
    %v2710 = vadd.f32 %v2709, 1.0
    %v2711 = vrcp.pop %v2710
    %v2712 = vmul.f32 1.0, %v2711
    %v2713 = vtanh.pop %v2699
    %v2714 = vxor.u32 %v2700, 2147483648
    %v2715 = vmul.f32 %v2714, 1.442695
    %v2716 = vpow.pop %v2715
    %v2717 = vadd.f32 %v2716, 1.0
    %v2718 = vrcp.pop %v2717
    %v2719 = vmul.f32 1.0, %v2718
    %v2720 = vmul.f32 %v2712, 0.0
    %v2721 = vmul.f32 %v2706, %v2713
    %v2722 = vadd.f32 %v2720, %v2721
    %v2723 = vtanh.pop %v2722
    %v2724 = vmul.f32 %v2719, %v2723
    %v2725 = vld [vmem:[#allocation2 + $0x20] sm:$0xff]
    %v2726 = vld [vmem:[#allocation2 + $0x28] sm:$0xff]
    %v2727 = vld [vmem:[#allocation2 + $0x30] sm:$0xff]
    %v2728 = vld [vmem:[#allocation2 + $0x38] sm:$0xff]
    %2729 = vmatprep.subr.mxu0 %v2488
    %2730 = vmatpush1.msra.mxu0 %v2487
    %2731 = vmatprep.subr.mxu0 %v2492
    %2732 = vmatpush1.msra.mxu0 %v2491
    %2733 = vmatprep.subr.mxu0 %v2496
    %2734 = vmatpush1.msra.mxu0 %v2495
    %2735 = vmatprep.subr.mxu0 %v2500
    %2736 = vmatpush1.msra.mxu0 %v2499
    %2737 = vmatprep.subr.mxu0 %v2504
    %2738 = vmatpush1.msra.mxu0 %v2503
    %2739 = vmatprep.subr.mxu0 %v2508
    %2740 = vmatpush1.msra.mxu0 %v2507
    %2741 = vmatprep.subr.mxu0 %v2512
    %2742 = vmatpush1.msra.mxu0 %v2511
    %2743 = vmatprep.subr.mxu0 %v2516
    %2744 = vmatpush1.msra.mxu0 %v2515
    %2745 = vmatprep.subr.mxu0 %v2520
    %2746 = vmatpush1.msra.mxu0 %v2519
    %2747 = vmatprep.subr.mxu0 %v2524
    %2748 = vmatpush1.msra.mxu0 %v2523
    %2749 = vmatprep.subr.mxu0 %v2528
    %2750 = vmatpush1.msra.mxu0 %v2527
    %2751 = vmatprep.subr.mxu0 %v2532
    %2752 = vmatpush1.msra.mxu0 %v2531
    %2753 = vmatprep.subr.mxu0 %v2536
    %2754 = vmatpush1.msra.mxu0 %v2535
    %2755 = vmatprep.subr.mxu0 %v2540
    %2756 = vmatpush1.msra.mxu0 %v2539
    %2757 = vmatprep.subr.mxu0 %v2544
    %2758 = vmatpush1.msra.mxu0 %v2543
    %2759 = vmatprep.subr.mxu0 %v2548
    %2760 = vmatpush1.msra.mxu0 %v2547
    %2761 = vmatprep.subr.mxu0 0.0
    %2762 = vmatpush1.msra.mxu0 0.0
    %2763 = vmatprep.subr.mxu0 0.0
    %2764 = vmatpush1.msra.mxu0 0.0
    %2765 = vmatprep.subr.mxu0 0.0
    %2766 = vmatpush1.msra.mxu0 0.0
    %2767 = vmatprep.subr.mxu0 0.0
    %2768 = vmatpush1.msra.mxu0 0.0
    %2769 = vmatprep.subr.mxu0 0.0
    %2770 = vmatpush1.msra.mxu0 0.0
    %2771 = vmatprep.subr.mxu0 0.0
    %2772 = vmatpush1.msra.mxu0 0.0
    %2773 = vmatprep.subr.mxu0 0.0
    %2774 = vmatpush1.msra.mxu0 0.0
    %2775 = vmatprep.subr.mxu0 0.0
    %2776 = vmatpush1.msra.mxu0 0.0
    %2777 = vmatprep.subr.mxu0 0.0
    %2778 = vmatpush1.msra.mxu0 0.0
    %2779 = vmatprep.subr.mxu0 0.0
    %2780 = vmatpush1.msra.mxu0 0.0
    %2781 = vmatprep.subr.mxu0 0.0
    %2782 = vmatpush1.msra.mxu0 0.0
    %2783 = vmatprep.subr.mxu0 0.0
    %2784 = vmatpush1.msra.mxu0 0.0
    %2785 = vmatprep.subr.mxu0 0.0
    %2786 = vmatpush1.msra.mxu0 0.0
    %2787 = vmatprep.subr.mxu0 0.0
    %2788 = vmatpush1.msra.mxu0 0.0
    %2789 = vmatprep.subr.mxu0 0.0
    %2790 = vmatpush1.msra.mxu0 0.0
    %2791 = vmatprep.subr.mxu0 0.0
    %2792 = vmatpush1.msra.mxu0 0.0
    %2793 = vmatprep.mubr.f32.mxu0 0.0
    %2794 = vmatmul.mubr.f32.gmra.mrb[0].mxu0 %v2724
    %v2795 = vpop.f32.mrb[0].mxu0
    %v2796 = vadd.f32 0.0, %v2795
    %v2797 = vpop.f32.mrb[0].mxu0
    %v2798 = vadd.f32 0.0, %v2797
    %2799 = vdwg.mxu0
    %2800 = vmatprep.subr.mxu0 %v2490
    %2801 = vmatpush1.msra.mxu0 %v2489
    %2802 = vmatprep.subr.mxu0 %v2494
    %2803 = vmatpush1.msra.mxu0 %v2493
    %2804 = vmatprep.subr.mxu0 %v2498
    %2805 = vmatpush1.msra.mxu0 %v2497
    %2806 = vmatprep.subr.mxu0 %v2502
    %2807 = vmatpush1.msra.mxu0 %v2501
    %2808 = vmatprep.subr.mxu0 %v2506
    %2809 = vmatpush1.msra.mxu0 %v2505
    %2810 = vmatprep.subr.mxu0 %v2510
    %2811 = vmatpush1.msra.mxu0 %v2509
    %2812 = vmatprep.subr.mxu0 %v2514
    %2813 = vmatpush1.msra.mxu0 %v2513
    %2814 = vmatprep.subr.mxu0 %v2518
    %2815 = vmatpush1.msra.mxu0 %v2517
    %2816 = vmatprep.subr.mxu0 %v2522
    %2817 = vmatpush1.msra.mxu0 %v2521
    %2818 = vmatprep.subr.mxu0 %v2526
    %2819 = vmatpush1.msra.mxu0 %v2525
    %2820 = vmatprep.subr.mxu0 %v2530
    %2821 = vmatpush1.msra.mxu0 %v2529
    %2822 = vmatprep.subr.mxu0 %v2534
    %2823 = vmatpush1.msra.mxu0 %v2533
    %2824 = vmatprep.subr.mxu0 %v2538
    %2825 = vmatpush1.msra.mxu0 %v2537
    %2826 = vmatprep.subr.mxu0 %v2542
    %2827 = vmatpush1.msra.mxu0 %v2541
    %2828 = vmatprep.subr.mxu0 %v2546
    %2829 = vmatpush1.msra.mxu0 %v2545
    %2830 = vmatprep.subr.mxu0 %v2550
    %2831 = vmatpush1.msra.mxu0 %v2549
    %2832 = vmatprep.subr.mxu0 0.0
    %2833 = vmatpush1.msra.mxu0 0.0
    %2834 = vmatprep.subr.mxu0 0.0
    %2835 = vmatpush1.msra.mxu0 0.0
    %2836 = vmatprep.subr.mxu0 0.0
    %2837 = vmatpush1.msra.mxu0 0.0
    %2838 = vmatprep.subr.mxu0 0.0
    %2839 = vmatpush1.msra.mxu0 0.0
    %2840 = vmatprep.subr.mxu0 0.0
    %2841 = vmatpush1.msra.mxu0 0.0
    %2842 = vmatprep.subr.mxu0 0.0
    %2843 = vmatpush1.msra.mxu0 0.0
    %2844 = vmatprep.subr.mxu0 0.0
    %2845 = vmatpush1.msra.mxu0 0.0
    %2846 = vmatprep.subr.mxu0 0.0
    %2847 = vmatpush1.msra.mxu0 0.0
    %2848 = vmatprep.subr.mxu0 0.0
    %2849 = vmatpush1.msra.mxu0 0.0
    %2850 = vmatprep.subr.mxu0 0.0
    %2851 = vmatpush1.msra.mxu0 0.0
    %2852 = vmatprep.subr.mxu0 0.0
    %2853 = vmatpush1.msra.mxu0 0.0
    %2854 = vmatprep.subr.mxu0 0.0
    %2855 = vmatpush1.msra.mxu0 0.0
    %2856 = vmatprep.subr.mxu0 0.0
    %2857 = vmatpush1.msra.mxu0 0.0
    %2858 = vmatprep.subr.mxu0 0.0
    %2859 = vmatpush1.msra.mxu0 0.0
    %2860 = vmatprep.subr.mxu0 0.0
    %2861 = vmatpush1.msra.mxu0 0.0
    %2862 = vmatprep.subr.mxu0 0.0
    %2863 = vmatpush1.msra.mxu0 0.0
    %2864 = vmatprep.mubr.f32.mxu0 0.0
    %2865 = vmatmul.mubr.f32.gmra.mrb[0].mxu0 %v2724
    %v2866 = vpop.f32.mrb[0].mxu0
    %v2867 = vadd.f32 0.0, %v2866
    %v2868 = vpop.f32.mrb[0].mxu0
    %v2869 = vadd.f32 0.0, %v2868
    %2870 = vdwg.mxu0
    %v2871 = vadd.f32 %v2725, %v2796
    %v2872 = vadd.f32 %v2726, %v2798
    %v2873 = vadd.f32 %v2727, %v2867
    %v2874 = vadd.f32 %v2728, %v2869
    %v2875 = vxor.u32 %v2871, 2147483648
    %v2876 = vmul.f32 %v2875, 1.442695
    %v2877 = vpow.pop %v2876
    %v2878 = vadd.f32 %v2877, 1.0
    %v2879 = vrcp.pop %v2878
    %v2880 = vmul.f32 1.0, %v2879
    %v2881 = vxor.u32 %v2872, 2147483648
    %v2882 = vmul.f32 %v2881, 1.442695
    %v2883 = vpow.pop %v2882
    %v2884 = vadd.f32 %v2883, 1.0
    %v2885 = vrcp.pop %v2884
    %v2886 = vmul.f32 1.0, %v2885
    %v2887 = vtanh.pop %v2873
    %v2888 = vxor.u32 %v2874, 2147483648
    %v2889 = vmul.f32 %v2888, 1.442695
    %v2890 = vpow.pop %v2889
    %v2891 = vadd.f32 %v2890, 1.0
    %v2892 = vrcp.pop %v2891
    %v2893 = vmul.f32 1.0, %v2892
    %v2894 = vmul.f32 %v2886, %v2722
    %v2895 = vmul.f32 %v2880, %v2887
    %v2896 = vadd.f32 %v2894, %v2895
    %v2897 = vtanh.pop %v2896
    %v2898 = vmul.f32 %v2893, %v2897
    %v2899 = vld [vmem:[#allocation2 + $0x40] sm:$0xff]
    %v2900 = vld [vmem:[#allocation2 + $0x48] sm:$0xff]
    %v2901 = vld [vmem:[#allocation2 + $0x50] sm:$0xff]
    %v2902 = vld [vmem:[#allocation2 + $0x58] sm:$0xff]
    %2903 = vmatprep.subr.mxu0 %v2488
    %2904 = vmatpush1.msra.mxu0 %v2487
    %2905 = vmatprep.subr.mxu0 %v2492
    %2906 = vmatpush1.msra.mxu0 %v2491
    %2907 = vmatprep.subr.mxu0 %v2496
    %2908 = vmatpush1.msra.mxu0 %v2495
    %2909 = vmatprep.subr.mxu0 %v2500
    %2910 = vmatpush1.msra.mxu0 %v2499
    %2911 = vmatprep.subr.mxu0 %v2504
    %2912 = vmatpush1.msra.mxu0 %v2503
    %2913 = vmatprep.subr.mxu0 %v2508
    %2914 = vmatpush1.msra.mxu0 %v2507
    %2915 = vmatprep.subr.mxu0 %v2512
    %2916 = vmatpush1.msra.mxu0 %v2511
    %2917 = vmatprep.subr.mxu0 %v2516
    %2918 = vmatpush1.msra.mxu0 %v2515
    %2919 = vmatprep.subr.mxu0 %v2520
    %2920 = vmatpush1.msra.mxu0 %v2519
    %2921 = vmatprep.subr.mxu0 %v2524
    %2922 = vmatpush1.msra.mxu0 %v2523
    %2923 = vmatprep.subr.mxu0 %v2528
    %2924 = vmatpush1.msra.mxu0 %v2527
    %2925 = vmatprep.subr.mxu0 %v2532
    %2926 = vmatpush1.msra.mxu0 %v2531
    %2927 = vmatprep.subr.mxu0 %v2536
    %2928 = vmatpush1.msra.mxu0 %v2535
    %2929 = vmatprep.subr.mxu0 %v2540
    %2930 = vmatpush1.msra.mxu0 %v2539
    %2931 = vmatprep.subr.mxu0 %v2544
    %2932 = vmatpush1.msra.mxu0 %v2543
    %2933 = vmatprep.subr.mxu0 %v2548
    %2934 = vmatpush1.msra.mxu0 %v2547
    %2935 = vmatprep.subr.mxu0 0.0
    %2936 = vmatpush1.msra.mxu0 0.0
    %2937 = vmatprep.subr.mxu0 0.0
    %2938 = vmatpush1.msra.mxu0 0.0
    %2939 = vmatprep.subr.mxu0 0.0
    %2940 = vmatpush1.msra.mxu0 0.0
    %2941 = vmatprep.subr.mxu0 0.0
    %2942 = vmatpush1.msra.mxu0 0.0
    %2943 = vmatprep.subr.mxu0 0.0
    %2944 = vmatpush1.msra.mxu0 0.0
    %2945 = vmatprep.subr.mxu0 0.0
    %2946 = vmatpush1.msra.mxu0 0.0
    %2947 = vmatprep.subr.mxu0 0.0
    %2948 = vmatpush1.msra.mxu0 0.0
    %2949 = vmatprep.subr.mxu0 0.0
    %2950 = vmatpush1.msra.mxu0 0.0
    %2951 = vmatprep.subr.mxu0 0.0
    %2952 = vmatpush1.msra.mxu0 0.0
    %2953 = vmatprep.subr.mxu0 0.0
    %2954 = vmatpush1.msra.mxu0 0.0
    %2955 = vmatprep.subr.mxu0 0.0
    %2956 = vmatpush1.msra.mxu0 0.0
    %2957 = vmatprep.subr.mxu0 0.0
    %2958 = vmatpush1.msra.mxu0 0.0
    %2959 = vmatprep.subr.mxu0 0.0
    %2960 = vmatpush1.msra.mxu0 0.0
    %2961 = vmatprep.subr.mxu0 0.0
    %2962 = vmatpush1.msra.mxu0 0.0
    %2963 = vmatprep.subr.mxu0 0.0
    %2964 = vmatpush1.msra.mxu0 0.0
    %2965 = vmatprep.subr.mxu0 0.0
    %2966 = vmatpush1.msra.mxu0 0.0
    %2967 = vmatprep.mubr.f32.mxu0 0.0
    %2968 = vmatmul.mubr.f32.gmra.mrb[0].mxu0 %v2898
    %v2969 = vpop.f32.mrb[0].mxu0
    %v2970 = vadd.f32 0.0, %v2969
    %v2971 = vpop.f32.mrb[0].mxu0
    %v2972 = vadd.f32 0.0, %v2971
    %2973 = vdwg.mxu0
    %2974 = vmatprep.subr.mxu0 %v2490
    %2975 = vmatpush1.msra.mxu0 %v2489
    %2976 = vmatprep.subr.mxu0 %v2494
    %2977 = vmatpush1.msra.mxu0 %v2493
    %2978 = vmatprep.subr.mxu0 %v2498
    %2979 = vmatpush1.msra.mxu0 %v2497
    %2980 = vmatprep.subr.mxu0 %v2502
    %2981 = vmatpush1.msra.mxu0 %v2501
    %2982 = vmatprep.subr.mxu0 %v2506
    %2983 = vmatpush1.msra.mxu0 %v2505
    %2984 = vmatprep.subr.mxu0 %v2510
    %2985 = vmatpush1.msra.mxu0 %v2509
    %2986 = vmatprep.subr.mxu0 %v2514
    %2987 = vmatpush1.msra.mxu0 %v2513
    %2988 = vmatprep.subr.mxu0 %v2518
    %2989 = vmatpush1.msra.mxu0 %v2517
    %2990 = vmatprep.subr.mxu0 %v2522
    %2991 = vmatpush1.msra.mxu0 %v2521
    %2992 = vmatprep.subr.mxu0 %v2526
    %2993 = vmatpush1.msra.mxu0 %v2525
    %2994 = vmatprep.subr.mxu0 %v2530
    %2995 = vmatpush1.msra.mxu0 %v2529
    %2996 = vmatprep.subr.mxu0 %v2534
    %2997 = vmatpush1.msra.mxu0 %v2533
    %2998 = vmatprep.subr.mxu0 %v2538
    %2999 = vmatpush1.msra.mxu0 %v2537
    %3000 = vmatprep.subr.mxu0 %v2542
    %3001 = vmatpush1.msra.mxu0 %v2541
    %3002 = vmatprep.subr.mxu0 %v2546
    %3003 = vmatpush1.msra.mxu0 %v2545
    %3004 = vmatprep.subr.mxu0 %v2550
    %3005 = vmatpush1.msra.mxu0 %v2549
    %3006 = vmatprep.subr.mxu0 0.0
    %3007 = vmatpush1.msra.mxu0 0.0
    %3008 = vmatprep.subr.mxu0 0.0
    %3009 = vmatpush1.msra.mxu0 0.0
    %3010 = vmatprep.subr.mxu0 0.0
    %3011 = vmatpush1.msra.mxu0 0.0
    %3012 = vmatprep.subr.mxu0 0.0
    %3013 = vmatpush1.msra.mxu0 0.0
    %3014 = vmatprep.subr.mxu0 0.0
    %3015 = vmatpush1.msra.mxu0 0.0
    %3016 = vmatprep.subr.mxu0 0.0
    %3017 = vmatpush1.msra.mxu0 0.0
    %3018 = vmatprep.subr.mxu0 0.0
    %3019 = vmatpush1.msra.mxu0 0.0
    %3020 = vmatprep.subr.mxu0 0.0
    %3021 = vmatpush1.msra.mxu0 0.0
    %3022 = vmatprep.subr.mxu0 0.0
    %3023 = vmatpush1.msra.mxu0 0.0
    %3024 = vmatprep.subr.mxu0 0.0
    %3025 = vmatpush1.msra.mxu0 0.0
    %3026 = vmatprep.subr.mxu0 0.0
    %3027 = vmatpush1.msra.mxu0 0.0
    %3028 = vmatprep.subr.mxu0 0.0
    %3029 = vmatpush1.msra.mxu0 0.0
    %3030 = vmatprep.subr.mxu0 0.0
    %3031 = vmatpush1.msra.mxu0 0.0
    %3032 = vmatprep.subr.mxu0 0.0
    %3033 = vmatpush1.msra.mxu0 0.0
    %3034 = vmatprep.subr.mxu0 0.0
    %3035 = vmatpush1.msra.mxu0 0.0
    %3036 = vmatprep.subr.mxu0 0.0
    %3037 = vmatpush1.msra.mxu0 0.0
    %3038 = vmatprep.mubr.f32.mxu0 0.0
    %3039 = vmatmul.mubr.f32.gmra.mrb[0].mxu0 %v2898
    %v3040 = vpop.f32.mrb[0].mxu0
    %v3041 = vadd.f32 0.0, %v3040
    %v3042 = vpop.f32.mrb[0].mxu0
    %v3043 = vadd.f32 0.0, %v3042
    %3044 = vdwg.mxu0
    %v3045 = vadd.f32 %v2899, %v2970
    %v3046 = vadd.f32 %v2900, %v2972
    %v3047 = vadd.f32 %v2901, %v3041
    %v3048 = vadd.f32 %v2902, %v3043
    %v3049 = vxor.u32 %v3045, 2147483648
    %v3050 = vmul.f32 %v3049, 1.442695
    %v3051 = vpow.pop %v3050
    %v3052 = vadd.f32 %v3051, 1.0
    %v3053 = vrcp.pop %v3052
    %v3054 = vmul.f32 1.0, %v3053
    %v3055 = vxor.u32 %v3046, 2147483648
    %v3056 = vmul.f32 %v3055, 1.442695
    %v3057 = vpow.pop %v3056
    %v3058 = vadd.f32 %v3057, 1.0
    %v3059 = vrcp.pop %v3058
    %v3060 = vmul.f32 1.0, %v3059
    %v3061 = vtanh.pop %v3047
    %v3062 = vxor.u32 %v3048, 2147483648
    %v3063 = vmul.f32 %v3062, 1.442695
    %v3064 = vpow.pop %v3063
    %v3065 = vadd.f32 %v3064, 1.0
    %v3066 = vrcp.pop %v3065
    %v3067 = vmul.f32 1.0, %v3066
    %v3068 = vmul.f32 %v3060, %v2896
    %v3069 = vmul.f32 %v3054, %v3061
    %v3070 = vadd.f32 %v3068, %v3069
    %v3071 = vtanh.pop %v3070
    %v3072 = vmul.f32 %v3067, %v3071
    %v3073 = vld [vmem:[#allocation2 + $0x60] sm:$0xff]
    %v3074 = vld [vmem:[#allocation2 + $0x68] sm:$0xff]
    %v3075 = vld [vmem:[#allocation2 + $0x70] sm:$0xff]
    %v3076 = vld [vmem:[#allocation2 + $0x78] sm:$0xff]
    %3077 = vmatprep.subr.mxu0 %v2488
    %3078 = vmatpush1.msra.mxu0 %v2487
    %3079 = vmatprep.subr.mxu0 %v2492
    %3080 = vmatpush1.msra.mxu0 %v2491
    %3081 = vmatprep.subr.mxu0 %v2496
    %3082 = vmatpush1.msra.mxu0 %v2495
    %3083 = vmatprep.subr.mxu0 %v2500
    %3084 = vmatpush1.msra.mxu0 %v2499
    %3085 = vmatprep.subr.mxu0 %v2504
    %3086 = vmatpush1.msra.mxu0 %v2503
    %3087 = vmatprep.subr.mxu0 %v2508
    %3088 = vmatpush1.msra.mxu0 %v2507
    %3089 = vmatprep.subr.mxu0 %v2512
    %3090 = vmatpush1.msra.mxu0 %v2511
    %3091 = vmatprep.subr.mxu0 %v2516
    %3092 = vmatpush1.msra.mxu0 %v2515
    %3093 = vmatprep.subr.mxu0 %v2520
    %3094 = vmatpush1.msra.mxu0 %v2519
    %3095 = vmatprep.subr.mxu0 %v2524
    %3096 = vmatpush1.msra.mxu0 %v2523
    %3097 = vmatprep.subr.mxu0 %v2528
    %3098 = vmatpush1.msra.mxu0 %v2527
    %3099 = vmatprep.subr.mxu0 %v2532
    %3100 = vmatpush1.msra.mxu0 %v2531
    %3101 = vmatprep.subr.mxu0 %v2536
    %3102 = vmatpush1.msra.mxu0 %v2535
    %3103 = vmatprep.subr.mxu0 %v2540
    %3104 = vmatpush1.msra.mxu0 %v2539
    %3105 = vmatprep.subr.mxu0 %v2544
    %3106 = vmatpush1.msra.mxu0 %v2543
    %3107 = vmatprep.subr.mxu0 %v2548
    %3108 = vmatpush1.msra.mxu0 %v2547
    %3109 = vmatprep.subr.mxu0 0.0
    %3110 = vmatpush1.msra.mxu0 0.0
    %3111 = vmatprep.subr.mxu0 0.0
    %3112 = vmatpush1.msra.mxu0 0.0
    %3113 = vmatprep.subr.mxu0 0.0
    %3114 = vmatpush1.msra.mxu0 0.0
    %3115 = vmatprep.subr.mxu0 0.0
    %3116 = vmatpush1.msra.mxu0 0.0
    %3117 = vmatprep.subr.mxu0 0.0
    %3118 = vmatpush1.msra.mxu0 0.0
    %3119 = vmatprep.subr.mxu0 0.0
    %3120 = vmatpush1.msra.mxu0 0.0
    %3121 = vmatprep.subr.mxu0 0.0
    %3122 = vmatpush1.msra.mxu0 0.0
    %3123 = vmatprep.subr.mxu0 0.0
    %3124 = vmatpush1.msra.mxu0 0.0
    %3125 = vmatprep.subr.mxu0 0.0
    %3126 = vmatpush1.msra.mxu0 0.0
    %3127 = vmatprep.subr.mxu0 0.0
    %3128 = vmatpush1.msra.mxu0 0.0
    %3129 = vmatprep.subr.mxu0 0.0
    %3130 = vmatpush1.msra.mxu0 0.0
    %3131 = vmatprep.subr.mxu0 0.0
    %3132 = vmatpush1.msra.mxu0 0.0
    %3133 = vmatprep.subr.mxu0 0.0
    %3134 = vmatpush1.msra.mxu0 0.0
    %3135 = vmatprep.subr.mxu0 0.0
    %3136 = vmatpush1.msra.mxu0 0.0
    %3137 = vmatprep.subr.mxu0 0.0
    %3138 = vmatpush1.msra.mxu0 0.0
    %3139 = vmatprep.subr.mxu0 0.0
    %3140 = vmatpush1.msra.mxu0 0.0
    %3141 = vmatprep.mubr.f32.mxu0 0.0
    %3142 = vmatmul.mubr.f32.gmra.mrb[0].mxu0 %v3072
    %v3143 = vpop.f32.mrb[0].mxu0
    %v3144 = vadd.f32 0.0, %v3143
    %v3145 = vpop.f32.mrb[0].mxu0
    %v3146 = vadd.f32 0.0, %v3145
    %3147 = vdwg.mxu0
    %3148 = vmatprep.subr.mxu0 %v2490
    %3149 = vmatpush1.msra.mxu0 %v2489
    %3150 = vmatprep.subr.mxu0 %v2494
    %3151 = vmatpush1.msra.mxu0 %v2493
    %3152 = vmatprep.subr.mxu0 %v2498
    %3153 = vmatpush1.msra.mxu0 %v2497
    %3154 = vmatprep.subr.mxu0 %v2502
    %3155 = vmatpush1.msra.mxu0 %v2501
    %3156 = vmatprep.subr.mxu0 %v2506
    %3157 = vmatpush1.msra.mxu0 %v2505
    %3158 = vmatprep.subr.mxu0 %v2510
    %3159 = vmatpush1.msra.mxu0 %v2509
    %3160 = vmatprep.subr.mxu0 %v2514
    %3161 = vmatpush1.msra.mxu0 %v2513
    %3162 = vmatprep.subr.mxu0 %v2518
    %3163 = vmatpush1.msra.mxu0 %v2517
    %3164 = vmatprep.subr.mxu0 %v2522
    %3165 = vmatpush1.msra.mxu0 %v2521
    %3166 = vmatprep.subr.mxu0 %v2526
    %3167 = vmatpush1.msra.mxu0 %v2525
    %3168 = vmatprep.subr.mxu0 %v2530
    %3169 = vmatpush1.msra.mxu0 %v2529
    %3170 = vmatprep.subr.mxu0 %v2534
    %3171 = vmatpush1.msra.mxu0 %v2533
    %3172 = vmatprep.subr.mxu0 %v2538
    %3173 = vmatpush1.msra.mxu0 %v2537
    %3174 = vmatprep.subr.mxu0 %v2542
    %3175 = vmatpush1.msra.mxu0 %v2541
    %3176 = vmatprep.subr.mxu0 %v2546
    %3177 = vmatpush1.msra.mxu0 %v2545
    %3178 = vmatprep.subr.mxu0 %v2550
    %3179 = vmatpush1.msra.mxu0 %v2549
    %3180 = vmatprep.subr.mxu0 0.0
    %3181 = vmatpush1.msra.mxu0 0.0
    %3182 = vmatprep.subr.mxu0 0.0
    %3183 = vmatpush1.msra.mxu0 0.0
    %3184 = vmatprep.subr.mxu0 0.0
    %3185 = vmatpush1.msra.mxu0 0.0
    %3186 = vmatprep.subr.mxu0 0.0
    %3187 = vmatpush1.msra.mxu0 0.0
    %3188 = vmatprep.subr.mxu0 0.0
    %3189 = vmatpush1.msra.mxu0 0.0
    %3190 = vmatprep.subr.mxu0 0.0
    %3191 = vmatpush1.msra.mxu0 0.0
    %3192 = vmatprep.subr.mxu0 0.0
    %3193 = vmatpush1.msra.mxu0 0.0
    %3194 = vmatprep.subr.mxu0 0.0
    %3195 = vmatpush1.msra.mxu0 0.0
    %3196 = vmatprep.subr.mxu0 0.0
    %3197 = vmatpush1.msra.mxu0 0.0
    %3198 = vmatprep.subr.mxu0 0.0
    %3199 = vmatpush1.msra.mxu0 0.0
    %3200 = vmatprep.subr.mxu0 0.0
    %3201 = vmatpush1.msra.mxu0 0.0
    %3202 = vmatprep.subr.mxu0 0.0
    %3203 = vmatpush1.msra.mxu0 0.0
    %3204 = vmatprep.subr.mxu0 0.0
    %3205 = vmatpush1.msra.mxu0 0.0
    %3206 = vmatprep.subr.mxu0 0.0
    %3207 = vmatpush1.msra.mxu0 0.0
    %3208 = vmatprep.subr.mxu0 0.0
    %3209 = vmatpush1.msra.mxu0 0.0
    %3210 = vmatprep.subr.mxu0 0.0
    %3211 = vmatpush1.msra.mxu0 0.0
    %3212 = vmatprep.mubr.f32.mxu0 0.0
    %3213 = vmatmul.mubr.f32.gmra.mrb[0].mxu0 %v3072
    %v3214 = vpop.f32.mrb[0].mxu0
    %v3215 = vadd.f32 0.0, %v3214
    %v3216 = vpop.f32.mrb[0].mxu0
    %v3217 = vadd.f32 0.0, %v3216
    %3218 = vdwg.mxu0
    %v3219 = vadd.f32 %v3073, %v3144
    %v3220 = vadd.f32 %v3074, %v3146
    %v3221 = vadd.f32 %v3075, %v3215
    %v3222 = vadd.f32 %v3076, %v3217
    %v3223 = vxor.u32 %v3219, 2147483648
    %v3224 = vmul.f32 %v3223, 1.442695
    %v3225 = vpow.pop %v3224
    %v3226 = vadd.f32 %v3225, 1.0
    %v3227 = vrcp.pop %v3226
    %v3228 = vmul.f32 1.0, %v3227
    %v3229 = vxor.u32 %v3220, 2147483648
    %v3230 = vmul.f32 %v3229, 1.442695
    %v3231 = vpow.pop %v3230
    %v3232 = vadd.f32 %v3231, 1.0
    %v3233 = vrcp.pop %v3232
    %v3234 = vmul.f32 1.0, %v3233
    %v3235 = vtanh.pop %v3221
    %v3236 = vxor.u32 %v3222, 2147483648
    %v3237 = vmul.f32 %v3236, 1.442695
    %v3238 = vpow.pop %v3237
    %v3239 = vadd.f32 %v3238, 1.0
    %v3240 = vrcp.pop %v3239
    %v3241 = vmul.f32 1.0, %v3240
    %v3242 = vmul.f32 %v3234, %v3070
    %v3243 = vmul.f32 %v3228, %v3235
    %v3244 = vadd.f32 %v3242, %v3243
    %v3245 = vtanh.pop %v3244
    %v3246 = vmul.f32 %v3241, %v3245
    %v3247 = vld [vmem:[#allocation2 + $0x80] sm:$0xff]
    %v3248 = vld [vmem:[#allocation2 + $0x88] sm:$0xff]
    %v3249 = vld [vmem:[#allocation2 + $0x90] sm:$0xff]
    %v3250 = vld [vmem:[#allocation2 + $0x98] sm:$0xff]
    %3251 = vmatprep.subr.mxu0 %v2488
    %3252 = vmatpush1.msra.mxu0 %v2487
    %3253 = vmatprep.subr.mxu0 %v2492
    %3254 = vmatpush1.msra.mxu0 %v2491
    %3255 = vmatprep.subr.mxu0 %v2496
    %3256 = vmatpush1.msra.mxu0 %v2495
    %3257 = vmatprep.subr.mxu0 %v2500
    %3258 = vmatpush1.msra.mxu0 %v2499
    %3259 = vmatprep.subr.mxu0 %v2504
    %3260 = vmatpush1.msra.mxu0 %v2503
    %3261 = vmatprep.subr.mxu0 %v2508
    %3262 = vmatpush1.msra.mxu0 %v2507
    %3263 = vmatprep.subr.mxu0 %v2512
    %3264 = vmatpush1.msra.mxu0 %v2511
    %3265 = vmatprep.subr.mxu0 %v2516
    %3266 = vmatpush1.msra.mxu0 %v2515
    %3267 = vmatprep.subr.mxu0 %v2520
    %3268 = vmatpush1.msra.mxu0 %v2519
    %3269 = vmatprep.subr.mxu0 %v2524
    %3270 = vmatpush1.msra.mxu0 %v2523
    %3271 = vmatprep.subr.mxu0 %v2528
    %3272 = vmatpush1.msra.mxu0 %v2527
    %3273 = vmatprep.subr.mxu0 %v2532
    %3274 = vmatpush1.msra.mxu0 %v2531
    %3275 = vmatprep.subr.mxu0 %v2536
    %3276 = vmatpush1.msra.mxu0 %v2535
    %3277 = vmatprep.subr.mxu0 %v2540
    %3278 = vmatpush1.msra.mxu0 %v2539
    %3279 = vmatprep.subr.mxu0 %v2544
    %3280 = vmatpush1.msra.mxu0 %v2543
    %3281 = vmatprep.subr.mxu0 %v2548
    %3282 = vmatpush1.msra.mxu0 %v2547
    %3283 = vmatprep.subr.mxu0 0.0
    %3284 = vmatpush1.msra.mxu0 0.0
    %3285 = vmatprep.subr.mxu0 0.0
    %3286 = vmatpush1.msra.mxu0 0.0
    %3287 = vmatprep.subr.mxu0 0.0
    %3288 = vmatpush1.msra.mxu0 0.0
    %3289 = vmatprep.subr.mxu0 0.0
    %3290 = vmatpush1.msra.mxu0 0.0
    %3291 = vmatprep.subr.mxu0 0.0
    %3292 = vmatpush1.msra.mxu0 0.0
    %3293 = vmatprep.subr.mxu0 0.0
    %3294 = vmatpush1.msra.mxu0 0.0
    %3295 = vmatprep.subr.mxu0 0.0
    %3296 = vmatpush1.msra.mxu0 0.0
    %3297 = vmatprep.subr.mxu0 0.0
    %3298 = vmatpush1.msra.mxu0 0.0
    %3299 = vmatprep.subr.mxu0 0.0
    %3300 = vmatpush1.msra.mxu0 0.0
    %3301 = vmatprep.subr.mxu0 0.0
    %3302 = vmatpush1.msra.mxu0 0.0
    %3303 = vmatprep.subr.mxu0 0.0
    %3304 = vmatpush1.msra.mxu0 0.0
    %3305 = vmatprep.subr.mxu0 0.0
    %3306 = vmatpush1.msra.mxu0 0.0
    %3307 = vmatprep.subr.mxu0 0.0
    %3308 = vmatpush1.msra.mxu0 0.0
    %3309 = vmatprep.subr.mxu0 0.0
    %3310 = vmatpush1.msra.mxu0 0.0
    %3311 = vmatprep.subr.mxu0 0.0
    %3312 = vmatpush1.msra.mxu0 0.0
    %3313 = vmatprep.subr.mxu0 0.0
    %3314 = vmatpush1.msra.mxu0 0.0
    %3315 = vmatprep.mubr.f32.mxu0 0.0
    %3316 = vmatmul.mubr.f32.gmra.mrb[0].mxu0 %v3246
    %v3317 = vpop.f32.mrb[0].mxu0
    %v3318 = vadd.f32 0.0, %v3317
    %v3319 = vpop.f32.mrb[0].mxu0
    %v3320 = vadd.f32 0.0, %v3319
    %3321 = vdwg.mxu0
    %3322 = vmatprep.subr.mxu0 %v2490
    %3323 = vmatpush1.msra.mxu0 %v2489
    %3324 = vmatprep.subr.mxu0 %v2494
    %3325 = vmatpush1.msra.mxu0 %v2493
    %3326 = vmatprep.subr.mxu0 %v2498
    %3327 = vmatpush1.msra.mxu0 %v2497
    %3328 = vmatprep.subr.mxu0 %v2502
    %3329 = vmatpush1.msra.mxu0 %v2501
    %3330 = vmatprep.subr.mxu0 %v2506
    %3331 = vmatpush1.msra.mxu0 %v2505
    %3332 = vmatprep.subr.mxu0 %v2510
    %3333 = vmatpush1.msra.mxu0 %v2509
    %3334 = vmatprep.subr.mxu0 %v2514
    %3335 = vmatpush1.msra.mxu0 %v2513
    %3336 = vmatprep.subr.mxu0 %v2518
    %3337 = vmatpush1.msra.mxu0 %v2517
    %3338 = vmatprep.subr.mxu0 %v2522
    %3339 = vmatpush1.msra.mxu0 %v2521
    %3340 = vmatprep.subr.mxu0 %v2526
    %3341 = vmatpush1.msra.mxu0 %v2525
    %3342 = vmatprep.subr.mxu0 %v2530
    %3343 = vmatpush1.msra.mxu0 %v2529
    %3344 = vmatprep.subr.mxu0 %v2534
    %3345 = vmatpush1.msra.mxu0 %v2533
    %3346 = vmatprep.subr.mxu0 %v2538
    %3347 = vmatpush1.msra.mxu0 %v2537
    %3348 = vmatprep.subr.mxu0 %v2542
    %3349 = vmatpush1.msra.mxu0 %v2541
    %3350 = vmatprep.subr.mxu0 %v2546
    %3351 = vmatpush1.msra.mxu0 %v2545
    %3352 = vmatprep.subr.mxu0 %v2550
    %3353 = vmatpush1.msra.mxu0 %v2549
    %3354 = vmatprep.subr.mxu0 0.0
    %3355 = vmatpush1.msra.mxu0 0.0
    %3356 = vmatprep.subr.mxu0 0.0
    %3357 = vmatpush1.msra.mxu0 0.0
    %3358 = vmatprep.subr.mxu0 0.0
    %3359 = vmatpush1.msra.mxu0 0.0
    %3360 = vmatprep.subr.mxu0 0.0
    %3361 = vmatpush1.msra.mxu0 0.0
    %3362 = vmatprep.subr.mxu0 0.0
    %3363 = vmatpush1.msra.mxu0 0.0
    %3364 = vmatprep.subr.mxu0 0.0
    %3365 = vmatpush1.msra.mxu0 0.0
    %3366 = vmatprep.subr.mxu0 0.0
    %3367 = vmatpush1.msra.mxu0 0.0
    %3368 = vmatprep.subr.mxu0 0.0
    %3369 = vmatpush1.msra.mxu0 0.0
    %3370 = vmatprep.subr.mxu0 0.0
    %3371 = vmatpush1.msra.mxu0 0.0
    %3372 = vmatprep.subr.mxu0 0.0
    %3373 = vmatpush1.msra.mxu0 0.0
    %3374 = vmatprep.subr.mxu0 0.0
    %3375 = vmatpush1.msra.mxu0 0.0
    %3376 = vmatprep.subr.mxu0 0.0
    %3377 = vmatpush1.msra.mxu0 0.0
    %3378 = vmatprep.subr.mxu0 0.0
    %3379 = vmatpush1.msra.mxu0 0.0
    %3380 = vmatprep.subr.mxu0 0.0
    %3381 = vmatpush1.msra.mxu0 0.0
    %3382 = vmatprep.subr.mxu0 0.0
    %3383 = vmatpush1.msra.mxu0 0.0
    %3384 = vmatprep.subr.mxu0 0.0
    %3385 = vmatpush1.msra.mxu0 0.0
    %3386 = vmatprep.mubr.f32.mxu0 0.0
    %3387 = vmatmul.mubr.f32.gmra.mrb[0].mxu0 %v3246
    %v3388 = vpop.f32.mrb[0].mxu0
    %v3389 = vadd.f32 0.0, %v3388
    %v3390 = vpop.f32.mrb[0].mxu0
    %v3391 = vadd.f32 0.0, %v3390
    %3392 = vdwg.mxu0
    %v3393 = vadd.f32 %v3247, %v3318
    %v3394 = vadd.f32 %v3248, %v3320
    %v3395 = vadd.f32 %v3249, %v3389
    %v3396 = vadd.f32 %v3250, %v3391
    %v3397 = vxor.u32 %v3393, 2147483648
    %v3398 = vmul.f32 %v3397, 1.442695
    %v3399 = vpow.pop %v3398
    %v3400 = vadd.f32 %v3399, 1.0
    %v3401 = vrcp.pop %v3400
    %v3402 = vmul.f32 1.0, %v3401
    %v3403 = vxor.u32 %v3394, 2147483648
    %v3404 = vmul.f32 %v3403, 1.442695
    %v3405 = vpow.pop %v3404
    %v3406 = vadd.f32 %v3405, 1.0
    %v3407 = vrcp.pop %v3406
    %v3408 = vmul.f32 1.0, %v3407
    %v3409 = vtanh.pop %v3395
    %v3410 = vxor.u32 %v3396, 2147483648
    %v3411 = vmul.f32 %v3410, 1.442695
    %v3412 = vpow.pop %v3411
    %v3413 = vadd.f32 %v3412, 1.0
    %v3414 = vrcp.pop %v3413
    %v3415 = vmul.f32 1.0, %v3414
    %v3416 = vmul.f32 %v3408, %v3244
    %v3417 = vmul.f32 %v3402, %v3409
    %v3418 = vadd.f32 %v3416, %v3417
    %v3419 = vtanh.pop %v3418
    %v3420 = vmul.f32 %v3415, %v3419
    %v3421 = vld [vmem:[#allocation2 + $0xa0] sm:$0xff]
    %v3422 = vld [vmem:[#allocation2 + $0xa8] sm:$0xff]
    %v3423 = vld [vmem:[#allocation2 + $0xb0] sm:$0xff]
    %v3424 = vld [vmem:[#allocation2 + $0xb8] sm:$0xff]
    %3425 = vmatprep.subr.mxu0 %v2488
    %3426 = vmatpush1.msra.mxu0 %v2487
    %3427 = vmatprep.subr.mxu0 %v2492
    %3428 = vmatpush1.msra.mxu0 %v2491
    %3429 = vmatprep.subr.mxu0 %v2496
    %3430 = vmatpush1.msra.mxu0 %v2495
    %3431 = vmatprep.subr.mxu0 %v2500
    %3432 = vmatpush1.msra.mxu0 %v2499
    %3433 = vmatprep.subr.mxu0 %v2504
    %3434 = vmatpush1.msra.mxu0 %v2503
    %3435 = vmatprep.subr.mxu0 %v2508
    %3436 = vmatpush1.msra.mxu0 %v2507
    %3437 = vmatprep.subr.mxu0 %v2512
    %3438 = vmatpush1.msra.mxu0 %v2511
    %3439 = vmatprep.subr.mxu0 %v2516
    %3440 = vmatpush1.msra.mxu0 %v2515
    %3441 = vmatprep.subr.mxu0 %v2520
    %3442 = vmatpush1.msra.mxu0 %v2519
    %3443 = vmatprep.subr.mxu0 %v2524
    %3444 = vmatpush1.msra.mxu0 %v2523
    %3445 = vmatprep.subr.mxu0 %v2528
    %3446 = vmatpush1.msra.mxu0 %v2527
    %3447 = vmatprep.subr.mxu0 %v2532
    %3448 = vmatpush1.msra.mxu0 %v2531
    %3449 = vmatprep.subr.mxu0 %v2536
    %3450 = vmatpush1.msra.mxu0 %v2535
    %3451 = vmatprep.subr.mxu0 %v2540
    %3452 = vmatpush1.msra.mxu0 %v2539
    %3453 = vmatprep.subr.mxu0 %v2544
    %3454 = vmatpush1.msra.mxu0 %v2543
    %3455 = vmatprep.subr.mxu0 %v2548
    %3456 = vmatpush1.msra.mxu0 %v2547
    %3457 = vmatprep.subr.mxu0 0.0
    %3458 = vmatpush1.msra.mxu0 0.0
    %3459 = vmatprep.subr.mxu0 0.0
    %3460 = vmatpush1.msra.mxu0 0.0
    %3461 = vmatprep.subr.mxu0 0.0
    %3462 = vmatpush1.msra.mxu0 0.0
    %3463 = vmatprep.subr.mxu0 0.0
    %3464 = vmatpush1.msra.mxu0 0.0
    %3465 = vmatprep.subr.mxu0 0.0
    %3466 = vmatpush1.msra.mxu0 0.0
    %3467 = vmatprep.subr.mxu0 0.0
    %3468 = vmatpush1.msra.mxu0 0.0
    %3469 = vmatprep.subr.mxu0 0.0
    %3470 = vmatpush1.msra.mxu0 0.0
    %3471 = vmatprep.subr.mxu0 0.0
    %3472 = vmatpush1.msra.mxu0 0.0
    %3473 = vmatprep.subr.mxu0 0.0
    %3474 = vmatpush1.msra.mxu0 0.0
    %3475 = vmatprep.subr.mxu0 0.0
    %3476 = vmatpush1.msra.mxu0 0.0
    %3477 = vmatprep.subr.mxu0 0.0
    %3478 = vmatpush1.msra.mxu0 0.0
    %3479 = vmatprep.subr.mxu0 0.0
    %3480 = vmatpush1.msra.mxu0 0.0
    %3481 = vmatprep.subr.mxu0 0.0
    %3482 = vmatpush1.msra.mxu0 0.0
    %3483 = vmatprep.subr.mxu0 0.0
    %3484 = vmatpush1.msra.mxu0 0.0
    %3485 = vmatprep.subr.mxu0 0.0
    %3486 = vmatpush1.msra.mxu0 0.0
    %3487 = vmatprep.subr.mxu0 0.0
    %3488 = vmatpush1.msra.mxu0 0.0
    %3489 = vmatprep.mubr.f32.mxu0 0.0
    %3490 = vmatmul.mubr.f32.gmra.mrb[0].mxu0 %v3420
    %v3491 = vpop.f32.mrb[0].mxu0
    %v3492 = vadd.f32 0.0, %v3491
    %v3493 = vpop.f32.mrb[0].mxu0
    %v3494 = vadd.f32 0.0, %v3493
    %3495 = vdwg.mxu0
    %3496 = vmatprep.subr.mxu0 %v2490
    %3497 = vmatpush1.msra.mxu0 %v2489
    %3498 = vmatprep.subr.mxu0 %v2494
    %3499 = vmatpush1.msra.mxu0 %v2493
    %3500 = vmatprep.subr.mxu0 %v2498
    %3501 = vmatpush1.msra.mxu0 %v2497
    %3502 = vmatprep.subr.mxu0 %v2502
    %3503 = vmatpush1.msra.mxu0 %v2501
    %3504 = vmatprep.subr.mxu0 %v2506
    %3505 = vmatpush1.msra.mxu0 %v2505
    %3506 = vmatprep.subr.mxu0 %v2510
    %3507 = vmatpush1.msra.mxu0 %v2509
    %3508 = vmatprep.subr.mxu0 %v2514
    %3509 = vmatpush1.msra.mxu0 %v2513
    %3510 = vmatprep.subr.mxu0 %v2518
    %3511 = vmatpush1.msra.mxu0 %v2517
    %3512 = vmatprep.subr.mxu0 %v2522
    %3513 = vmatpush1.msra.mxu0 %v2521
    %3514 = vmatprep.subr.mxu0 %v2526
    %3515 = vmatpush1.msra.mxu0 %v2525
    %3516 = vmatprep.subr.mxu0 %v2530
    %3517 = vmatpush1.msra.mxu0 %v2529
    %3518 = vmatprep.subr.mxu0 %v2534
    %3519 = vmatpush1.msra.mxu0 %v2533
    %3520 = vmatprep.subr.mxu0 %v2538
    %3521 = vmatpush1.msra.mxu0 %v2537
    %3522 = vmatprep.subr.mxu0 %v2542
    %3523 = vmatpush1.msra.mxu0 %v2541
    %3524 = vmatprep.subr.mxu0 %v2546
    %3525 = vmatpush1.msra.mxu0 %v2545
    %3526 = vmatprep.subr.mxu0 %v2550
    %3527 = vmatpush1.msra.mxu0 %v2549
    %3528 = vmatprep.subr.mxu0 0.0
    %3529 = vmatpush1.msra.mxu0 0.0
    %3530 = vmatprep.subr.mxu0 0.0
    %3531 = vmatpush1.msra.mxu0 0.0
    %3532 = vmatprep.subr.mxu0 0.0
    %3533 = vmatpush1.msra.mxu0 0.0
    %3534 = vmatprep.subr.mxu0 0.0
    %3535 = vmatpush1.msra.mxu0 0.0
    %3536 = vmatprep.subr.mxu0 0.0
    %3537 = vmatpush1.msra.mxu0 0.0
    %3538 = vmatprep.subr.mxu0 0.0
    %3539 = vmatpush1.msra.mxu0 0.0
    %3540 = vmatprep.subr.mxu0 0.0
    %3541 = vmatpush1.msra.mxu0 0.0
    %3542 = vmatprep.subr.mxu0 0.0
    %3543 = vmatpush1.msra.mxu0 0.0
    %3544 = vmatprep.subr.mxu0 0.0
    %3545 = vmatpush1.msra.mxu0 0.0
    %3546 = vmatprep.subr.mxu0 0.0
    %3547 = vmatpush1.msra.mxu0 0.0
    %3548 = vmatprep.subr.mxu0 0.0
    %3549 = vmatpush1.msra.mxu0 0.0
    %3550 = vmatprep.subr.mxu0 0.0
    %3551 = vmatpush1.msra.mxu0 0.0
    %3552 = vmatprep.subr.mxu0 0.0
    %3553 = vmatpush1.msra.mxu0 0.0
    %3554 = vmatprep.subr.mxu0 0.0
    %3555 = vmatpush1.msra.mxu0 0.0
    %3556 = vmatprep.subr.mxu0 0.0
    %3557 = vmatpush1.msra.mxu0 0.0
    %3558 = vmatprep.subr.mxu0 0.0
    %3559 = vmatpush1.msra.mxu0 0.0
    %3560 = vmatprep.mubr.f32.mxu0 0.0
    %3561 = vmatmul.mubr.f32.gmra.mrb[0].mxu0 %v3420
    %v3562 = vpop.f32.mrb[0].mxu0
    %v3563 = vadd.f32 0.0, %v3562
    %v3564 = vpop.f32.mrb[0].mxu0
    %v3565 = vadd.f32 0.0, %v3564
    %3566 = vdwg.mxu0
    %v3567 = vadd.f32 %v3421, %v3492
    %v3568 = vadd.f32 %v3422, %v3494
    %v3569 = vadd.f32 %v3423, %v3563
    %v3570 = vadd.f32 %v3424, %v3565
    %v3571 = vxor.u32 %v3567, 2147483648
    %v3572 = vmul.f32 %v3571, 1.442695
    %v3573 = vpow.pop %v3572
    %v3574 = vadd.f32 %v3573, 1.0
    %v3575 = vrcp.pop %v3574
    %v3576 = vmul.f32 1.0, %v3575
    %v3577 = vxor.u32 %v3568, 2147483648
    %v3578 = vmul.f32 %v3577, 1.442695
    %v3579 = vpow.pop %v3578
    %v3580 = vadd.f32 %v3579, 1.0
    %v3581 = vrcp.pop %v3580
    %v3582 = vmul.f32 1.0, %v3581
    %v3583 = vtanh.pop %v3569
    %v3584 = vxor.u32 %v3570, 2147483648
    %v3585 = vmul.f32 %v3584, 1.442695
    %v3586 = vpow.pop %v3585
    %v3587 = vadd.f32 %v3586, 1.0
    %v3588 = vrcp.pop %v3587
    %v3589 = vmul.f32 1.0, %v3588
    %v3590 = vmul.f32 %v3582, %v3418
    %v3591 = vmul.f32 %v3576, %v3583
    %v3592 = vadd.f32 %v3590, %v3591
    %v3593 = vtanh.pop %v3592
    %v3594 = vmul.f32 %v3589, %v3593
    %v3595 = vld [vmem:[#allocation2 + $0xc0] sm:$0xff]
    %v3596 = vld [vmem:[#allocation2 + $0xc8] sm:$0xff]
    %v3597 = vld [vmem:[#allocation2 + $0xd0] sm:$0xff]
    %v3598 = vld [vmem:[#allocation2 + $0xd8] sm:$0xff]
    %3599 = vmatprep.subr.mxu0 %v2488
    %3600 = vmatpush1.msra.mxu0 %v2487
    %3601 = vmatprep.subr.mxu0 %v2492
    %3602 = vmatpush1.msra.mxu0 %v2491
    %3603 = vmatprep.subr.mxu0 %v2496
    %3604 = vmatpush1.msra.mxu0 %v2495
    %3605 = vmatprep.subr.mxu0 %v2500
    %3606 = vmatpush1.msra.mxu0 %v2499
    %3607 = vmatprep.subr.mxu0 %v2504
    %3608 = vmatpush1.msra.mxu0 %v2503
    %3609 = vmatprep.subr.mxu0 %v2508
    %3610 = vmatpush1.msra.mxu0 %v2507
    %3611 = vmatprep.subr.mxu0 %v2512
    %3612 = vmatpush1.msra.mxu0 %v2511
    %3613 = vmatprep.subr.mxu0 %v2516
    %3614 = vmatpush1.msra.mxu0 %v2515
    %3615 = vmatprep.subr.mxu0 %v2520
    %3616 = vmatpush1.msra.mxu0 %v2519
    %3617 = vmatprep.subr.mxu0 %v2524
    %3618 = vmatpush1.msra.mxu0 %v2523
    %3619 = vmatprep.subr.mxu0 %v2528
    %3620 = vmatpush1.msra.mxu0 %v2527
    %3621 = vmatprep.subr.mxu0 %v2532
    %3622 = vmatpush1.msra.mxu0 %v2531
    %3623 = vmatprep.subr.mxu0 %v2536
    %3624 = vmatpush1.msra.mxu0 %v2535
    %3625 = vmatprep.subr.mxu0 %v2540
    %3626 = vmatpush1.msra.mxu0 %v2539
    %3627 = vmatprep.subr.mxu0 %v2544
    %3628 = vmatpush1.msra.mxu0 %v2543
    %3629 = vmatprep.subr.mxu0 %v2548
    %3630 = vmatpush1.msra.mxu0 %v2547
    %3631 = vmatprep.subr.mxu0 0.0
    %3632 = vmatpush1.msra.mxu0 0.0
    %3633 = vmatprep.subr.mxu0 0.0
    %3634 = vmatpush1.msra.mxu0 0.0
    %3635 = vmatprep.subr.mxu0 0.0
    %3636 = vmatpush1.msra.mxu0 0.0
    %3637 = vmatprep.subr.mxu0 0.0
    %3638 = vmatpush1.msra.mxu0 0.0
    %3639 = vmatprep.subr.mxu0 0.0
    %3640 = vmatpush1.msra.mxu0 0.0
    %3641 = vmatprep.subr.mxu0 0.0
    %3642 = vmatpush1.msra.mxu0 0.0
    %3643 = vmatprep.subr.mxu0 0.0
    %3644 = vmatpush1.msra.mxu0 0.0
    %3645 = vmatprep.subr.mxu0 0.0
    %3646 = vmatpush1.msra.mxu0 0.0
    %3647 = vmatprep.subr.mxu0 0.0
    %3648 = vmatpush1.msra.mxu0 0.0
    %3649 = vmatprep.subr.mxu0 0.0
    %3650 = vmatpush1.msra.mxu0 0.0
    %3651 = vmatprep.subr.mxu0 0.0
    %3652 = vmatpush1.msra.mxu0 0.0
    %3653 = vmatprep.subr.mxu0 0.0
    %3654 = vmatpush1.msra.mxu0 0.0
    %3655 = vmatprep.subr.mxu0 0.0
    %3656 = vmatpush1.msra.mxu0 0.0
    %3657 = vmatprep.subr.mxu0 0.0
    %3658 = vmatpush1.msra.mxu0 0.0
    %3659 = vmatprep.subr.mxu0 0.0
    %3660 = vmatpush1.msra.mxu0 0.0
    %3661 = vmatprep.subr.mxu0 0.0
    %3662 = vmatpush1.msra.mxu0 0.0
    %3663 = vmatprep.mubr.f32.mxu0 0.0
    %3664 = vmatmul.mubr.f32.gmra.mrb[0].mxu0 %v3594
    %v3665 = vpop.f32.mrb[0].mxu0
    %v3666 = vadd.f32 0.0, %v3665
    %v3667 = vpop.f32.mrb[0].mxu0
    %v3668 = vadd.f32 0.0, %v3667
    %3669 = vdwg.mxu0
    %3670 = vmatprep.subr.mxu0 %v2490
    %3671 = vmatpush1.msra.mxu0 %v2489
    %3672 = vmatprep.subr.mxu0 %v2494
    %3673 = vmatpush1.msra.mxu0 %v2493
    %3674 = vmatprep.subr.mxu0 %v2498
    %3675 = vmatpush1.msra.mxu0 %v2497
    %3676 = vmatprep.subr.mxu0 %v2502
    %3677 = vmatpush1.msra.mxu0 %v2501
    %3678 = vmatprep.subr.mxu0 %v2506
    %3679 = vmatpush1.msra.mxu0 %v2505
    %3680 = vmatprep.subr.mxu0 %v2510
    %3681 = vmatpush1.msra.mxu0 %v2509
    %3682 = vmatprep.subr.mxu0 %v2514
    %3683 = vmatpush1.msra.mxu0 %v2513
    %3684 = vmatprep.subr.mxu0 %v2518
    %3685 = vmatpush1.msra.mxu0 %v2517
    %3686 = vmatprep.subr.mxu0 %v2522
    %3687 = vmatpush1.msra.mxu0 %v2521
    %3688 = vmatprep.subr.mxu0 %v2526
    %3689 = vmatpush1.msra.mxu0 %v2525
    %3690 = vmatprep.subr.mxu0 %v2530
    %3691 = vmatpush1.msra.mxu0 %v2529
    %3692 = vmatprep.subr.mxu0 %v2534
    %3693 = vmatpush1.msra.mxu0 %v2533
    %3694 = vmatprep.subr.mxu0 %v2538
    %3695 = vmatpush1.msra.mxu0 %v2537
    %3696 = vmatprep.subr.mxu0 %v2542
    %3697 = vmatpush1.msra.mxu0 %v2541
    %3698 = vmatprep.subr.mxu0 %v2546
    %3699 = vmatpush1.msra.mxu0 %v2545
    %3700 = vmatprep.subr.mxu0 %v2550
    %3701 = vmatpush1.msra.mxu0 %v2549
    %3702 = vmatprep.subr.mxu0 0.0
    %3703 = vmatpush1.msra.mxu0 0.0
    %3704 = vmatprep.subr.mxu0 0.0
    %3705 = vmatpush1.msra.mxu0 0.0
    %3706 = vmatprep.subr.mxu0 0.0
    %3707 = vmatpush1.msra.mxu0 0.0
    %3708 = vmatprep.subr.mxu0 0.0
    %3709 = vmatpush1.msra.mxu0 0.0
    %3710 = vmatprep.subr.mxu0 0.0
    %3711 = vmatpush1.msra.mxu0 0.0
    %3712 = vmatprep.subr.mxu0 0.0
    %3713 = vmatpush1.msra.mxu0 0.0
    %3714 = vmatprep.subr.mxu0 0.0
    %3715 = vmatpush1.msra.mxu0 0.0
    %3716 = vmatprep.subr.mxu0 0.0
    %3717 = vmatpush1.msra.mxu0 0.0
    %3718 = vmatprep.subr.mxu0 0.0
    %3719 = vmatpush1.msra.mxu0 0.0
    %3720 = vmatprep.subr.mxu0 0.0
    %3721 = vmatpush1.msra.mxu0 0.0
    %3722 = vmatprep.subr.mxu0 0.0
    %3723 = vmatpush1.msra.mxu0 0.0
    %3724 = vmatprep.subr.mxu0 0.0
    %3725 = vmatpush1.msra.mxu0 0.0
    %3726 = vmatprep.subr.mxu0 0.0
    %3727 = vmatpush1.msra.mxu0 0.0
    %3728 = vmatprep.subr.mxu0 0.0
    %3729 = vmatpush1.msra.mxu0 0.0
    %3730 = vmatprep.subr.mxu0 0.0
    %3731 = vmatpush1.msra.mxu0 0.0
    %3732 = vmatprep.subr.mxu0 0.0
    %3733 = vmatpush1.msra.mxu0 0.0
    %3734 = vmatprep.mubr.f32.mxu0 0.0
    %3735 = vmatmul.mubr.f32.gmra.mrb[0].mxu0 %v3594
    %v3736 = vpop.f32.mrb[0].mxu0
    %v3737 = vadd.f32 0.0, %v3736
    %v3738 = vpop.f32.mrb[0].mxu0
    %v3739 = vadd.f32 0.0, %v3738
    %3740 = vdwg.mxu0
    %v3741 = vadd.f32 %v3595, %v3666
    %v3742 = vadd.f32 %v3596, %v3668
    %v3743 = vadd.f32 %v3597, %v3737
    %v3744 = vadd.f32 %v3598, %v3739
    %v3745 = vxor.u32 %v3741, 2147483648
    %v3746 = vmul.f32 %v3745, 1.442695
    %v3747 = vpow.pop %v3746
    %v3748 = vadd.f32 %v3747, 1.0
    %v3749 = vrcp.pop %v3748
    %v3750 = vmul.f32 1.0, %v3749
    %v3751 = vxor.u32 %v3742, 2147483648
    %v3752 = vmul.f32 %v3751, 1.442695
    %v3753 = vpow.pop %v3752
    %v3754 = vadd.f32 %v3753, 1.0
    %v3755 = vrcp.pop %v3754
    %v3756 = vmul.f32 1.0, %v3755
    %v3757 = vtanh.pop %v3743
    %v3758 = vxor.u32 %v3744, 2147483648
    %v3759 = vmul.f32 %v3758, 1.442695
    %v3760 = vpow.pop %v3759
    %v3761 = vadd.f32 %v3760, 1.0
    %v3762 = vrcp.pop %v3761
    %v3763 = vmul.f32 1.0, %v3762
    %v3764 = vmul.f32 %v3756, %v3592
    %v3765 = vmul.f32 %v3750, %v3757
    %v3766 = vadd.f32 %v3764, %v3765
    %v3767 = vtanh.pop %v3766
    %v3768 = vmul.f32 %v3763, %v3767
    %v3769 = vld [vmem:[#allocation2 + $0xe0] sm:$0xff]
    %v3770 = vld [vmem:[#allocation2 + $0xe8] sm:$0xff]
    %v3771 = vld [vmem:[#allocation2 + $0xf0] sm:$0xff]
    %v3772 = vld [vmem:[#allocation2 + $0xf8] sm:$0xff]
    %3773 = vmatprep.subr.mxu0 %v2488
    %3774 = vmatpush1.msra.mxu0 %v2487
    %3775 = vmatprep.subr.mxu0 %v2492
    %3776 = vmatpush1.msra.mxu0 %v2491
    %3777 = vmatprep.subr.mxu0 %v2496
    %3778 = vmatpush1.msra.mxu0 %v2495
    %3779 = vmatprep.subr.mxu0 %v2500
    %3780 = vmatpush1.msra.mxu0 %v2499
    %3781 = vmatprep.subr.mxu0 %v2504
    %3782 = vmatpush1.msra.mxu0 %v2503
    %3783 = vmatprep.subr.mxu0 %v2508
    %3784 = vmatpush1.msra.mxu0 %v2507
    %3785 = vmatprep.subr.mxu0 %v2512
    %3786 = vmatpush1.msra.mxu0 %v2511
    %3787 = vmatprep.subr.mxu0 %v2516
    %3788 = vmatpush1.msra.mxu0 %v2515
    %3789 = vmatprep.subr.mxu0 %v2520
    %3790 = vmatpush1.msra.mxu0 %v2519
    %3791 = vmatprep.subr.mxu0 %v2524
    %3792 = vmatpush1.msra.mxu0 %v2523
    %3793 = vmatprep.subr.mxu0 %v2528
    %3794 = vmatpush1.msra.mxu0 %v2527
    %3795 = vmatprep.subr.mxu0 %v2532
    %3796 = vmatpush1.msra.mxu0 %v2531
    %3797 = vmatprep.subr.mxu0 %v2536
    %3798 = vmatpush1.msra.mxu0 %v2535
    %3799 = vmatprep.subr.mxu0 %v2540
    %3800 = vmatpush1.msra.mxu0 %v2539
    %3801 = vmatprep.subr.mxu0 %v2544
    %3802 = vmatpush1.msra.mxu0 %v2543
    %3803 = vmatprep.subr.mxu0 %v2548
    %3804 = vmatpush1.msra.mxu0 %v2547
    %3805 = vmatprep.subr.mxu0 0.0
    %3806 = vmatpush1.msra.mxu0 0.0
    %3807 = vmatprep.subr.mxu0 0.0
    %3808 = vmatpush1.msra.mxu0 0.0
    %3809 = vmatprep.subr.mxu0 0.0
    %3810 = vmatpush1.msra.mxu0 0.0
    %3811 = vmatprep.subr.mxu0 0.0
    %3812 = vmatpush1.msra.mxu0 0.0
    %3813 = vmatprep.subr.mxu0 0.0
    %3814 = vmatpush1.msra.mxu0 0.0
    %3815 = vmatprep.subr.mxu0 0.0
    %3816 = vmatpush1.msra.mxu0 0.0
    %3817 = vmatprep.subr.mxu0 0.0
    %3818 = vmatpush1.msra.mxu0 0.0
    %3819 = vmatprep.subr.mxu0 0.0
    %3820 = vmatpush1.msra.mxu0 0.0
    %3821 = vmatprep.subr.mxu0 0.0
    %3822 = vmatpush1.msra.mxu0 0.0
    %3823 = vmatprep.subr.mxu0 0.0
    %3824 = vmatpush1.msra.mxu0 0.0
    %3825 = vmatprep.subr.mxu0 0.0
    %3826 = vmatpush1.msra.mxu0 0.0
    %3827 = vmatprep.subr.mxu0 0.0
    %3828 = vmatpush1.msra.mxu0 0.0
    %3829 = vmatprep.subr.mxu0 0.0
    %3830 = vmatpush1.msra.mxu0 0.0
    %3831 = vmatprep.subr.mxu0 0.0
    %3832 = vmatpush1.msra.mxu0 0.0
    %3833 = vmatprep.subr.mxu0 0.0
    %3834 = vmatpush1.msra.mxu0 0.0
    %3835 = vmatprep.subr.mxu0 0.0
    %3836 = vmatpush1.msra.mxu0 0.0
    %3837 = vmatprep.mubr.f32.mxu0 0.0
    %3838 = vmatmul.mubr.f32.gmra.mrb[0].mxu0 %v3768
    %v3839 = vpop.f32.mrb[0].mxu0
    %v3840 = vadd.f32 0.0, %v3839
    %v3841 = vpop.f32.mrb[0].mxu0
    %v3842 = vadd.f32 0.0, %v3841
    %3843 = vdwg.mxu0
    %3844 = vmatprep.subr.mxu0 %v2490
    %3845 = vmatpush1.msra.mxu0 %v2489
    %3846 = vmatprep.subr.mxu0 %v2494
    %3847 = vmatpush1.msra.mxu0 %v2493
    %3848 = vmatprep.subr.mxu0 %v2498
    %3849 = vmatpush1.msra.mxu0 %v2497
    %3850 = vmatprep.subr.mxu0 %v2502
    %3851 = vmatpush1.msra.mxu0 %v2501
    %3852 = vmatprep.subr.mxu0 %v2506
    %3853 = vmatpush1.msra.mxu0 %v2505
    %3854 = vmatprep.subr.mxu0 %v2510
    %3855 = vmatpush1.msra.mxu0 %v2509
    %3856 = vmatprep.subr.mxu0 %v2514
    %3857 = vmatpush1.msra.mxu0 %v2513
    %3858 = vmatprep.subr.mxu0 %v2518
    %3859 = vmatpush1.msra.mxu0 %v2517
    %3860 = vmatprep.subr.mxu0 %v2522
    %3861 = vmatpush1.msra.mxu0 %v2521
    %3862 = vmatprep.subr.mxu0 %v2526
    %3863 = vmatpush1.msra.mxu0 %v2525
    %3864 = vmatprep.subr.mxu0 %v2530
    %3865 = vmatpush1.msra.mxu0 %v2529
    %3866 = vmatprep.subr.mxu0 %v2534
    %3867 = vmatpush1.msra.mxu0 %v2533
    %3868 = vmatprep.subr.mxu0 %v2538
    %3869 = vmatpush1.msra.mxu0 %v2537
    %3870 = vmatprep.subr.mxu0 %v2542
    %3871 = vmatpush1.msra.mxu0 %v2541
    %3872 = vmatprep.subr.mxu0 %v2546
    %3873 = vmatpush1.msra.mxu0 %v2545
    %3874 = vmatprep.subr.mxu0 %v2550
    %3875 = vmatpush1.msra.mxu0 %v2549
    %3876 = vmatprep.subr.mxu0 0.0
    %3877 = vmatpush1.msra.mxu0 0.0
    %3878 = vmatprep.subr.mxu0 0.0
    %3879 = vmatpush1.msra.mxu0 0.0
    %3880 = vmatprep.subr.mxu0 0.0
    %3881 = vmatpush1.msra.mxu0 0.0
    %3882 = vmatprep.subr.mxu0 0.0
    %3883 = vmatpush1.msra.mxu0 0.0
    %3884 = vmatprep.subr.mxu0 0.0
    %3885 = vmatpush1.msra.mxu0 0.0
    %3886 = vmatprep.subr.mxu0 0.0
    %3887 = vmatpush1.msra.mxu0 0.0
    %3888 = vmatprep.subr.mxu0 0.0
    %3889 = vmatpush1.msra.mxu0 0.0
    %3890 = vmatprep.subr.mxu0 0.0
    %3891 = vmatpush1.msra.mxu0 0.0
    %3892 = vmatprep.subr.mxu0 0.0
    %3893 = vmatpush1.msra.mxu0 0.0
    %3894 = vmatprep.subr.mxu0 0.0
    %3895 = vmatpush1.msra.mxu0 0.0
    %3896 = vmatprep.subr.mxu0 0.0
    %3897 = vmatpush1.msra.mxu0 0.0
    %3898 = vmatprep.subr.mxu0 0.0
    %3899 = vmatpush1.msra.mxu0 0.0
    %3900 = vmatprep.subr.mxu0 0.0
    %3901 = vmatpush1.msra.mxu0 0.0
    %3902 = vmatprep.subr.mxu0 0.0
    %3903 = vmatpush1.msra.mxu0 0.0
    %3904 = vmatprep.subr.mxu0 0.0
    %3905 = vmatpush1.msra.mxu0 0.0
    %3906 = vmatprep.subr.mxu0 0.0
    %3907 = vmatpush1.msra.mxu0 0.0
    %3908 = vmatprep.mubr.f32.mxu0 0.0
    %3909 = vmatmul.mubr.f32.gmra.mrb[0].mxu0 %v3768
    %v3910 = vpop.f32.mrb[0].mxu0
    %v3911 = vadd.f32 0.0, %v3910
    %v3912 = vpop.f32.mrb[0].mxu0
    %v3913 = vadd.f32 0.0, %v3912
    %3914 = vdwg.mxu0
    %v3915 = vadd.f32 %v3769, %v3840
    %v3916 = vadd.f32 %v3770, %v3842
    %v3917 = vadd.f32 %v3771, %v3911
    %v3918 = vadd.f32 %v3772, %v3913
    %v3919 = vxor.u32 %v3915, 2147483648
    %v3920 = vmul.f32 %v3919, 1.442695
    %v3921 = vpow.pop %v3920
    %v3922 = vadd.f32 %v3921, 1.0
    %v3923 = vrcp.pop %v3922
    %v3924 = vmul.f32 1.0, %v3923
    %v3925 = vxor.u32 %v3916, 2147483648
    %v3926 = vmul.f32 %v3925, 1.442695
    %v3927 = vpow.pop %v3926
    %v3928 = vadd.f32 %v3927, 1.0
    %v3929 = vrcp.pop %v3928
    %v3930 = vmul.f32 1.0, %v3929
    %v3931 = vtanh.pop %v3917
    %v3932 = vxor.u32 %v3918, 2147483648
    %v3933 = vmul.f32 %v3932, 1.442695
    %v3934 = vpow.pop %v3933
    %v3935 = vadd.f32 %v3934, 1.0
    %v3936 = vrcp.pop %v3935
    %v3937 = vmul.f32 1.0, %v3936
    %v3938 = vmul.f32 %v3930, %v3766
    %v3939 = vmul.f32 %v3924, %v3931
    %v3940 = vadd.f32 %v3938, %v3939
    %v3941 = vtanh.pop %v3940
    %v3942 = vmul.f32 %v3937, %v3941
    %v3943 = vadd.f32 %v339, %v3942
    %v3944 = vld [vmem:[#allocation11] sm:$0xff]
    %v3945 = vld [vmem:[#allocation11 + $0x8] sm:$0xff]
    %v3946 = vld [vmem:[#allocation11 + $0x10] sm:$0xff]
    %v3947 = vld [vmem:[#allocation11 + $0x18] sm:$0xff]
    %v3948 = vld [vmem:[#allocation11 + $0x20] sm:$0xff]
    %v3949 = vld [vmem:[#allocation11 + $0x28] sm:$0xff]
    %v3950 = vld [vmem:[#allocation11 + $0x30] sm:$0xff]
    %v3951 = vld [vmem:[#allocation11 + $0x38] sm:$0xff]
    %v3952 = vld [vmem:[#allocation11 + $0x40] sm:$0xff]
    %v3953 = vld [vmem:[#allocation11 + $0x48] sm:$0xff]
    %v3954 = vld [vmem:[#allocation11 + $0x50] sm:$0xff]
    %v3955 = vld [vmem:[#allocation11 + $0x58] sm:$0xff]
    %v3956 = vld [vmem:[#allocation11 + $0x60] sm:$0xff]
    %v3957 = vld [vmem:[#allocation11 + $0x68] sm:$0xff]
    %v3958 = vld [vmem:[#allocation11 + $0x70] sm:$0xff]
    %v3959 = vld [vmem:[#allocation11 + $0x78] sm:$0xff]
    %v3960 = vld [vmem:[#allocation12] sm:$0x1]
    %v3962 = vlaneseq
    %v3963 = vshrl.u32 %v3962, 7
    %v3964 = vsub.s32 0, %v3963
    %v3965 = vrot.slane %v3960, %v3964
    %3967 = vmatprep.subr.mxu0 0.0
    %3968 = vmatpush1.msra.mxu0 %v3944
    %3969 = vmatprep.subr.mxu0 0.0
    %3970 = vmatpush1.msra.mxu0 %v3945
    %3971 = vmatprep.subr.mxu0 0.0
    %3972 = vmatpush1.msra.mxu0 %v3946
    %3973 = vmatprep.subr.mxu0 0.0
    %3974 = vmatpush1.msra.mxu0 %v3947
    %3975 = vmatprep.subr.mxu0 0.0
    %3976 = vmatpush1.msra.mxu0 %v3948
    %3977 = vmatprep.subr.mxu0 0.0
    %3978 = vmatpush1.msra.mxu0 %v3949
    %3979 = vmatprep.subr.mxu0 0.0
    %3980 = vmatpush1.msra.mxu0 %v3950
    %3981 = vmatprep.subr.mxu0 0.0
    %3982 = vmatpush1.msra.mxu0 %v3951
    %3983 = vmatprep.subr.mxu0 0.0
    %3984 = vmatpush1.msra.mxu0 %v3952
    %3985 = vmatprep.subr.mxu0 0.0
    %3986 = vmatpush1.msra.mxu0 %v3953
    %3987 = vmatprep.subr.mxu0 0.0
    %3988 = vmatpush1.msra.mxu0 %v3954
    %3989 = vmatprep.subr.mxu0 0.0
    %3990 = vmatpush1.msra.mxu0 %v3955
    %3991 = vmatprep.subr.mxu0 0.0
    %3992 = vmatpush1.msra.mxu0 %v3956
    %3993 = vmatprep.subr.mxu0 0.0
    %3994 = vmatpush1.msra.mxu0 %v3957
    %3995 = vmatprep.subr.mxu0 0.0
    %3996 = vmatpush1.msra.mxu0 %v3958
    %3997 = vmatprep.subr.mxu0 0.0
    %3998 = vmatpush1.msra.mxu0 %v3959
    %3999 = vmatprep.subr.mxu0 0.0
    %4000 = vmatpush1.msra.mxu0 0.0
    %4001 = vmatprep.subr.mxu0 0.0
    %4002 = vmatpush1.msra.mxu0 0.0
    %4003 = vmatprep.subr.mxu0 0.0
    %4004 = vmatpush1.msra.mxu0 0.0
    %4005 = vmatprep.subr.mxu0 0.0
    %4006 = vmatpush1.msra.mxu0 0.0
    %4007 = vmatprep.subr.mxu0 0.0
    %4008 = vmatpush1.msra.mxu0 0.0
    %4009 = vmatprep.subr.mxu0 0.0
    %4010 = vmatpush1.msra.mxu0 0.0
    %4011 = vmatprep.subr.mxu0 0.0
    %4012 = vmatpush1.msra.mxu0 0.0
    %4013 = vmatprep.subr.mxu0 0.0
    %4014 = vmatpush1.msra.mxu0 0.0
    %4015 = vmatprep.subr.mxu0 0.0
    %4016 = vmatpush1.msra.mxu0 0.0
    %4017 = vmatprep.subr.mxu0 0.0
    %4018 = vmatpush1.msra.mxu0 0.0
    %4019 = vmatprep.subr.mxu0 0.0
    %4020 = vmatpush1.msra.mxu0 0.0
    %4021 = vmatprep.subr.mxu0 0.0
    %4022 = vmatpush1.msra.mxu0 0.0
    %4023 = vmatprep.subr.mxu0 0.0
    %4024 = vmatpush1.msra.mxu0 0.0
    %4025 = vmatprep.subr.mxu0 0.0
    %4026 = vmatpush1.msra.mxu0 0.0
    %4027 = vmatprep.subr.mxu0 0.0
    %4028 = vmatpush1.msra.mxu0 0.0
    %4029 = vmatprep.subr.mxu0 0.0
    %4030 = vmatpush1.msra.mxu0 0.0
    %4031 = vmatprep.mubr.f32.mxu0 0.0
    %4032 = vmatmul.mubr.f32.gmra.mrb[0].mxu0 %v3943
    %v4033 = vpop.f32.mrb[0].mxu0
    %v4034 = vadd.f32 %v3965, %v4033
    %v4035 = vpop.f32.mrb[0].mxu0
    %4036 = vdwg.mxu0
    %v4037 = vmax.f32 %v4034, 0.0
    %v4038 = vld [vmem:[#allocation14] sm:$0xff]
    %v4039 = vld [vmem:[#allocation14 + $0x8] sm:$0xff]
    %v4040 = vld [vmem:[#allocation14 + $0x10] sm:$0xff]
    %v4041 = vld [vmem:[#allocation14 + $0x18] sm:$0xff]
    %v4042 = vld [vmem:[#allocation14 + $0x20] sm:$0xff]
    %v4043 = vld [vmem:[#allocation14 + $0x28] sm:$0xff]
    %v4044 = vld [vmem:[#allocation14 + $0x30] sm:$0xff]
    %v4045 = vld [vmem:[#allocation14 + $0x38] sm:$0xff]
    %v4046 = vld [vmem:[#allocation14 + $0x40] sm:$0xff]
    %v4047 = vld [vmem:[#allocation14 + $0x48] sm:$0xff]
    %v4048 = vld [vmem:[#allocation14 + $0x50] sm:$0xff]
    %v4049 = vld [vmem:[#allocation14 + $0x58] sm:$0xff]
    %v4050 = vld [vmem:[#allocation14 + $0x60] sm:$0xff]
    %v4051 = vld [vmem:[#allocation14 + $0x68] sm:$0xff]
    %v4052 = vld [vmem:[#allocation14 + $0x70] sm:$0xff]
    %v4053 = vld [vmem:[#allocation14 + $0x78] sm:$0xff]
    %v4054 = vld [vmem:[#allocation15] sm:$0x1]
    %v4056 = vlaneseq
    %v4057 = vshrl.u32 %v4056, 7
    %v4058 = vsub.s32 0, %v4057
    %v4059 = vrot.slane %v4054, %v4058
    %4061 = vmatprep.subr.mxu0 0.0
    %4062 = vmatpush1.msra.mxu0 %v4038
    %4063 = vmatprep.subr.mxu0 0.0
    %4064 = vmatpush1.msra.mxu0 %v4039
    %4065 = vmatprep.subr.mxu0 0.0
    %4066 = vmatpush1.msra.mxu0 %v4040
    %4067 = vmatprep.subr.mxu0 0.0
    %4068 = vmatpush1.msra.mxu0 %v4041
    %4069 = vmatprep.subr.mxu0 0.0
    %4070 = vmatpush1.msra.mxu0 %v4042
    %4071 = vmatprep.subr.mxu0 0.0
    %4072 = vmatpush1.msra.mxu0 %v4043
    %4073 = vmatprep.subr.mxu0 0.0
    %4074 = vmatpush1.msra.mxu0 %v4044
    %4075 = vmatprep.subr.mxu0 0.0
    %4076 = vmatpush1.msra.mxu0 %v4045
    %4077 = vmatprep.subr.mxu0 0.0
    %4078 = vmatpush1.msra.mxu0 %v4046
    %4079 = vmatprep.subr.mxu0 0.0
    %4080 = vmatpush1.msra.mxu0 %v4047
    %4081 = vmatprep.subr.mxu0 0.0
    %4082 = vmatpush1.msra.mxu0 %v4048
    %4083 = vmatprep.subr.mxu0 0.0
    %4084 = vmatpush1.msra.mxu0 %v4049
    %4085 = vmatprep.subr.mxu0 0.0
    %4086 = vmatpush1.msra.mxu0 %v4050
    %4087 = vmatprep.subr.mxu0 0.0
    %4088 = vmatpush1.msra.mxu0 %v4051
    %4089 = vmatprep.subr.mxu0 0.0
    %4090 = vmatpush1.msra.mxu0 %v4052
    %4091 = vmatprep.subr.mxu0 0.0
    %4092 = vmatpush1.msra.mxu0 %v4053
    %4093 = vmatprep.subr.mxu0 0.0
    %4094 = vmatpush1.msra.mxu0 0.0
    %4095 = vmatprep.subr.mxu0 0.0
    %4096 = vmatpush1.msra.mxu0 0.0
    %4097 = vmatprep.subr.mxu0 0.0
    %4098 = vmatpush1.msra.mxu0 0.0
    %4099 = vmatprep.subr.mxu0 0.0
    %4100 = vmatpush1.msra.mxu0 0.0
    %4101 = vmatprep.subr.mxu0 0.0
    %4102 = vmatpush1.msra.mxu0 0.0
    %4103 = vmatprep.subr.mxu0 0.0
    %4104 = vmatpush1.msra.mxu0 0.0
    %4105 = vmatprep.subr.mxu0 0.0
    %4106 = vmatpush1.msra.mxu0 0.0
    %4107 = vmatprep.subr.mxu0 0.0
    %4108 = vmatpush1.msra.mxu0 0.0
    %4109 = vmatprep.subr.mxu0 0.0
    %4110 = vmatpush1.msra.mxu0 0.0
    %4111 = vmatprep.subr.mxu0 0.0
    %4112 = vmatpush1.msra.mxu0 0.0
    %4113 = vmatprep.subr.mxu0 0.0
    %4114 = vmatpush1.msra.mxu0 0.0
    %4115 = vmatprep.subr.mxu0 0.0
    %4116 = vmatpush1.msra.mxu0 0.0
    %4117 = vmatprep.subr.mxu0 0.0
    %4118 = vmatpush1.msra.mxu0 0.0
    %4119 = vmatprep.subr.mxu0 0.0
    %4120 = vmatpush1.msra.mxu0 0.0
    %4121 = vmatprep.subr.mxu0 0.0
    %4122 = vmatpush1.msra.mxu0 0.0
    %4123 = vmatprep.subr.mxu0 0.0
    %4124 = vmatpush1.msra.mxu0 0.0
    %4125 = vmatprep.mubr.f32.mxu0 0.0
    %4126 = vmatmul.mubr.f32.gmra.mrb[0].mxu0 %v4037
    %v4127 = vpop.f32.mrb[0].mxu0
    %v4128 = vadd.f32 %v4059, %v4127
    %v4129 = vpop.f32.mrb[0].mxu0
    %4130 = vdwg.mxu0
    %4131 = vst [vmem:[%s16] sm:$0xff] %v4128
    // Predicated region
    $region98: #{vqa_forward.1} parent=1 // pred_check
      _
    $region99: #{vqa_forward.1} parent=1 // pred_check_branch
      %4133 = sbr.rel (0) target = $region101
    $region100: #{vqa_forward.1} parent=1 // pred_region
      _
    $region101: #{vqa_forward.1} parent=1 // pred_fallthru
      _
    // Predicated region
    $region102: #{vqa_forward.1} parent=1 // pred_check
      _
    $region103: #{vqa_forward.1} parent=1 // pred_check_branch
      %4135 = sbr.rel (0) target = $region105
    $region104: #{vqa_forward.1} parent=1 // pred_region
      _
    $region105: #{vqa_forward.1} parent=1 // pred_fallthru
      _
    %4136 = vsyncpa [#allocation5], 1
    %4137 = vsyncpa [#allocation7], 1
    %4138 = vsyncpa [#allocation10], 1
    %4139 = vsyncpa [#allocation13], 1
    %4140 = vsyncpa [#allocation16], 1

</llo_original>
